<compile_context>
chip_gen: v6e
topology: v6e:2x2x1
jax: 0.10.0
libtpu: 0.0.40
codegen_flags: <defaults>
</compile_context>

<pallas_src>
import functools

import jax
import jax.numpy as jnp
from jax.experimental import pallas as pl
from jax.experimental.pallas import tpu as pltpu

C_HIDDEN = 1024    # backbone output channels (conv_out expects 1024)
C_OUT = 320        # conv_out output channels (multiple of 8 -> sublane-aligned)


def _round_up(v, m):
    return ((v + m - 1) // m) * m


def _choose_tile(hw, batch, tile_cap):
    """Largest 128-multiple tile that (a) divides round_up(hw, 128) so pixel
    padding waste stays < 128 lanes, (b) fits under tile_cap, and (c) leaves at
    least ~4 total grid steps for pipelining / v7x megacore sharding."""
    hw128 = _round_up(hw, 128)
    n_units = hw128 // 128
    cap_units = max(1, min(_round_up(tile_cap, 128), hw128) // 128)
    divisors = [d for d in range(1, n_units + 1)
                if n_units % d == 0 and d <= cap_units]
    target_steps = min(4, batch * n_units)
    for d in sorted(divisors, reverse=True):
        if batch * (n_units // d) >= target_steps:
            return d * 128, hw128
    return 128, hw128


def _hpo_kernel(x_ref, w1t_ref, b1_ref, w2t_ref, b2_ref, o_ref, *,
                n_sub, use_mxu_layer1):
    """Fused: relu(W1^T @ x + b1) -> W2^T @ h + b2, pixels on the lane axis.

    x_ref  : [C_in, tile_hw]     bf16
    w1t_ref: [C_HIDDEN, C_in]    bf16   (synthetic backbone 1x1 conv, transposed)
    b1_ref : [C_HIDDEN, 1]       f32
    w2t_ref: [C_OUT, C_HIDDEN]   bf16   (conv_out weight, transposed)
    b2_ref : [C_OUT, 1]          f32
    o_ref  : [C_OUT, tile_hw]    out_dtype
    """
    tile = o_ref.shape[-1]
    sub = tile // n_sub
    b1 = b1_ref[...]                      # [1024, 1] f32
    b2 = b2_ref[...]                      # [320, 1]  f32
    if not use_mxu_layer1:
        # Tiny-K contraction: keep the weight columns resident in f32 once.
        w1f = w1t_ref[...].astype(jnp.float32)          # [1024, C_in]
        c_in = w1f.shape[1]

    # Static unroll over lane sub-tiles: the VPU epilogue (bias+ReLU+cast) of
    # sub-tile s overlaps the MXU matmul of the neighbouring sub-tile.
    for s in range(n_sub):
        lo, hi = s * sub, (s + 1) * sub                 # static, 128-aligned
        x = x_ref[:, lo:hi]                             # [C_in, sub] bf16
        if use_mxu_layer1:
            # Layer 1 on the MXU: [1024, C_in] @ [C_in, sub] -> f32 accumulate.
            h = jnp.dot(w1t_ref[...], x, preferred_element_type=jnp.float32)
        else:
            # Layer 1 on the VPU: unrolled broadcast-FMA over the tiny C_in
            # (frees the MXU passes a K=4 contraction would otherwise waste).
            xf = x.astype(jnp.float32)                  # [C_in, sub]
            h = w1f[:, 0:1] * xf[0:1, :]
            for c in range(1, c_in):
                h = h + w1f[:, c:c + 1] * xf[c:c + 1, :]
        h = jnp.maximum(h + b1, 0.0).astype(jnp.bfloat16)   # bias + ReLU + cast
        # Layer 2 (conv_out) on the MXU: [320, 1024] @ [1024, sub] -> f32 acc.
        o = jnp.dot(w2t_ref[...], h, preferred_element_type=jnp.float32)
        o_ref[:, lo:hi] = (o + b2).astype(o_ref.dtype)


@functools.partial(jax.jit, static_argnames=("tile_hw", "out_dtype"))
def hpo_hand_net_forward(x_nchw, w1, b1, w2, b2, *,
                         tile_hw=1024, out_dtype=jnp.bfloat16):
    """x_nchw: [B, C_in, H, W] f32 -> [B, 320, H, W] out_dtype (NCHW-native)."""
    B, C_in, H, W = x_nchw.shape
    hw = H * W
    tile_cap = max(128, _round_up(int(tile_hw), 128))   # enforce 128-multiple cap
    tile, hw_pad = _choose_tile(hw, B, tile_cap)

    # Lane sub-tiles inside the kernel (only worth it for big tiles).
    n_sub = 1
    for cand in (4, 3, 2):
        s = tile // cand
        if tile % cand == 0 and s % 128 == 0 and s >= 512:
            n_sub = cand
            break

    # Channels stay on the second axis (sublane / contraction), pixels become the
    # lane axis.  Cast the pixel stream to bf16 (MXU input dtype, half the DMA).
    x = x_nchw.reshape(B, C_in, hw).astype(jnp.bfloat16)
    if hw_pad != hw:
        x = jnp.pad(x, ((0, 0), (0, 0), (0, hw_pad - hw)))

    # One-time, tiny weight prep outside the hot loop (no output-channel padding).
    w1t = jnp.transpose(w1).astype(jnp.bfloat16)                 # [1024, C_in]
    b1c = b1.reshape(C_HIDDEN, 1).astype(jnp.float32)            # [1024, 1]
    w2t = jnp.transpose(w2).astype(jnp.bfloat16)                 # [320, 1024]
    b2c = b2.reshape(C_OUT, 1).astype(jnp.float32)               # [320, 1]

    grid = (B, hw_pad // tile)

    out_bytes = jnp.dtype(out_dtype).itemsize
    flops = 2 * B * hw_pad * (C_in * C_HIDDEN + C_HIDDEN * C_OUT)
    bytes_accessed = (x.size * 2 + w1t.size * 2 + w2t.size * 2
                      + b1c.size * 4 + b2c.size * 4
                      + B * C_OUT * hw_pad * out_bytes)

    # Per-step VMEM footprint -> explicit scoped limit (headroom, <= v7x 64 MiB).
    sub = tile // n_sub
    vmem_est = (2 * C_in * tile * 2                       # x (double-buffered, bf16)
                + C_HIDDEN * C_in * 2 + C_HIDDEN * 4      # w1t + b1 (single-buffered)
                + C_OUT * C_HIDDEN * 2 + C_OUT * 4        # w2t + b2 (single-buffered)
                + 2 * C_OUT * tile * out_bytes            # out (double-buffered)
                + C_HIDDEN * sub * (4 + 2)                # h temps (f32 + bf16)
                + C_OUT * sub * 4)                        # o f32 temp
    vmem_limit = min(max(int(1.5 * vmem_est) + (2 << 20), 32 << 20), 60 << 20)

    kernel = functools.partial(_hpo_kernel, n_sub=n_sub,
                               use_mxu_layer1=(C_in >= 64))

    out = pl.pallas_call(
        kernel,
        out_shape=jax.ShapeDtypeStruct((B, C_OUT, hw_pad), out_dtype),
        grid_spec=pltpu.PrefetchScalarGridSpec(
            num_scalar_prefetch=0,
            grid=grid,
            in_specs=[
                # pixel tile: batch dim squeezed (None), channels x hw-tile block.
                pl.BlockSpec((None, C_in, tile), lambda b, j: (b, 0, j)),
                # grid-invariant weights / biases: loaded once, single-buffered.
                pl.BlockSpec((C_HIDDEN, C_in), lambda b, j: (0, 0),
                             pipeline_mode=pl.Buffered(1)),
                pl.BlockSpec((C_HIDDEN, 1), lambda b, j: (0, 0),
                             pipeline_mode=pl.Buffered(1)),
                pl.BlockSpec((C_OUT, C_HIDDEN), lambda b, j: (0, 0),
                             pipeline_mode=pl.Buffered(1)),
                pl.BlockSpec((C_OUT, 1), lambda b, j: (0, 0),
                             pipeline_mode=pl.Buffered(1)),
            ],
            out_specs=pl.BlockSpec((None, C_OUT, tile), lambda b, j: (b, 0, j)),
        ),
        compiler_params=pltpu.CompilerParams(
            # Both axes independent -> shardable across the 2 TCs on v7x.
            dimension_semantics=("parallel", "parallel"),
            vmem_limit_bytes=vmem_limit,
        ),
        cost_estimate=pl.CostEstimate(
            flops=flops, transcendentals=0, bytes_accessed=bytes_accessed),
    )(x, w1t, b1c, w2t, b2c)

    # Drop any pixel padding; reshape is NCHW-consistent.
    out = out[:, :, :hw]
    return out.reshape(B, C_OUT, H, W)


def init_params(key, c_in):
    """Deterministic synthetic parameters (no checkpoint loading)."""
    k1, k2, k3, k4 = jax.random.split(key, 4)
    # synthetic backbone: 1x1 conv C_in -> 1024 (stored as [C_in, 1024] for x @ W)
    w1 = jax.random.normal(k1, (c_in, C_HIDDEN), jnp.float32) * (1.0 / jnp.sqrt(c_in))
    b1 = jax.random.normal(k2, (C_HIDDEN,), jnp.float32) * 0.01
    # conv_out: 1x1 conv 1024 -> 320 (stored as [1024, 320])
    w2 = jax.random.normal(k3, (C_HIDDEN, C_OUT), jnp.float32) * (1.0 / jnp.sqrt(C_HIDDEN))
    b2 = jax.random.normal(k4, (C_OUT,), jnp.float32) * 0.01
    return w1, b1, w2, b2


def reference_forward(x_nchw, w1, b1, w2, b2, out_dtype=jnp.bfloat16):
    """Pure-JAX reference of the same math (bf16 matmul inputs, f32 accumulation)."""
    B, C_in, H, W = x_nchw.shape
    x = x_nchw.reshape(B, C_in, H * W).astype(jnp.bfloat16)
    w1t = jnp.transpose(w1).astype(jnp.bfloat16)
    w2t = jnp.transpose(w2).astype(jnp.bfloat16)
    h = jnp.einsum("hc,bcn->bhn", w1t, x, preferred_element_type=jnp.float32)
    h = jnp.maximum(h + b1.reshape(1, -1, 1), 0.0).astype(jnp.bfloat16)
    o = jnp.einsum("oh,bhn->bon", w2t, h, preferred_element_type=jnp.float32)
    o = (o + b2.reshape(1, -1, 1)).astype(out_dtype)
    return o.reshape(B, C_OUT, H, W)


if __name__ == "__main__":
    key = jax.random.PRNGKey(0)
    kx, kp = jax.random.split(key)

    B, C_in, H, W = 2, 4, 16, 16
    x = jax.random.normal(kx, (B, C_in, H, W), jnp.float32)
    w1, b1, w2, b2 = init_params(kp, C_in)

    out = hpo_hand_net_forward(x, w1, b1, w2, b2)
    out = jax.block_until_ready(out)

    ref = reference_forward(x, w1, b1, w2, b2, out_dtype=jnp.bfloat16)
    assert out.shape == (B, C_OUT, H, W), out.shape
    assert out.dtype == jnp.bfloat16, out.dtype
    assert jnp.allclose(out.astype(jnp.float32), ref.astype(jnp.float32),
                        atol=3e-2, rtol=3e-2), "mismatch vs reference"

    print("KERNEL_OK")
</pallas_src>

<mosaic_0001>
module attributes {stable_mosaic.version = 11 : i64} {
  func.func @_hpo_kernel(%arg0: i32, %arg1: i32, %arg2: memref<1x4x128xbf16, #tpu.memory_space<vmem>>, %arg3: memref<1024x4xbf16, #tpu.memory_space<vmem>>, %arg4: memref<1024x1xf32, #tpu.memory_space<vmem>>, %arg5: memref<320x1024xbf16, #tpu.memory_space<vmem>>, %arg6: memref<320x1xf32, #tpu.memory_space<vmem>>, %arg7: memref<1x320x128xbf16, #tpu.memory_space<vmem>>) attributes {dimension_semantics = [#tpu.dimension_semantics<parallel>, #tpu.dimension_semantics<parallel>], iteration_bounds = array<i64: 2, 2>, scalar_prefetch = 0 : i64, scratch_operands = 0 : i64, tpu.core_type = #tpu.core_type<tc>, window_params = [{transform_indices = @transform_0, window_bounds = array<i64: 1, 4, 128>}, {pipeline_mode = #tpu.pipeline_mode<synchronous>, transform_indices = @transform_1, window_bounds = array<i64: 1024, 4>}, {pipeline_mode = #tpu.pipeline_mode<synchronous>, transform_indices = @transform_2, window_bounds = array<i64: 1024, 1>}, {pipeline_mode = #tpu.pipeline_mode<synchronous>, transform_indices = @transform_3, window_bounds = array<i64: 320, 1024>}, {pipeline_mode = #tpu.pipeline_mode<synchronous>, transform_indices = @transform_4, window_bounds = array<i64: 320, 1>}, {transform_indices = @transform_5, window_bounds = array<i64: 1, 320, 128>}]} {
    %c0 = arith.constant 0 : index
    %c0_0 = arith.constant 0 : index
    %0 = vector.load %arg4[%c0, %c0_0] : memref<1024x1xf32, #tpu.memory_space<vmem>>, vector<1024x1xf32>
    %c0_1 = arith.constant 0 : index
    %c0_2 = arith.constant 0 : index
    %1 = vector.load %arg6[%c0_1, %c0_2] : memref<320x1xf32, #tpu.memory_space<vmem>>, vector<320x1xf32>
    %c0_3 = arith.constant 0 : index
    %c0_4 = arith.constant 0 : index
    %2 = vector.load %arg3[%c0_3, %c0_4] : memref<1024x4xbf16, #tpu.memory_space<vmem>>, vector<1024x4xbf16>
    %3 = arith.extf %2 : vector<1024x4xbf16> to vector<1024x4xf32>
    %c0_5 = arith.constant 0 : index
    %c0_6 = arith.constant 0 : index
    %c0_7 = arith.constant 0 : index
    %4 = vector.load %arg2[%c0_5, %c0_6, %c0_7] : memref<1x4x128xbf16, #tpu.memory_space<vmem>>, vector<1x4x128xbf16>
    %5 = vector.shape_cast %4 : vector<1x4x128xbf16> to vector<4x128xbf16>
    %6 = arith.extf %5 : vector<4x128xbf16> to vector<4x128xf32>
    %7 = vector.extract_strided_slice %3 {offsets = [0, 0], sizes = [1024, 1], strides = [1, 1]} : vector<1024x4xf32> to vector<1024x1xf32>
    %8 = vector.extract_strided_slice %6 {offsets = [0, 0], sizes = [1, 128], strides = [1, 1]} : vector<4x128xf32> to vector<1x128xf32>
    %9 = vector.broadcast %7 : vector<1024x1xf32> to vector<1024x128xf32>
    %10 = vector.broadcast %8 : vector<1x128xf32> to vector<1024x128xf32>
    %11 = arith.mulf %9, %10 : vector<1024x128xf32>
    %12 = vector.extract_strided_slice %3 {offsets = [0, 1], sizes = [1024, 1], strides = [1, 1]} : vector<1024x4xf32> to vector<1024x1xf32>
    %13 = vector.extract_strided_slice %6 {offsets = [1, 0], sizes = [1, 128], strides = [1, 1]} : vector<4x128xf32> to vector<1x128xf32>
    %14 = vector.broadcast %12 : vector<1024x1xf32> to vector<1024x128xf32>
    %15 = vector.broadcast %13 : vector<1x128xf32> to vector<1024x128xf32>
    %16 = arith.mulf %14, %15 : vector<1024x128xf32>
    %17 = arith.addf %11, %16 : vector<1024x128xf32>
    %18 = vector.extract_strided_slice %3 {offsets = [0, 2], sizes = [1024, 1], strides = [1, 1]} : vector<1024x4xf32> to vector<1024x1xf32>
    %19 = vector.extract_strided_slice %6 {offsets = [2, 0], sizes = [1, 128], strides = [1, 1]} : vector<4x128xf32> to vector<1x128xf32>
    %20 = vector.broadcast %18 : vector<1024x1xf32> to vector<1024x128xf32>
    %21 = vector.broadcast %19 : vector<1x128xf32> to vector<1024x128xf32>
    %22 = arith.mulf %20, %21 : vector<1024x128xf32>
    %23 = arith.addf %17, %22 : vector<1024x128xf32>
    %24 = vector.extract_strided_slice %3 {offsets = [0, 3], sizes = [1024, 1], strides = [1, 1]} : vector<1024x4xf32> to vector<1024x1xf32>
    %25 = vector.extract_strided_slice %6 {offsets = [3, 0], sizes = [1, 128], strides = [1, 1]} : vector<4x128xf32> to vector<1x128xf32>
    %26 = vector.broadcast %24 : vector<1024x1xf32> to vector<1024x128xf32>
    %27 = vector.broadcast %25 : vector<1x128xf32> to vector<1024x128xf32>
    %28 = arith.mulf %26, %27 : vector<1024x128xf32>
    %29 = arith.addf %23, %28 : vector<1024x128xf32>
    %30 = vector.broadcast %0 : vector<1024x1xf32> to vector<1024x128xf32>
    %31 = arith.addf %29, %30 : vector<1024x128xf32>
    %cst = arith.constant 0.000000e+00 : f32
    %32 = vector.broadcast %cst : f32 to vector<1024x128xf32>
    %33 = arith.maximumf %31, %32 : vector<1024x128xf32>
    %34 = arith.truncf %33 : vector<1024x128xf32> to vector<1024x128xbf16>
    %c0_8 = arith.constant 0 : index
    %c0_9 = arith.constant 0 : index
    %35 = vector.load %arg5[%c0_8, %c0_9] : memref<320x1024xbf16, #tpu.memory_space<vmem>>, vector<320x1024xbf16>
    %cst_10 = arith.constant dense<0.000000e+00> : vector<320x128xf32>
    %36 = tpu.matmul %35, %34, %cst_10 {dimension_numbers = #tpu.dot_dimension_numbers<[1], [0], [0], [1], [0, 0, 1, 1], [], []>} : vector<320x1024xbf16>, vector<1024x128xbf16>, vector<320x128xf32> -> vector<320x128xf32>
    %37 = vector.broadcast %1 : vector<320x1xf32> to vector<320x128xf32>
    %38 = arith.addf %36, %37 : vector<320x128xf32>
    %39 = arith.truncf %38 : vector<320x128xf32> to vector<320x128xbf16>
    %c0_11 = arith.constant 0 : index
    %c0_12 = arith.constant 0 : index
    %c0_13 = arith.constant 0 : index
    %40 = vector.load %arg7[%c0_11, %c0_12, %c0_13] : memref<1x320x128xbf16, #tpu.memory_space<vmem>>, vector<1x320x128xbf16>
    %41 = vector.shape_cast %40 : vector<1x320x128xbf16> to vector<320x128xbf16>
    %42 = vector.shape_cast %39 : vector<320x128xbf16> to vector<1x320x128xbf16>
    tpu.vector_store %arg7[%c0_11, %c0_12, %c0_13], %42 {strides = array<i32>} : memref<1x320x128xbf16, #tpu.memory_space<vmem>>, vector<1x320x128xbf16>,
    return
  }
  func.func @transform_0(%arg0: i32, %arg1: i32) -> (i32, i32, i32) {
    %c0_i32 = arith.constant 0 : i32
    %c0_i32_0 = arith.constant 0 : i32
    return %arg0, %c0_i32, %arg1 : i32, i32, i32
  }
  func.func @transform_1(%arg0: i32, %arg1: i32) -> (i32, i32) {
    %c0_i32 = arith.constant 0 : i32
    %c0_i32_0 = arith.constant 0 : i32
    %c0_i32_1 = arith.constant 0 : i32
    return %c0_i32, %c0_i32_0 : i32, i32
  }
  func.func @transform_2(%arg0: i32, %arg1: i32) -> (i32, i32) {
    %c0_i32 = arith.constant 0 : i32
    %c0_i32_0 = arith.constant 0 : i32
    %c0_i32_1 = arith.constant 0 : i32
    return %c0_i32, %c0_i32_0 : i32, i32
  }
  func.func @transform_3(%arg0: i32, %arg1: i32) -> (i32, i32) {
    %c0_i32 = arith.constant 0 : i32
    %c0_i32_0 = arith.constant 0 : i32
    %c0_i32_1 = arith.constant 0 : i32
    return %c0_i32, %c0_i32_0 : i32, i32
  }
  func.func @transform_4(%arg0: i32, %arg1: i32) -> (i32, i32) {
    %c0_i32 = arith.constant 0 : i32
    %c0_i32_0 = arith.constant 0 : i32
    %c0_i32_1 = arith.constant 0 : i32
    return %c0_i32, %c0_i32_0 : i32, i32
  }
  func.func @transform_5(%arg0: i32, %arg1: i32) -> (i32, i32, i32) {
    %c0_i32 = arith.constant 0 : i32
    %c0_i32_0 = arith.constant 0 : i32
    return %arg0, %c0_i32, %arg1 : i32, i32, i32
  }
}

</mosaic_0001>

<llo_original>
// kernel: hpo_hand_net_forward.1
$region0: #{hpo_hand_net_forward.1}
  #allocation0 [shape = 'u32[]', space=smem, size = 0x4, offset = 0x4, fixed_abs, tag = 'smem constant byte address 0x4 - core index']
  #allocation1 [shape = 'u32[144,128]{1,0:T(1,128)}', space=vmem, size = 0x12000, scoped, tag = 'internal scratch']
  %s0 = inlined_call_operand.vmem [shape: bf16[2,4,256], index: 0, kind: input, shape index: {}]
  %s1 = inlined_call_operand.vmem [shape: bf16[1024,4], index: 1, kind: input, shape index: {}]
  %s2 = inlined_call_operand.vmem [shape: f32[1024,1], index: 2, kind: input, shape index: {}]
  %s3 = inlined_call_operand.vmem [shape: bf16[320,1024], index: 3, kind: input, shape index: {}]
  %s4 = inlined_call_operand.vmem [shape: f32[320,1], index: 4, kind: input, shape index: {}]
  %s5 = inlined_call_operand.vmem [shape: bf16[2,320,256], index: 5, kind: output, shape index: {}]
  %s6 = sld [smem:[#allocation0]]
  $region90: #{hpo_hand_net_forward.1} parent=0
    _
  %s8 = ssub.s32 1, %s6
  %s9 = scalar_select 0, %s8, %s6
  $region1: #{hpo_hand_net_forward.1} parent=0
    #allocation2 [shape = 'u8[163840]{0}', space=vmem, size = 0x28000, scoped, tag = 'output window, operand 0']
    loop: start=0, step=1, limit=6
    $region2: #{hpo_hand_net_forward.1} parent=1 // loop_pre_header
      _
    $region3: #{hpo_hand_net_forward.1} parent=1 // loop_header
      %s11 = sphi 0, %s15
      %p12 = scmp.ge.s32.totalorder %s11, 6
      %s18 = sphi 0, %s30
      %s19 = sphi 0, %s26
      %s20 = sphi 0, %s18
      %s21 = sphi 0, %s19
      %s22 = sphi 0, %s20
      %s23 = sphi 0, %s21
      %s35 = sphi 0, %s37
      %s38 = sphi 0, %s35
      %s39 = sphi 0, %s38
      %s55 = sphi 0, %s39
      %s59 = sphi 0, %s59
      %s61 = sphi 0, %s59
      %s62 = sphi 0, %s61
      %s76 = sphi 0, %s62
      %s80 = sphi 0, %s80
      %s82 = sphi 0, %s80
      %s83 = sphi 0, %s82
      %s97 = sphi 0, %s83
      %s101 = sphi 0, %s101
      %s103 = sphi 0, %s101
      %s104 = sphi 0, %s103
      %s118 = sphi 0, %s104
      %s122 = sphi 0, %s122
      %s124 = sphi 0, %s122
      %s125 = sphi 0, %s124
      %s139 = sphi 0, %s125
      %s147 = sphi 0, %s149
      %s150 = sphi 0, %s147
      %s151 = sphi 0, %s150
      %s167 = sphi 0, %s151
    $region4: #{hpo_hand_net_forward.1} parent=1 // loop_header_branch
      %14 = sbr.rel (%p12) target = $region8
    $region5: #{hpo_hand_net_forward.1} parent=1 // loop_body
      %s16 = ssub.s32 %s11, 1
      %s17 = ssub.s32 %s11, 2
      %s24 = sadd.s32 1, %s19
      %p25 = scmp.ge.s32.totalorder %s24, 2
      %s26 = scalar_select %p25, 0, %s24
      %s27 = sadd.s32 1, %s18
      %s28 = scalar_select %p25, %s27, %s18
      %p29 = scmp.ge.s32.totalorder %s28, 2
      %s30 = scalar_select %p29, 0, %s28
      %s31 = ssub.s32 %s18, %s30
      %s32 = ssub.s32 %s19, %s26
      %s33 = sor.u32 %s31, %s32
      %p34 = scmp.eq.s32.totalorder %s33, 0
      %s36 = sadd.s32 %s35, 1
      %s37 = scalar_select %p34, %s35, %s36
      %p40 = pneg %p34
      %p41 = scmp.eq.s32.totalorder %s11, 3
      %p42 = por %p40, %p41
      %p43 = scmp.ne.s32.totalorder %s35, %s38
      %p44 = scmp.eq.s32.totalorder %s11, 0
      %p45 = por %p43, %p44
      %p46 = scmp.ne.s32.totalorder %s35, %s38
      %p47 = scmp.eq.s32.totalorder %s16, 3
      %p48 = por %p46, %p47
      %p49 = scmp.ne.s32.totalorder %s38, %s39
      %p50 = scmp.eq.s32.totalorder %s16, 0
      %p51 = por %p49, %p50
      %p52 = scmp.ne.s32.totalorder %s38, %s39
      %p53 = scmp.eq.s32.totalorder %s17, 3
      %p54 = por %p52, %p53
      %p56 = scmp.ne.s32.totalorder %s39, %s55
      %p57 = scmp.eq.s32.totalorder %s17, 0
      %p58 = por %p56, %p57
      %s60 = sadd.s32 %s59, 1
      %p63 = scmp.eq.s32.totalorder %s11, 3
      %p64 = scmp.ne.s32.totalorder %s59, %s61
      %p65 = scmp.eq.s32.totalorder %s11, 0
      %p66 = por %p64, %p65
      %p67 = scmp.ne.s32.totalorder %s59, %s61
      %p68 = scmp.eq.s32.totalorder %s16, 3
      %p69 = por %p67, %p68
      %p70 = scmp.ne.s32.totalorder %s61, %s62
      %p71 = scmp.eq.s32.totalorder %s16, 0
      %p72 = por %p70, %p71
      %p73 = scmp.ne.s32.totalorder %s61, %s62
      %p74 = scmp.eq.s32.totalorder %s17, 3
      %p75 = por %p73, %p74
      %p77 = scmp.ne.s32.totalorder %s62, %s76
      %p78 = scmp.eq.s32.totalorder %s17, 0
      %p79 = por %p77, %p78
      %s81 = sadd.s32 %s80, 1
      %p84 = scmp.eq.s32.totalorder %s11, 3
      %p85 = scmp.ne.s32.totalorder %s80, %s82
      %p86 = scmp.eq.s32.totalorder %s11, 0
      %p87 = por %p85, %p86
      %p88 = scmp.ne.s32.totalorder %s80, %s82
      %p89 = scmp.eq.s32.totalorder %s16, 3
      %p90 = por %p88, %p89
      %p91 = scmp.ne.s32.totalorder %s82, %s83
      %p92 = scmp.eq.s32.totalorder %s16, 0
      %p93 = por %p91, %p92
      %p94 = scmp.ne.s32.totalorder %s82, %s83
      %p95 = scmp.eq.s32.totalorder %s17, 3
      %p96 = por %p94, %p95
      %p98 = scmp.ne.s32.totalorder %s83, %s97
      %p99 = scmp.eq.s32.totalorder %s17, 0
      %p100 = por %p98, %p99
      %s102 = sadd.s32 %s101, 1
      %p105 = scmp.eq.s32.totalorder %s11, 3
      %p106 = scmp.ne.s32.totalorder %s101, %s103
      %p107 = scmp.eq.s32.totalorder %s11, 0
      %p108 = por %p106, %p107
      %p109 = scmp.ne.s32.totalorder %s101, %s103
      %p110 = scmp.eq.s32.totalorder %s16, 3
      %p111 = por %p109, %p110
      %p112 = scmp.ne.s32.totalorder %s103, %s104
      %p113 = scmp.eq.s32.totalorder %s16, 0
      %p114 = por %p112, %p113
      %p115 = scmp.ne.s32.totalorder %s103, %s104
      %p116 = scmp.eq.s32.totalorder %s17, 3
      %p117 = por %p115, %p116
      %p119 = scmp.ne.s32.totalorder %s104, %s118
      %p120 = scmp.eq.s32.totalorder %s17, 0
      %p121 = por %p119, %p120
      %s123 = sadd.s32 %s122, 1
      %p126 = scmp.eq.s32.totalorder %s11, 3
      %p127 = scmp.ne.s32.totalorder %s122, %s124
      %p128 = scmp.eq.s32.totalorder %s11, 0
      %p129 = por %p127, %p128
      %p130 = scmp.ne.s32.totalorder %s122, %s124
      %p131 = scmp.eq.s32.totalorder %s16, 3
      %p132 = por %p130, %p131
      %p133 = scmp.ne.s32.totalorder %s124, %s125
      %p134 = scmp.eq.s32.totalorder %s16, 0
      %p135 = por %p133, %p134
      %p136 = scmp.ne.s32.totalorder %s124, %s125
      %p137 = scmp.eq.s32.totalorder %s17, 3
      %p138 = por %p136, %p137
      %p140 = scmp.ne.s32.totalorder %s125, %s139
      %p141 = scmp.eq.s32.totalorder %s17, 0
      %p142 = por %p140, %p141
      %s143 = ssub.s32 %s18, %s30
      %s144 = ssub.s32 %s19, %s26
      %s145 = sor.u32 %s143, %s144
      %p146 = scmp.eq.s32.totalorder %s145, 0
      %s148 = sadd.s32 %s147, 1
      %s149 = scalar_select %p146, %s147, %s148
      %p152 = pneg %p146
      %p153 = scmp.eq.s32.totalorder %s11, 3
      %p154 = por %p152, %p153
      %p155 = scmp.ne.s32.totalorder %s147, %s150
      %p156 = scmp.eq.s32.totalorder %s11, 0
      %p157 = por %p155, %p156
      %p158 = scmp.ne.s32.totalorder %s147, %s150
      %p159 = scmp.eq.s32.totalorder %s16, 3
      %p160 = por %p158, %p159
      %p161 = scmp.ne.s32.totalorder %s150, %s151
      %p162 = scmp.eq.s32.totalorder %s16, 0
      %p163 = por %p161, %p162
      %p164 = scmp.ne.s32.totalorder %s150, %s151
      %p165 = scmp.eq.s32.totalorder %s17, 3
      %p166 = por %p164, %p165
      %p168 = scmp.ne.s32.totalorder %s151, %s167
      %p169 = scmp.eq.s32.totalorder %s17, 0
      %p170 = por %p168, %p169
      %p171 = scmp.le.s32.totalorder 1, %s11
      %p172 = scmp.lt.s32.totalorder %s11, 5
      %p173 = pnand %p171, %p172
      %p174 = pneg %p173
      // Predicated region
      $region9: #{hpo_hand_net_forward.1} parent=5 // pred_check
        _
      $region10: #{hpo_hand_net_forward.1} parent=5 // pred_check_branch
        %176 = sbr.rel (%p173) target = $region12
      $region11: #{hpo_hand_net_forward.1} parent=5 // pred_region
        %s177 = ssub.s32 %s11, 1
        // Predicated region
        $region13: #{hpo_hand_net_forward.1} parent=11 // pred_check
          %p178 = pneg %p72
        $region14: #{hpo_hand_net_forward.1} parent=11 // pred_check_branch
          %180 = sbr.rel (%p178) target = $region16
        $region15: #{hpo_hand_net_forward.1} parent=11 // pred_region
          _
        $region16: #{hpo_hand_net_forward.1} parent=11 // pred_fallthru
          _
        // Predicated region
        $region17: #{hpo_hand_net_forward.1} parent=11 // pred_check
          %p181 = pneg %p93
        $region18: #{hpo_hand_net_forward.1} parent=11 // pred_check_branch
          %183 = sbr.rel (%p181) target = $region20
        $region19: #{hpo_hand_net_forward.1} parent=11 // pred_region
          _
        $region20: #{hpo_hand_net_forward.1} parent=11 // pred_fallthru
          _
        // Predicated region
        $region21: #{hpo_hand_net_forward.1} parent=11 // pred_check
          %p184 = pneg %p114
        $region22: #{hpo_hand_net_forward.1} parent=11 // pred_check_branch
          %186 = sbr.rel (%p184) target = $region24
        $region23: #{hpo_hand_net_forward.1} parent=11 // pred_region
          _
        $region24: #{hpo_hand_net_forward.1} parent=11 // pred_fallthru
          _
        // Predicated region
        $region25: #{hpo_hand_net_forward.1} parent=11 // pred_check
          %p187 = pneg %p135
        $region26: #{hpo_hand_net_forward.1} parent=11 // pred_check_branch
          %189 = sbr.rel (%p187) target = $region28
        $region27: #{hpo_hand_net_forward.1} parent=11 // pred_region
          _
        $region28: #{hpo_hand_net_forward.1} parent=11 // pred_fallthru
          _
      $region12: #{hpo_hand_net_forward.1} parent=5 // pred_fallthru
        _
      %p190 = scmp.lt.s32.totalorder %s11, 4
      // Predicated region
      $region29: #{hpo_hand_net_forward.1} parent=5 // pred_check
        %p191 = pneg %p190
      $region30: #{hpo_hand_net_forward.1} parent=5 // pred_check_branch
        %193 = sbr.rel (%p191) target = $region32
      $region31: #{hpo_hand_net_forward.1} parent=5 // pred_region
        // Predicated region
        $region33: #{hpo_hand_net_forward.1} parent=31 // pred_check
          %p194 = pneg %p45
        $region34: #{hpo_hand_net_forward.1} parent=31 // pred_check_branch
          %196 = sbr.rel (%p194) target = $region36
        $region35: #{hpo_hand_net_forward.1} parent=31 // pred_region
          %p197 = scmp.lt.s32.totalorder %s18, 1
          %s198 = scalar_select %p197, %s18, 1
          %p199 = scmp.lt.s32.totalorder %s19, 1
          %s200 = scalar_select %p199, %s19, 1
          %s201 = smul.addr %s198, 2
          %s202 = sadd.s32 %s200, %s201
          %s203 = smul.addr %s202, 2
          %s204 = scalar_lea.vmem %s0, %s203
        $region36: #{hpo_hand_net_forward.1} parent=31 // pred_fallthru
          _
      $region32: #{hpo_hand_net_forward.1} parent=5 // pred_fallthru
        _
      %p205 = scmp.le.s32.totalorder 1, %s11
      %p206 = scmp.lt.s32.totalorder %s11, 5
      %p207 = pnand %p205, %p206
      %p208 = pneg %p207
      // Predicated region
      $region37: #{hpo_hand_net_forward.1} parent=5 // pred_check
        _
      $region38: #{hpo_hand_net_forward.1} parent=5 // pred_check_branch
        %210 = sbr.rel (%p207) target = $region40
      $region39: #{hpo_hand_net_forward.1} parent=5 // pred_region
        %s211 = ssub.s32 %s11, 1
        %p212 = scmp.lt.s32.totalorder %s20, 1
        %s213 = scalar_select %p212, %s20, 1
        %p214 = scmp.lt.s32.totalorder %s21, 1
        %s215 = scalar_select %p214, %s21, 1
        %s216 = smul.addr %s213, 2
        %s217 = sadd.s32 %s215, %s216
        %s218 = smul.addr %s217, 2
        %s219 = scalar_lea.vmem %s0, %s218
        %p220 = pneg %p51
        %p221 = pneg %p48
        %p222 = pneg %p72
        %p223 = pneg %p69
        %p224 = pneg %p93
        %p225 = pneg %p90
        %p226 = pneg %p114
        %p227 = pneg %p111
        %p228 = pneg %p135
        %p229 = pneg %p132
        %p230 = pneg %p163
        %p231 = pneg %p160
        %s232 = sand.u32 %s150, 1
        %s233 = sand.u32 %s150, 1
        %s234 = smul.addr %s233, 160
        %s235 = scalar_lea.vmem [#allocation2], %s234
        %p236 = scmp.lt.s32.totalorder %s20, 1
        %s237 = scalar_select %p236, %s20, 1
        %p238 = scmp.lt.s32.totalorder %s21, 1
        %s239 = scalar_select %p238, %s21, 1
        %s240 = smul.addr %s237, 2
        %s241 = sadd.s32 %s239, %s240
        %s242 = smul.addr %s241, 2
        %s243 = scalar_lea.vmem %s0, %s242
        %v245 = vld [vmem:[%s2] sm:$0xff]
        %v246 = vld [vmem:[%s2 + $0x8] sm:$0xff]
        %v247 = vld [vmem:[%s2 + $0x10] sm:$0xff]
        %v248 = vld [vmem:[%s2 + $0x18] sm:$0xff]
        %v249 = vld [vmem:[%s2 + $0x20] sm:$0xff]
        %v250 = vld [vmem:[%s2 + $0x28] sm:$0xff]
        %v251 = vld [vmem:[%s2 + $0x30] sm:$0xff]
        %v252 = vld [vmem:[%s2 + $0x38] sm:$0xff]
        %v253 = vld [vmem:[%s2 + $0x40] sm:$0xff]
        %v254 = vld [vmem:[%s2 + $0x48] sm:$0xff]
        %v255 = vld [vmem:[%s2 + $0x50] sm:$0xff]
        %v256 = vld [vmem:[%s2 + $0x58] sm:$0xff]
        %v257 = vld [vmem:[%s2 + $0x60] sm:$0xff]
        %v258 = vld [vmem:[%s2 + $0x68] sm:$0xff]
        %v259 = vld [vmem:[%s2 + $0x70] sm:$0xff]
        %v260 = vld [vmem:[%s2 + $0x78] sm:$0xff]
        %v261 = vld [vmem:[%s2 + $0x80] sm:$0xff]
        %v262 = vld [vmem:[%s2 + $0x88] sm:$0xff]
        %v263 = vld [vmem:[%s2 + $0x90] sm:$0xff]
        %v264 = vld [vmem:[%s2 + $0x98] sm:$0xff]
        %v265 = vld [vmem:[%s2 + $0xa0] sm:$0xff]
        %v266 = vld [vmem:[%s2 + $0xa8] sm:$0xff]
        %v267 = vld [vmem:[%s2 + $0xb0] sm:$0xff]
        %v268 = vld [vmem:[%s2 + $0xb8] sm:$0xff]
        %v269 = vld [vmem:[%s2 + $0xc0] sm:$0xff]
        %v270 = vld [vmem:[%s2 + $0xc8] sm:$0xff]
        %v271 = vld [vmem:[%s2 + $0xd0] sm:$0xff]
        %v272 = vld [vmem:[%s2 + $0xd8] sm:$0xff]
        %v273 = vld [vmem:[%s2 + $0xe0] sm:$0xff]
        %v274 = vld [vmem:[%s2 + $0xe8] sm:$0xff]
        %v275 = vld [vmem:[%s2 + $0xf0] sm:$0xff]
        %v276 = vld [vmem:[%s2 + $0xf8] sm:$0xff]
        %v277 = vld [vmem:[%s2 + $0x100] sm:$0xff]
        %v278 = vld [vmem:[%s2 + $0x108] sm:$0xff]
        %v279 = vld [vmem:[%s2 + $0x110] sm:$0xff]
        %v280 = vld [vmem:[%s2 + $0x118] sm:$0xff]
        %v281 = vld [vmem:[%s2 + $0x120] sm:$0xff]
        %v282 = vld [vmem:[%s2 + $0x128] sm:$0xff]
        %v283 = vld [vmem:[%s2 + $0x130] sm:$0xff]
        %v284 = vld [vmem:[%s2 + $0x138] sm:$0xff]
        %v285 = vld [vmem:[%s2 + $0x140] sm:$0xff]
        %v286 = vld [vmem:[%s2 + $0x148] sm:$0xff]
        %v287 = vld [vmem:[%s2 + $0x150] sm:$0xff]
        %v288 = vld [vmem:[%s2 + $0x158] sm:$0xff]
        %v289 = vld [vmem:[%s2 + $0x160] sm:$0xff]
        %v290 = vld [vmem:[%s2 + $0x168] sm:$0xff]
        %v291 = vld [vmem:[%s2 + $0x170] sm:$0xff]
        %v292 = vld [vmem:[%s2 + $0x178] sm:$0xff]
        %v293 = vld [vmem:[%s2 + $0x180] sm:$0xff]
        %v294 = vld [vmem:[%s2 + $0x188] sm:$0xff]
        %v295 = vld [vmem:[%s2 + $0x190] sm:$0xff]
        %v296 = vld [vmem:[%s2 + $0x198] sm:$0xff]
        %v297 = vld [vmem:[%s2 + $0x1a0] sm:$0xff]
        %v298 = vld [vmem:[%s2 + $0x1a8] sm:$0xff]
        %v299 = vld [vmem:[%s2 + $0x1b0] sm:$0xff]
        %v300 = vld [vmem:[%s2 + $0x1b8] sm:$0xff]
        %v301 = vld [vmem:[%s2 + $0x1c0] sm:$0xff]
        %v302 = vld [vmem:[%s2 + $0x1c8] sm:$0xff]
        %v303 = vld [vmem:[%s2 + $0x1d0] sm:$0xff]
        %v304 = vld [vmem:[%s2 + $0x1d8] sm:$0xff]
        %v305 = vld [vmem:[%s2 + $0x1e0] sm:$0xff]
        %v306 = vld [vmem:[%s2 + $0x1e8] sm:$0xff]
        %v307 = vld [vmem:[%s2 + $0x1f0] sm:$0xff]
        %v308 = vld [vmem:[%s2 + $0x1f8] sm:$0xff]
        %v309 = vld [vmem:[%s2 + $0x200] sm:$0xff]
        %v310 = vld [vmem:[%s2 + $0x208] sm:$0xff]
        %v311 = vld [vmem:[%s2 + $0x210] sm:$0xff]
        %v312 = vld [vmem:[%s2 + $0x218] sm:$0xff]
        %v313 = vld [vmem:[%s2 + $0x220] sm:$0xff]
        %v314 = vld [vmem:[%s2 + $0x228] sm:$0xff]
        %v315 = vld [vmem:[%s2 + $0x230] sm:$0xff]
        %v316 = vld [vmem:[%s2 + $0x238] sm:$0xff]
        %v317 = vld [vmem:[%s2 + $0x240] sm:$0xff]
        %v318 = vld [vmem:[%s2 + $0x248] sm:$0xff]
        %v319 = vld [vmem:[%s2 + $0x250] sm:$0xff]
        %v320 = vld [vmem:[%s2 + $0x258] sm:$0xff]
        %v321 = vld [vmem:[%s2 + $0x260] sm:$0xff]
        %v322 = vld [vmem:[%s2 + $0x268] sm:$0xff]
        %v323 = vld [vmem:[%s2 + $0x270] sm:$0xff]
        %v324 = vld [vmem:[%s2 + $0x278] sm:$0xff]
        %v325 = vld [vmem:[%s2 + $0x280] sm:$0xff]
        %v326 = vld [vmem:[%s2 + $0x288] sm:$0xff]
        %v327 = vld [vmem:[%s2 + $0x290] sm:$0xff]
        %v328 = vld [vmem:[%s2 + $0x298] sm:$0xff]
        %v329 = vld [vmem:[%s2 + $0x2a0] sm:$0xff]
        %v330 = vld [vmem:[%s2 + $0x2a8] sm:$0xff]
        %v331 = vld [vmem:[%s2 + $0x2b0] sm:$0xff]
        %v332 = vld [vmem:[%s2 + $0x2b8] sm:$0xff]
        %v333 = vld [vmem:[%s2 + $0x2c0] sm:$0xff]
        %v334 = vld [vmem:[%s2 + $0x2c8] sm:$0xff]
        %v335 = vld [vmem:[%s2 + $0x2d0] sm:$0xff]
        %v336 = vld [vmem:[%s2 + $0x2d8] sm:$0xff]
        %v337 = vld [vmem:[%s2 + $0x2e0] sm:$0xff]
        %v338 = vld [vmem:[%s2 + $0x2e8] sm:$0xff]
        %v339 = vld [vmem:[%s2 + $0x2f0] sm:$0xff]
        %v340 = vld [vmem:[%s2 + $0x2f8] sm:$0xff]
        %v341 = vld [vmem:[%s2 + $0x300] sm:$0xff]
        %v342 = vld [vmem:[%s2 + $0x308] sm:$0xff]
        %v343 = vld [vmem:[%s2 + $0x310] sm:$0xff]
        %v344 = vld [vmem:[%s2 + $0x318] sm:$0xff]
        %v345 = vld [vmem:[%s2 + $0x320] sm:$0xff]
        %v346 = vld [vmem:[%s2 + $0x328] sm:$0xff]
        %v347 = vld [vmem:[%s2 + $0x330] sm:$0xff]
        %v348 = vld [vmem:[%s2 + $0x338] sm:$0xff]
        %v349 = vld [vmem:[%s2 + $0x340] sm:$0xff]
        %v350 = vld [vmem:[%s2 + $0x348] sm:$0xff]
        %v351 = vld [vmem:[%s2 + $0x350] sm:$0xff]
        %v352 = vld [vmem:[%s2 + $0x358] sm:$0xff]
        %v353 = vld [vmem:[%s2 + $0x360] sm:$0xff]
        %v354 = vld [vmem:[%s2 + $0x368] sm:$0xff]
        %v355 = vld [vmem:[%s2 + $0x370] sm:$0xff]
        %v356 = vld [vmem:[%s2 + $0x378] sm:$0xff]
        %v357 = vld [vmem:[%s2 + $0x380] sm:$0xff]
        %v358 = vld [vmem:[%s2 + $0x388] sm:$0xff]
        %v359 = vld [vmem:[%s2 + $0x390] sm:$0xff]
        %v360 = vld [vmem:[%s2 + $0x398] sm:$0xff]
        %v361 = vld [vmem:[%s2 + $0x3a0] sm:$0xff]
        %v362 = vld [vmem:[%s2 + $0x3a8] sm:$0xff]
        %v363 = vld [vmem:[%s2 + $0x3b0] sm:$0xff]
        %v364 = vld [vmem:[%s2 + $0x3b8] sm:$0xff]
        %v365 = vld [vmem:[%s2 + $0x3c0] sm:$0xff]
        %v366 = vld [vmem:[%s2 + $0x3c8] sm:$0xff]
        %v367 = vld [vmem:[%s2 + $0x3d0] sm:$0xff]
        %v368 = vld [vmem:[%s2 + $0x3d8] sm:$0xff]
        %v369 = vld [vmem:[%s2 + $0x3e0] sm:$0xff]
        %v370 = vld [vmem:[%s2 + $0x3e8] sm:$0xff]
        %v371 = vld [vmem:[%s2 + $0x3f0] sm:$0xff]
        %v372 = vld [vmem:[%s2 + $0x3f8] sm:$0xff]
        %v373 = vld [vmem:[%s4] sm:$0xff]
        %v374 = vld [vmem:[%s4 + $0x8] sm:$0xff]
        %v375 = vld [vmem:[%s4 + $0x10] sm:$0xff]
        %v376 = vld [vmem:[%s4 + $0x18] sm:$0xff]
        %v377 = vld [vmem:[%s4 + $0x20] sm:$0xff]
        %v378 = vld [vmem:[%s4 + $0x28] sm:$0xff]
        %v379 = vld [vmem:[%s4 + $0x30] sm:$0xff]
        %v380 = vld [vmem:[%s4 + $0x38] sm:$0xff]
        %v381 = vld [vmem:[%s4 + $0x40] sm:$0xff]
        %v382 = vld [vmem:[%s4 + $0x48] sm:$0xff]
        %v383 = vld [vmem:[%s4 + $0x50] sm:$0xff]
        %v384 = vld [vmem:[%s4 + $0x58] sm:$0xff]
        %v385 = vld [vmem:[%s4 + $0x60] sm:$0xff]
        %v386 = vld [vmem:[%s4 + $0x68] sm:$0xff]
        %v387 = vld [vmem:[%s4 + $0x70] sm:$0xff]
        %v388 = vld [vmem:[%s4 + $0x78] sm:$0xff]
        %v389 = vld [vmem:[%s4 + $0x80] sm:$0xff]
        %v390 = vld [vmem:[%s4 + $0x88] sm:$0xff]
        %v391 = vld [vmem:[%s4 + $0x90] sm:$0xff]
        %v392 = vld [vmem:[%s4 + $0x98] sm:$0xff]
        %v393 = vld [vmem:[%s4 + $0xa0] sm:$0xff]
        %v394 = vld [vmem:[%s4 + $0xa8] sm:$0xff]
        %v395 = vld [vmem:[%s4 + $0xb0] sm:$0xff]
        %v396 = vld [vmem:[%s4 + $0xb8] sm:$0xff]
        %v397 = vld [vmem:[%s4 + $0xc0] sm:$0xff]
        %v398 = vld [vmem:[%s4 + $0xc8] sm:$0xff]
        %v399 = vld [vmem:[%s4 + $0xd0] sm:$0xff]
        %v400 = vld [vmem:[%s4 + $0xd8] sm:$0xff]
        %v401 = vld [vmem:[%s4 + $0xe0] sm:$0xff]
        %v402 = vld [vmem:[%s4 + $0xe8] sm:$0xff]
        %v403 = vld [vmem:[%s4 + $0xf0] sm:$0xff]
        %v404 = vld [vmem:[%s4 + $0xf8] sm:$0xff]
        %v405 = vld [vmem:[%s4 + $0x100] sm:$0xff]
        %v406 = vld [vmem:[%s4 + $0x108] sm:$0xff]
        %v407 = vld [vmem:[%s4 + $0x110] sm:$0xff]
        %v408 = vld [vmem:[%s4 + $0x118] sm:$0xff]
        %v409 = vld [vmem:[%s4 + $0x120] sm:$0xff]
        %v410 = vld [vmem:[%s4 + $0x128] sm:$0xff]
        %v411 = vld [vmem:[%s4 + $0x130] sm:$0xff]
        %v412 = vld [vmem:[%s4 + $0x138] sm:$0xff]
        %v413 = vld [vmem:[%s1] sm:$0xf]
        %v414 = vld [vmem:[%s1 + $0x4] sm:$0xf]
        %v415 = vld [vmem:[%s1 + $0x8] sm:$0xf]
        %v416 = vld [vmem:[%s1 + $0xc] sm:$0xf]
        %v417 = vld [vmem:[%s1 + $0x10] sm:$0xf]
        %v418 = vld [vmem:[%s1 + $0x14] sm:$0xf]
        %v419 = vld [vmem:[%s1 + $0x18] sm:$0xf]
        %v420 = vld [vmem:[%s1 + $0x1c] sm:$0xf]
        %v421 = vld [vmem:[%s1 + $0x20] sm:$0xf]
        %v422 = vld [vmem:[%s1 + $0x24] sm:$0xf]
        %v423 = vld [vmem:[%s1 + $0x28] sm:$0xf]
        %v424 = vld [vmem:[%s1 + $0x2c] sm:$0xf]
        %v425 = vld [vmem:[%s1 + $0x30] sm:$0xf]
        %v426 = vld [vmem:[%s1 + $0x34] sm:$0xf]
        %v427 = vld [vmem:[%s1 + $0x38] sm:$0xf]
        %v428 = vld [vmem:[%s1 + $0x3c] sm:$0xf]
        %v429 = vld [vmem:[%s1 + $0x40] sm:$0xf]
        %v430 = vld [vmem:[%s1 + $0x44] sm:$0xf]
        %v431 = vld [vmem:[%s1 + $0x48] sm:$0xf]
        %v432 = vld [vmem:[%s1 + $0x4c] sm:$0xf]
        %v433 = vld [vmem:[%s1 + $0x50] sm:$0xf]
        %v434 = vld [vmem:[%s1 + $0x54] sm:$0xf]
        %v435 = vld [vmem:[%s1 + $0x58] sm:$0xf]
        %v436 = vld [vmem:[%s1 + $0x5c] sm:$0xf]
        %v437 = vld [vmem:[%s1 + $0x60] sm:$0xf]
        %v438 = vld [vmem:[%s1 + $0x64] sm:$0xf]
        %v439 = vld [vmem:[%s1 + $0x68] sm:$0xf]
        %v440 = vld [vmem:[%s1 + $0x6c] sm:$0xf]
        %v441 = vld [vmem:[%s1 + $0x70] sm:$0xf]
        %v442 = vld [vmem:[%s1 + $0x74] sm:$0xf]
        %v443 = vld [vmem:[%s1 + $0x78] sm:$0xf]
        %v444 = vld [vmem:[%s1 + $0x7c] sm:$0xf]
        %v445 = vld [vmem:[%s1 + $0x80] sm:$0xf]
        %v446 = vld [vmem:[%s1 + $0x84] sm:$0xf]
        %v447 = vld [vmem:[%s1 + $0x88] sm:$0xf]
        %v448 = vld [vmem:[%s1 + $0x8c] sm:$0xf]
        %v449 = vld [vmem:[%s1 + $0x90] sm:$0xf]
        %v450 = vld [vmem:[%s1 + $0x94] sm:$0xf]
        %v451 = vld [vmem:[%s1 + $0x98] sm:$0xf]
        %v452 = vld [vmem:[%s1 + $0x9c] sm:$0xf]
        %v453 = vld [vmem:[%s1 + $0xa0] sm:$0xf]
        %v454 = vld [vmem:[%s1 + $0xa4] sm:$0xf]
        %v455 = vld [vmem:[%s1 + $0xa8] sm:$0xf]
        %v456 = vld [vmem:[%s1 + $0xac] sm:$0xf]
        %v457 = vld [vmem:[%s1 + $0xb0] sm:$0xf]
        %v458 = vld [vmem:[%s1 + $0xb4] sm:$0xf]
        %v459 = vld [vmem:[%s1 + $0xb8] sm:$0xf]
        %v460 = vld [vmem:[%s1 + $0xbc] sm:$0xf]
        %v461 = vld [vmem:[%s1 + $0xc0] sm:$0xf]
        %v462 = vld [vmem:[%s1 + $0xc4] sm:$0xf]
        %v463 = vld [vmem:[%s1 + $0xc8] sm:$0xf]
        %v464 = vld [vmem:[%s1 + $0xcc] sm:$0xf]
        %v465 = vld [vmem:[%s1 + $0xd0] sm:$0xf]
        %v466 = vld [vmem:[%s1 + $0xd4] sm:$0xf]
        %v467 = vld [vmem:[%s1 + $0xd8] sm:$0xf]
        %v468 = vld [vmem:[%s1 + $0xdc] sm:$0xf]
        %v469 = vld [vmem:[%s1 + $0xe0] sm:$0xf]
        %v470 = vld [vmem:[%s1 + $0xe4] sm:$0xf]
        %v471 = vld [vmem:[%s1 + $0xe8] sm:$0xf]
        %v472 = vld [vmem:[%s1 + $0xec] sm:$0xf]
        %v473 = vld [vmem:[%s1 + $0xf0] sm:$0xf]
        %v474 = vld [vmem:[%s1 + $0xf4] sm:$0xf]
        %v475 = vld [vmem:[%s1 + $0xf8] sm:$0xf]
        %v476 = vld [vmem:[%s1 + $0xfc] sm:$0xf]
        %v477 = vld [vmem:[%s1 + $0x100] sm:$0xf]
        %v478 = vld [vmem:[%s1 + $0x104] sm:$0xf]
        %v479 = vld [vmem:[%s1 + $0x108] sm:$0xf]
        %v480 = vld [vmem:[%s1 + $0x10c] sm:$0xf]
        %v481 = vld [vmem:[%s1 + $0x110] sm:$0xf]
        %v482 = vld [vmem:[%s1 + $0x114] sm:$0xf]
        %v483 = vld [vmem:[%s1 + $0x118] sm:$0xf]
        %v484 = vld [vmem:[%s1 + $0x11c] sm:$0xf]
        %v485 = vld [vmem:[%s1 + $0x120] sm:$0xf]
        %v486 = vld [vmem:[%s1 + $0x124] sm:$0xf]
        %v487 = vld [vmem:[%s1 + $0x128] sm:$0xf]
        %v488 = vld [vmem:[%s1 + $0x12c] sm:$0xf]
        %v489 = vld [vmem:[%s1 + $0x130] sm:$0xf]
        %v490 = vld [vmem:[%s1 + $0x134] sm:$0xf]
        %v491 = vld [vmem:[%s1 + $0x138] sm:$0xf]
        %v492 = vld [vmem:[%s1 + $0x13c] sm:$0xf]
        %v493 = vld [vmem:[%s1 + $0x140] sm:$0xf]
        %v494 = vld [vmem:[%s1 + $0x144] sm:$0xf]
        %v495 = vld [vmem:[%s1 + $0x148] sm:$0xf]
        %v496 = vld [vmem:[%s1 + $0x14c] sm:$0xf]
        %v497 = vld [vmem:[%s1 + $0x150] sm:$0xf]
        %v498 = vld [vmem:[%s1 + $0x154] sm:$0xf]
        %v499 = vld [vmem:[%s1 + $0x158] sm:$0xf]
        %v500 = vld [vmem:[%s1 + $0x15c] sm:$0xf]
        %v501 = vld [vmem:[%s1 + $0x160] sm:$0xf]
        %v502 = vld [vmem:[%s1 + $0x164] sm:$0xf]
        %v503 = vld [vmem:[%s1 + $0x168] sm:$0xf]
        %v504 = vld [vmem:[%s1 + $0x16c] sm:$0xf]
        %v505 = vld [vmem:[%s1 + $0x170] sm:$0xf]
        %v506 = vld [vmem:[%s1 + $0x174] sm:$0xf]
        %v507 = vld [vmem:[%s1 + $0x178] sm:$0xf]
        %v508 = vld [vmem:[%s1 + $0x17c] sm:$0xf]
        %v509 = vld [vmem:[%s1 + $0x180] sm:$0xf]
        %v510 = vld [vmem:[%s1 + $0x184] sm:$0xf]
        %v511 = vld [vmem:[%s1 + $0x188] sm:$0xf]
        %v512 = vld [vmem:[%s1 + $0x18c] sm:$0xf]
        %v513 = vld [vmem:[%s1 + $0x190] sm:$0xf]
        %v514 = vld [vmem:[%s1 + $0x194] sm:$0xf]
        %v515 = vld [vmem:[%s1 + $0x198] sm:$0xf]
        %v516 = vld [vmem:[%s1 + $0x19c] sm:$0xf]
        %v517 = vld [vmem:[%s1 + $0x1a0] sm:$0xf]
        %v518 = vld [vmem:[%s1 + $0x1a4] sm:$0xf]
        %v519 = vld [vmem:[%s1 + $0x1a8] sm:$0xf]
        %v520 = vld [vmem:[%s1 + $0x1ac] sm:$0xf]
        %v521 = vld [vmem:[%s1 + $0x1b0] sm:$0xf]
        %v522 = vld [vmem:[%s1 + $0x1b4] sm:$0xf]
        %v523 = vld [vmem:[%s1 + $0x1b8] sm:$0xf]
        %v524 = vld [vmem:[%s1 + $0x1bc] sm:$0xf]
        %v525 = vld [vmem:[%s1 + $0x1c0] sm:$0xf]
        %v526 = vld [vmem:[%s1 + $0x1c4] sm:$0xf]
        %v527 = vld [vmem:[%s1 + $0x1c8] sm:$0xf]
        %v528 = vld [vmem:[%s1 + $0x1cc] sm:$0xf]
        %v529 = vld [vmem:[%s1 + $0x1d0] sm:$0xf]
        %v530 = vld [vmem:[%s1 + $0x1d4] sm:$0xf]
        %v531 = vld [vmem:[%s1 + $0x1d8] sm:$0xf]
        %v532 = vld [vmem:[%s1 + $0x1dc] sm:$0xf]
        %v533 = vld [vmem:[%s1 + $0x1e0] sm:$0xf]
        %v534 = vld [vmem:[%s1 + $0x1e4] sm:$0xf]
        %v535 = vld [vmem:[%s1 + $0x1e8] sm:$0xf]
        %v536 = vld [vmem:[%s1 + $0x1ec] sm:$0xf]
        %v537 = vld [vmem:[%s1 + $0x1f0] sm:$0xf]
        %v538 = vld [vmem:[%s1 + $0x1f4] sm:$0xf]
        %v539 = vld [vmem:[%s1 + $0x1f8] sm:$0xf]
        %v540 = vld [vmem:[%s1 + $0x1fc] sm:$0xf]
        %v541 = vunpack.c.l.bf16 %v413
        %v542 = vunpack.c.l.bf16 %v414
        %v543 = vunpack.c.l.bf16 %v415
        %v544 = vunpack.c.l.bf16 %v416
        %v545 = vunpack.c.l.bf16 %v417
        %v546 = vunpack.c.l.bf16 %v418
        %v547 = vunpack.c.l.bf16 %v419
        %v548 = vunpack.c.l.bf16 %v420
        %v549 = vunpack.c.l.bf16 %v421
        %v550 = vunpack.c.l.bf16 %v422
        %v551 = vunpack.c.l.bf16 %v423
        %v552 = vunpack.c.l.bf16 %v424
        %v553 = vunpack.c.l.bf16 %v425
        %v554 = vunpack.c.l.bf16 %v426
        %v555 = vunpack.c.l.bf16 %v427
        %v556 = vunpack.c.l.bf16 %v428
        %v557 = vunpack.c.l.bf16 %v429
        %v558 = vunpack.c.l.bf16 %v430
        %v559 = vunpack.c.l.bf16 %v431
        %v560 = vunpack.c.l.bf16 %v432
        %v561 = vunpack.c.l.bf16 %v433
        %v562 = vunpack.c.l.bf16 %v434
        %v563 = vunpack.c.l.bf16 %v435
        %v564 = vunpack.c.l.bf16 %v436
        %v565 = vunpack.c.l.bf16 %v437
        %v566 = vunpack.c.l.bf16 %v438
        %v567 = vunpack.c.l.bf16 %v439
        %v568 = vunpack.c.l.bf16 %v440
        %v569 = vunpack.c.l.bf16 %v441
        %v570 = vunpack.c.l.bf16 %v442
        %v571 = vunpack.c.l.bf16 %v443
        %v572 = vunpack.c.l.bf16 %v444
        %v573 = vunpack.c.l.bf16 %v445
        %v574 = vunpack.c.l.bf16 %v446
        %v575 = vunpack.c.l.bf16 %v447
        %v576 = vunpack.c.l.bf16 %v448
        %v577 = vunpack.c.l.bf16 %v449
        %v578 = vunpack.c.l.bf16 %v450
        %v579 = vunpack.c.l.bf16 %v451
        %v580 = vunpack.c.l.bf16 %v452
        %v581 = vunpack.c.l.bf16 %v453
        %v582 = vunpack.c.l.bf16 %v454
        %v583 = vunpack.c.l.bf16 %v455
        %v584 = vunpack.c.l.bf16 %v456
        %v585 = vunpack.c.l.bf16 %v457
        %v586 = vunpack.c.l.bf16 %v458
        %v587 = vunpack.c.l.bf16 %v459
        %v588 = vunpack.c.l.bf16 %v460
        %v589 = vunpack.c.l.bf16 %v461
        %v590 = vunpack.c.l.bf16 %v462
        %v591 = vunpack.c.l.bf16 %v463
        %v592 = vunpack.c.l.bf16 %v464
        %v593 = vunpack.c.l.bf16 %v465
        %v594 = vunpack.c.l.bf16 %v466
        %v595 = vunpack.c.l.bf16 %v467
        %v596 = vunpack.c.l.bf16 %v468
        %v597 = vunpack.c.l.bf16 %v469
        %v598 = vunpack.c.l.bf16 %v470
        %v599 = vunpack.c.l.bf16 %v471
        %v600 = vunpack.c.l.bf16 %v472
        %v601 = vunpack.c.l.bf16 %v473
        %v602 = vunpack.c.l.bf16 %v474
        %v603 = vunpack.c.l.bf16 %v475
        %v604 = vunpack.c.l.bf16 %v476
        %v605 = vunpack.c.l.bf16 %v477
        %v606 = vunpack.c.l.bf16 %v478
        %v607 = vunpack.c.l.bf16 %v479
        %v608 = vunpack.c.l.bf16 %v480
        %v609 = vunpack.c.l.bf16 %v481
        %v610 = vunpack.c.l.bf16 %v482
        %v611 = vunpack.c.l.bf16 %v483
        %v612 = vunpack.c.l.bf16 %v484
        %v613 = vunpack.c.l.bf16 %v485
        %v614 = vunpack.c.l.bf16 %v486
        %v615 = vunpack.c.l.bf16 %v487
        %v616 = vunpack.c.l.bf16 %v488
        %v617 = vunpack.c.l.bf16 %v489
        %v618 = vunpack.c.l.bf16 %v490
        %v619 = vunpack.c.l.bf16 %v491
        %v620 = vunpack.c.l.bf16 %v492
        %v621 = vunpack.c.l.bf16 %v493
        %v622 = vunpack.c.l.bf16 %v494
        %v623 = vunpack.c.l.bf16 %v495
        %v624 = vunpack.c.l.bf16 %v496
        %v625 = vunpack.c.l.bf16 %v497
        %v626 = vunpack.c.l.bf16 %v498
        %v627 = vunpack.c.l.bf16 %v499
        %v628 = vunpack.c.l.bf16 %v500
        %v629 = vunpack.c.l.bf16 %v501
        %v630 = vunpack.c.l.bf16 %v502
        %v631 = vunpack.c.l.bf16 %v503
        %v632 = vunpack.c.l.bf16 %v504
        %v633 = vunpack.c.l.bf16 %v505
        %v634 = vunpack.c.l.bf16 %v506
        %v635 = vunpack.c.l.bf16 %v507
        %v636 = vunpack.c.l.bf16 %v508
        %v637 = vunpack.c.l.bf16 %v509
        %v638 = vunpack.c.l.bf16 %v510
        %v639 = vunpack.c.l.bf16 %v511
        %v640 = vunpack.c.l.bf16 %v512
        %v641 = vunpack.c.l.bf16 %v513
        %v642 = vunpack.c.l.bf16 %v514
        %v643 = vunpack.c.l.bf16 %v515
        %v644 = vunpack.c.l.bf16 %v516
        %v645 = vunpack.c.l.bf16 %v517
        %v646 = vunpack.c.l.bf16 %v518
        %v647 = vunpack.c.l.bf16 %v519
        %v648 = vunpack.c.l.bf16 %v520
        %v649 = vunpack.c.l.bf16 %v521
        %v650 = vunpack.c.l.bf16 %v522
        %v651 = vunpack.c.l.bf16 %v523
        %v652 = vunpack.c.l.bf16 %v524
        %v653 = vunpack.c.l.bf16 %v525
        %v654 = vunpack.c.l.bf16 %v526
        %v655 = vunpack.c.l.bf16 %v527
        %v656 = vunpack.c.l.bf16 %v528
        %v657 = vunpack.c.l.bf16 %v529
        %v658 = vunpack.c.l.bf16 %v530
        %v659 = vunpack.c.l.bf16 %v531
        %v660 = vunpack.c.l.bf16 %v532
        %v661 = vunpack.c.l.bf16 %v533
        %v662 = vunpack.c.l.bf16 %v534
        %v663 = vunpack.c.l.bf16 %v535
        %v664 = vunpack.c.l.bf16 %v536
        %v665 = vunpack.c.l.bf16 %v537
        %v666 = vunpack.c.l.bf16 %v538
        %v667 = vunpack.c.l.bf16 %v539
        %v668 = vunpack.c.l.bf16 %v540
        %v669 = vld [vmem:[%s243] sm:$0x3]
        %v670 = vunpack.c.l.bf16 %v669
        %672 = vset.pattern.permute.xlu0 0
        %673 = vperm.xlu0 %672, %v541
        %v674 = vpop.permute.xlu0 %673
        %677 = vset.pattern.permute.xlu0 0
        %678 = vperm.xlu0 %677, %v542
        %v679 = vpop.permute.xlu0 %678
        %682 = vset.pattern.permute.xlu0 0
        %683 = vperm.xlu0 %682, %v543
        %v684 = vpop.permute.xlu0 %683
        %687 = vset.pattern.permute.xlu0 0
        %688 = vperm.xlu0 %687, %v544
        %v689 = vpop.permute.xlu0 %688
        %692 = vset.pattern.permute.xlu0 0
        %693 = vperm.xlu0 %692, %v545
        %v694 = vpop.permute.xlu0 %693
        %697 = vset.pattern.permute.xlu0 0
        %698 = vperm.xlu0 %697, %v546
        %v699 = vpop.permute.xlu0 %698
        %702 = vset.pattern.permute.xlu0 0
        %703 = vperm.xlu0 %702, %v547
        %v704 = vpop.permute.xlu0 %703
        %707 = vset.pattern.permute.xlu0 0
        %708 = vperm.xlu0 %707, %v548
        %v709 = vpop.permute.xlu0 %708
        %712 = vset.pattern.permute.xlu0 0
        %713 = vperm.xlu0 %712, %v549
        %v714 = vpop.permute.xlu0 %713
        %717 = vset.pattern.permute.xlu0 0
        %718 = vperm.xlu0 %717, %v550
        %v719 = vpop.permute.xlu0 %718
        %722 = vset.pattern.permute.xlu0 0
        %723 = vperm.xlu0 %722, %v551
        %v724 = vpop.permute.xlu0 %723
        %727 = vset.pattern.permute.xlu0 0
        %728 = vperm.xlu0 %727, %v552
        %v729 = vpop.permute.xlu0 %728
        %732 = vset.pattern.permute.xlu0 0
        %733 = vperm.xlu0 %732, %v553
        %v734 = vpop.permute.xlu0 %733
        %737 = vset.pattern.permute.xlu0 0
        %738 = vperm.xlu0 %737, %v554
        %v739 = vpop.permute.xlu0 %738
        %742 = vset.pattern.permute.xlu0 0
        %743 = vperm.xlu0 %742, %v555
        %v744 = vpop.permute.xlu0 %743
        %747 = vset.pattern.permute.xlu0 0
        %748 = vperm.xlu0 %747, %v556
        %v749 = vpop.permute.xlu0 %748
        %752 = vset.pattern.permute.xlu0 0
        %753 = vperm.xlu0 %752, %v557
        %v754 = vpop.permute.xlu0 %753
        %757 = vset.pattern.permute.xlu0 0
        %758 = vperm.xlu0 %757, %v558
        %v759 = vpop.permute.xlu0 %758
        %762 = vset.pattern.permute.xlu0 0
        %763 = vperm.xlu0 %762, %v559
        %v764 = vpop.permute.xlu0 %763
        %767 = vset.pattern.permute.xlu0 0
        %768 = vperm.xlu0 %767, %v560
        %v769 = vpop.permute.xlu0 %768
        %772 = vset.pattern.permute.xlu0 0
        %773 = vperm.xlu0 %772, %v561
        %v774 = vpop.permute.xlu0 %773
        %777 = vset.pattern.permute.xlu0 0
        %778 = vperm.xlu0 %777, %v562
        %v779 = vpop.permute.xlu0 %778
        %782 = vset.pattern.permute.xlu0 0
        %783 = vperm.xlu0 %782, %v563
        %v784 = vpop.permute.xlu0 %783
        %787 = vset.pattern.permute.xlu0 0
        %788 = vperm.xlu0 %787, %v564
        %v789 = vpop.permute.xlu0 %788
        %792 = vset.pattern.permute.xlu0 0
        %793 = vperm.xlu0 %792, %v565
        %v794 = vpop.permute.xlu0 %793
        %797 = vset.pattern.permute.xlu0 0
        %798 = vperm.xlu0 %797, %v566
        %v799 = vpop.permute.xlu0 %798
        %802 = vset.pattern.permute.xlu0 0
        %803 = vperm.xlu0 %802, %v567
        %v804 = vpop.permute.xlu0 %803
        %807 = vset.pattern.permute.xlu0 0
        %808 = vperm.xlu0 %807, %v568
        %v809 = vpop.permute.xlu0 %808
        %812 = vset.pattern.permute.xlu0 0
        %813 = vperm.xlu0 %812, %v569
        %v814 = vpop.permute.xlu0 %813
        %817 = vset.pattern.permute.xlu0 0
        %818 = vperm.xlu0 %817, %v570
        %v819 = vpop.permute.xlu0 %818
        %822 = vset.pattern.permute.xlu0 0
        %823 = vperm.xlu0 %822, %v571
        %v824 = vpop.permute.xlu0 %823
        %827 = vset.pattern.permute.xlu0 0
        %828 = vperm.xlu0 %827, %v572
        %v829 = vpop.permute.xlu0 %828
        %832 = vset.pattern.permute.xlu0 0
        %833 = vperm.xlu0 %832, %v573
        %v834 = vpop.permute.xlu0 %833
        %837 = vset.pattern.permute.xlu0 0
        %838 = vperm.xlu0 %837, %v574
        %v839 = vpop.permute.xlu0 %838
        %842 = vset.pattern.permute.xlu0 0
        %843 = vperm.xlu0 %842, %v575
        %v844 = vpop.permute.xlu0 %843
        %847 = vset.pattern.permute.xlu0 0
        %848 = vperm.xlu0 %847, %v576
        %v849 = vpop.permute.xlu0 %848
        %852 = vset.pattern.permute.xlu0 0
        %853 = vperm.xlu0 %852, %v577
        %v854 = vpop.permute.xlu0 %853
        %857 = vset.pattern.permute.xlu0 0
        %858 = vperm.xlu0 %857, %v578
        %v859 = vpop.permute.xlu0 %858
        %862 = vset.pattern.permute.xlu0 0
        %863 = vperm.xlu0 %862, %v579
        %v864 = vpop.permute.xlu0 %863
        %867 = vset.pattern.permute.xlu0 0
        %868 = vperm.xlu0 %867, %v580
        %v869 = vpop.permute.xlu0 %868
        %872 = vset.pattern.permute.xlu0 0
        %873 = vperm.xlu0 %872, %v581
        %v874 = vpop.permute.xlu0 %873
        %877 = vset.pattern.permute.xlu0 0
        %878 = vperm.xlu0 %877, %v582
        %v879 = vpop.permute.xlu0 %878
        %882 = vset.pattern.permute.xlu0 0
        %883 = vperm.xlu0 %882, %v583
        %v884 = vpop.permute.xlu0 %883
        %887 = vset.pattern.permute.xlu0 0
        %888 = vperm.xlu0 %887, %v584
        %v889 = vpop.permute.xlu0 %888
        %892 = vset.pattern.permute.xlu0 0
        %893 = vperm.xlu0 %892, %v585
        %v894 = vpop.permute.xlu0 %893
        %897 = vset.pattern.permute.xlu0 0
        %898 = vperm.xlu0 %897, %v586
        %v899 = vpop.permute.xlu0 %898
        %902 = vset.pattern.permute.xlu0 0
        %903 = vperm.xlu0 %902, %v587
        %v904 = vpop.permute.xlu0 %903
        %907 = vset.pattern.permute.xlu0 0
        %908 = vperm.xlu0 %907, %v588
        %v909 = vpop.permute.xlu0 %908
        %912 = vset.pattern.permute.xlu0 0
        %913 = vperm.xlu0 %912, %v589
        %v914 = vpop.permute.xlu0 %913
        %917 = vset.pattern.permute.xlu0 0
        %918 = vperm.xlu0 %917, %v590
        %v919 = vpop.permute.xlu0 %918
        %922 = vset.pattern.permute.xlu0 0
        %923 = vperm.xlu0 %922, %v591
        %v924 = vpop.permute.xlu0 %923
        %927 = vset.pattern.permute.xlu0 0
        %928 = vperm.xlu0 %927, %v592
        %v929 = vpop.permute.xlu0 %928
        %932 = vset.pattern.permute.xlu0 0
        %933 = vperm.xlu0 %932, %v593
        %v934 = vpop.permute.xlu0 %933
        %937 = vset.pattern.permute.xlu0 0
        %938 = vperm.xlu0 %937, %v594
        %v939 = vpop.permute.xlu0 %938
        %942 = vset.pattern.permute.xlu0 0
        %943 = vperm.xlu0 %942, %v595
        %v944 = vpop.permute.xlu0 %943
        %947 = vset.pattern.permute.xlu0 0
        %948 = vperm.xlu0 %947, %v596
        %v949 = vpop.permute.xlu0 %948
        %952 = vset.pattern.permute.xlu0 0
        %953 = vperm.xlu0 %952, %v597
        %v954 = vpop.permute.xlu0 %953
        %957 = vset.pattern.permute.xlu0 0
        %958 = vperm.xlu0 %957, %v598
        %v959 = vpop.permute.xlu0 %958
        %962 = vset.pattern.permute.xlu0 0
        %963 = vperm.xlu0 %962, %v599
        %v964 = vpop.permute.xlu0 %963
        %967 = vset.pattern.permute.xlu0 0
        %968 = vperm.xlu0 %967, %v600
        %v969 = vpop.permute.xlu0 %968
        %972 = vset.pattern.permute.xlu0 0
        %973 = vperm.xlu0 %972, %v601
        %v974 = vpop.permute.xlu0 %973
        %977 = vset.pattern.permute.xlu0 0
        %978 = vperm.xlu0 %977, %v602
        %v979 = vpop.permute.xlu0 %978
        %982 = vset.pattern.permute.xlu0 0
        %983 = vperm.xlu0 %982, %v603
        %v984 = vpop.permute.xlu0 %983
        %987 = vset.pattern.permute.xlu0 0
        %988 = vperm.xlu0 %987, %v604
        %v989 = vpop.permute.xlu0 %988
        %992 = vset.pattern.permute.xlu0 0
        %993 = vperm.xlu0 %992, %v605
        %v994 = vpop.permute.xlu0 %993
        %997 = vset.pattern.permute.xlu0 0
        %998 = vperm.xlu0 %997, %v606
        %v999 = vpop.permute.xlu0 %998
        %1002 = vset.pattern.permute.xlu0 0
        %1003 = vperm.xlu0 %1002, %v607
        %v1004 = vpop.permute.xlu0 %1003
        %1007 = vset.pattern.permute.xlu0 0
        %1008 = vperm.xlu0 %1007, %v608
        %v1009 = vpop.permute.xlu0 %1008
        %1012 = vset.pattern.permute.xlu0 0
        %1013 = vperm.xlu0 %1012, %v609
        %v1014 = vpop.permute.xlu0 %1013
        %1017 = vset.pattern.permute.xlu0 0
        %1018 = vperm.xlu0 %1017, %v610
        %v1019 = vpop.permute.xlu0 %1018
        %1022 = vset.pattern.permute.xlu0 0
        %1023 = vperm.xlu0 %1022, %v611
        %v1024 = vpop.permute.xlu0 %1023
        %1027 = vset.pattern.permute.xlu0 0
        %1028 = vperm.xlu0 %1027, %v612
        %v1029 = vpop.permute.xlu0 %1028
        %1032 = vset.pattern.permute.xlu0 0
        %1033 = vperm.xlu0 %1032, %v613
        %v1034 = vpop.permute.xlu0 %1033
        %1037 = vset.pattern.permute.xlu0 0
        %1038 = vperm.xlu0 %1037, %v614
        %v1039 = vpop.permute.xlu0 %1038
        %1042 = vset.pattern.permute.xlu0 0
        %1043 = vperm.xlu0 %1042, %v615
        %v1044 = vpop.permute.xlu0 %1043
        %1047 = vset.pattern.permute.xlu0 0
        %1048 = vperm.xlu0 %1047, %v616
        %v1049 = vpop.permute.xlu0 %1048
        %1052 = vset.pattern.permute.xlu0 0
        %1053 = vperm.xlu0 %1052, %v617
        %v1054 = vpop.permute.xlu0 %1053
        %1057 = vset.pattern.permute.xlu0 0
        %1058 = vperm.xlu0 %1057, %v618
        %v1059 = vpop.permute.xlu0 %1058
        %1062 = vset.pattern.permute.xlu0 0
        %1063 = vperm.xlu0 %1062, %v619
        %v1064 = vpop.permute.xlu0 %1063
        %1067 = vset.pattern.permute.xlu0 0
        %1068 = vperm.xlu0 %1067, %v620
        %v1069 = vpop.permute.xlu0 %1068
        %1072 = vset.pattern.permute.xlu0 0
        %1073 = vperm.xlu0 %1072, %v621
        %v1074 = vpop.permute.xlu0 %1073
        %1077 = vset.pattern.permute.xlu0 0
        %1078 = vperm.xlu0 %1077, %v622
        %v1079 = vpop.permute.xlu0 %1078
        %1082 = vset.pattern.permute.xlu0 0
        %1083 = vperm.xlu0 %1082, %v623
        %v1084 = vpop.permute.xlu0 %1083
        %1087 = vset.pattern.permute.xlu0 0
        %1088 = vperm.xlu0 %1087, %v624
        %v1089 = vpop.permute.xlu0 %1088
        %1092 = vset.pattern.permute.xlu0 0
        %1093 = vperm.xlu0 %1092, %v625
        %v1094 = vpop.permute.xlu0 %1093
        %1097 = vset.pattern.permute.xlu0 0
        %1098 = vperm.xlu0 %1097, %v626
        %v1099 = vpop.permute.xlu0 %1098
        %1102 = vset.pattern.permute.xlu0 0
        %1103 = vperm.xlu0 %1102, %v627
        %v1104 = vpop.permute.xlu0 %1103
        %1107 = vset.pattern.permute.xlu0 0
        %1108 = vperm.xlu0 %1107, %v628
        %v1109 = vpop.permute.xlu0 %1108
        %1112 = vset.pattern.permute.xlu0 0
        %1113 = vperm.xlu0 %1112, %v629
        %v1114 = vpop.permute.xlu0 %1113
        %1117 = vset.pattern.permute.xlu0 0
        %1118 = vperm.xlu0 %1117, %v630
        %v1119 = vpop.permute.xlu0 %1118
        %1122 = vset.pattern.permute.xlu0 0
        %1123 = vperm.xlu0 %1122, %v631
        %v1124 = vpop.permute.xlu0 %1123
        %1127 = vset.pattern.permute.xlu0 0
        %1128 = vperm.xlu0 %1127, %v632
        %v1129 = vpop.permute.xlu0 %1128
        %1132 = vset.pattern.permute.xlu0 0
        %1133 = vperm.xlu0 %1132, %v633
        %v1134 = vpop.permute.xlu0 %1133
        %1137 = vset.pattern.permute.xlu0 0
        %1138 = vperm.xlu0 %1137, %v634
        %v1139 = vpop.permute.xlu0 %1138
        %1142 = vset.pattern.permute.xlu0 0
        %1143 = vperm.xlu0 %1142, %v635
        %v1144 = vpop.permute.xlu0 %1143
        %1147 = vset.pattern.permute.xlu0 0
        %1148 = vperm.xlu0 %1147, %v636
        %v1149 = vpop.permute.xlu0 %1148
        %1152 = vset.pattern.permute.xlu0 0
        %1153 = vperm.xlu0 %1152, %v637
        %v1154 = vpop.permute.xlu0 %1153
        %1157 = vset.pattern.permute.xlu0 0
        %1158 = vperm.xlu0 %1157, %v638
        %v1159 = vpop.permute.xlu0 %1158
        %1162 = vset.pattern.permute.xlu0 0
        %1163 = vperm.xlu0 %1162, %v639
        %v1164 = vpop.permute.xlu0 %1163
        %1167 = vset.pattern.permute.xlu0 0
        %1168 = vperm.xlu0 %1167, %v640
        %v1169 = vpop.permute.xlu0 %1168
        %1172 = vset.pattern.permute.xlu0 0
        %1173 = vperm.xlu0 %1172, %v641
        %v1174 = vpop.permute.xlu0 %1173
        %1177 = vset.pattern.permute.xlu0 0
        %1178 = vperm.xlu0 %1177, %v642
        %v1179 = vpop.permute.xlu0 %1178
        %1182 = vset.pattern.permute.xlu0 0
        %1183 = vperm.xlu0 %1182, %v643
        %v1184 = vpop.permute.xlu0 %1183
        %1187 = vset.pattern.permute.xlu0 0
        %1188 = vperm.xlu0 %1187, %v644
        %v1189 = vpop.permute.xlu0 %1188
        %1192 = vset.pattern.permute.xlu0 0
        %1193 = vperm.xlu0 %1192, %v645
        %v1194 = vpop.permute.xlu0 %1193
        %1197 = vset.pattern.permute.xlu0 0
        %1198 = vperm.xlu0 %1197, %v646
        %v1199 = vpop.permute.xlu0 %1198
        %1202 = vset.pattern.permute.xlu0 0
        %1203 = vperm.xlu0 %1202, %v647
        %v1204 = vpop.permute.xlu0 %1203
        %1207 = vset.pattern.permute.xlu0 0
        %1208 = vperm.xlu0 %1207, %v648
        %v1209 = vpop.permute.xlu0 %1208
        %1212 = vset.pattern.permute.xlu0 0
        %1213 = vperm.xlu0 %1212, %v649
        %v1214 = vpop.permute.xlu0 %1213
        %1217 = vset.pattern.permute.xlu0 0
        %1218 = vperm.xlu0 %1217, %v650
        %v1219 = vpop.permute.xlu0 %1218
        %1222 = vset.pattern.permute.xlu0 0
        %1223 = vperm.xlu0 %1222, %v651
        %v1224 = vpop.permute.xlu0 %1223
        %1227 = vset.pattern.permute.xlu0 0
        %1228 = vperm.xlu0 %1227, %v652
        %v1229 = vpop.permute.xlu0 %1228
        %1232 = vset.pattern.permute.xlu0 0
        %1233 = vperm.xlu0 %1232, %v653
        %v1234 = vpop.permute.xlu0 %1233
        %1237 = vset.pattern.permute.xlu0 0
        %1238 = vperm.xlu0 %1237, %v654
        %v1239 = vpop.permute.xlu0 %1238
        %1242 = vset.pattern.permute.xlu0 0
        %1243 = vperm.xlu0 %1242, %v655
        %v1244 = vpop.permute.xlu0 %1243
        %1247 = vset.pattern.permute.xlu0 0
        %1248 = vperm.xlu0 %1247, %v656
        %v1249 = vpop.permute.xlu0 %1248
        %1252 = vset.pattern.permute.xlu0 0
        %1253 = vperm.xlu0 %1252, %v657
        %v1254 = vpop.permute.xlu0 %1253
        %1257 = vset.pattern.permute.xlu0 0
        %1258 = vperm.xlu0 %1257, %v658
        %v1259 = vpop.permute.xlu0 %1258
        %1262 = vset.pattern.permute.xlu0 0
        %1263 = vperm.xlu0 %1262, %v659
        %v1264 = vpop.permute.xlu0 %1263
        %1267 = vset.pattern.permute.xlu0 0
        %1268 = vperm.xlu0 %1267, %v660
        %v1269 = vpop.permute.xlu0 %1268
        %1272 = vset.pattern.permute.xlu0 0
        %1273 = vperm.xlu0 %1272, %v661
        %v1274 = vpop.permute.xlu0 %1273
        %1277 = vset.pattern.permute.xlu0 0
        %1278 = vperm.xlu0 %1277, %v662
        %v1279 = vpop.permute.xlu0 %1278
        %1282 = vset.pattern.permute.xlu0 0
        %1283 = vperm.xlu0 %1282, %v663
        %v1284 = vpop.permute.xlu0 %1283
        %1287 = vset.pattern.permute.xlu0 0
        %1288 = vperm.xlu0 %1287, %v664
        %v1289 = vpop.permute.xlu0 %1288
        %1292 = vset.pattern.permute.xlu0 0
        %1293 = vperm.xlu0 %1292, %v665
        %v1294 = vpop.permute.xlu0 %1293
        %1297 = vset.pattern.permute.xlu0 0
        %1298 = vperm.xlu0 %1297, %v666
        %v1299 = vpop.permute.xlu0 %1298
        %1302 = vset.pattern.permute.xlu0 0
        %1303 = vperm.xlu0 %1302, %v667
        %v1304 = vpop.permute.xlu0 %1303
        %1307 = vset.pattern.permute.xlu0 0
        %1308 = vperm.xlu0 %1307, %v668
        %v1309 = vpop.permute.xlu0 %1308
        %v1311 = vlaneseq
        %v1312 = vshrl.u32 %v1311, 7
        %v1313 = vsub.s32 0, %v1312
        %v1314 = vrot.slane %v670, %v1313
        %v1315 = vmul.f32 %v674, %v1314
        %v1316 = vmul.f32 %v679, %v1314
        %v1317 = vmul.f32 %v684, %v1314
        %v1318 = vmul.f32 %v689, %v1314
        %v1319 = vmul.f32 %v694, %v1314
        %v1320 = vmul.f32 %v699, %v1314
        %v1321 = vmul.f32 %v704, %v1314
        %v1322 = vmul.f32 %v709, %v1314
        %v1323 = vmul.f32 %v714, %v1314
        %v1324 = vmul.f32 %v719, %v1314
        %v1325 = vmul.f32 %v724, %v1314
        %v1326 = vmul.f32 %v729, %v1314
        %v1327 = vmul.f32 %v734, %v1314
        %v1328 = vmul.f32 %v739, %v1314
        %v1329 = vmul.f32 %v744, %v1314
        %v1330 = vmul.f32 %v749, %v1314
        %v1331 = vmul.f32 %v754, %v1314
        %v1332 = vmul.f32 %v759, %v1314
        %v1333 = vmul.f32 %v764, %v1314
        %v1334 = vmul.f32 %v769, %v1314
        %v1335 = vmul.f32 %v774, %v1314
        %v1336 = vmul.f32 %v779, %v1314
        %v1337 = vmul.f32 %v784, %v1314
        %v1338 = vmul.f32 %v789, %v1314
        %v1339 = vmul.f32 %v794, %v1314
        %v1340 = vmul.f32 %v799, %v1314
        %v1341 = vmul.f32 %v804, %v1314
        %v1342 = vmul.f32 %v809, %v1314
        %v1343 = vmul.f32 %v814, %v1314
        %v1344 = vmul.f32 %v819, %v1314
        %v1345 = vmul.f32 %v824, %v1314
        %v1346 = vmul.f32 %v829, %v1314
        %v1347 = vmul.f32 %v834, %v1314
        %v1348 = vmul.f32 %v839, %v1314
        %v1349 = vmul.f32 %v844, %v1314
        %v1350 = vmul.f32 %v849, %v1314
        %v1351 = vmul.f32 %v854, %v1314
        %v1352 = vmul.f32 %v859, %v1314
        %v1353 = vmul.f32 %v864, %v1314
        %v1354 = vmul.f32 %v869, %v1314
        %v1355 = vmul.f32 %v874, %v1314
        %v1356 = vmul.f32 %v879, %v1314
        %v1357 = vmul.f32 %v884, %v1314
        %v1358 = vmul.f32 %v889, %v1314
        %v1359 = vmul.f32 %v894, %v1314
        %v1360 = vmul.f32 %v899, %v1314
        %v1361 = vmul.f32 %v904, %v1314
        %v1362 = vmul.f32 %v909, %v1314
        %v1363 = vmul.f32 %v914, %v1314
        %v1364 = vmul.f32 %v919, %v1314
        %v1365 = vmul.f32 %v924, %v1314
        %v1366 = vmul.f32 %v929, %v1314
        %v1367 = vmul.f32 %v934, %v1314
        %v1368 = vmul.f32 %v939, %v1314
        %v1369 = vmul.f32 %v944, %v1314
        %v1370 = vmul.f32 %v949, %v1314
        %v1371 = vmul.f32 %v954, %v1314
        %v1372 = vmul.f32 %v959, %v1314
        %v1373 = vmul.f32 %v964, %v1314
        %v1374 = vmul.f32 %v969, %v1314
        %v1375 = vmul.f32 %v974, %v1314
        %v1376 = vmul.f32 %v979, %v1314
        %v1377 = vmul.f32 %v984, %v1314
        %v1378 = vmul.f32 %v989, %v1314
        %v1379 = vmul.f32 %v994, %v1314
        %v1380 = vmul.f32 %v999, %v1314
        %v1381 = vmul.f32 %v1004, %v1314
        %v1382 = vmul.f32 %v1009, %v1314
        %v1383 = vmul.f32 %v1014, %v1314
        %v1384 = vmul.f32 %v1019, %v1314
        %v1385 = vmul.f32 %v1024, %v1314
        %v1386 = vmul.f32 %v1029, %v1314
        %v1387 = vmul.f32 %v1034, %v1314
        %v1388 = vmul.f32 %v1039, %v1314
        %v1389 = vmul.f32 %v1044, %v1314
        %v1390 = vmul.f32 %v1049, %v1314
        %v1391 = vmul.f32 %v1054, %v1314
        %v1392 = vmul.f32 %v1059, %v1314
        %v1393 = vmul.f32 %v1064, %v1314
        %v1394 = vmul.f32 %v1069, %v1314
        %v1395 = vmul.f32 %v1074, %v1314
        %v1396 = vmul.f32 %v1079, %v1314
        %v1397 = vmul.f32 %v1084, %v1314
        %v1398 = vmul.f32 %v1089, %v1314
        %v1399 = vmul.f32 %v1094, %v1314
        %v1400 = vmul.f32 %v1099, %v1314
        %v1401 = vmul.f32 %v1104, %v1314
        %v1402 = vmul.f32 %v1109, %v1314
        %v1403 = vmul.f32 %v1114, %v1314
        %v1404 = vmul.f32 %v1119, %v1314
        %v1405 = vmul.f32 %v1124, %v1314
        %v1406 = vmul.f32 %v1129, %v1314
        %v1407 = vmul.f32 %v1134, %v1314
        %v1408 = vmul.f32 %v1139, %v1314
        %v1409 = vmul.f32 %v1144, %v1314
        %v1410 = vmul.f32 %v1149, %v1314
        %v1411 = vmul.f32 %v1154, %v1314
        %v1412 = vmul.f32 %v1159, %v1314
        %v1413 = vmul.f32 %v1164, %v1314
        %v1414 = vmul.f32 %v1169, %v1314
        %v1415 = vmul.f32 %v1174, %v1314
        %v1416 = vmul.f32 %v1179, %v1314
        %v1417 = vmul.f32 %v1184, %v1314
        %v1418 = vmul.f32 %v1189, %v1314
        %v1419 = vmul.f32 %v1194, %v1314
        %v1420 = vmul.f32 %v1199, %v1314
        %v1421 = vmul.f32 %v1204, %v1314
        %v1422 = vmul.f32 %v1209, %v1314
        %v1423 = vmul.f32 %v1214, %v1314
        %v1424 = vmul.f32 %v1219, %v1314
        %v1425 = vmul.f32 %v1224, %v1314
        %v1426 = vmul.f32 %v1229, %v1314
        %v1427 = vmul.f32 %v1234, %v1314
        %v1428 = vmul.f32 %v1239, %v1314
        %v1429 = vmul.f32 %v1244, %v1314
        %v1430 = vmul.f32 %v1249, %v1314
        %v1431 = vmul.f32 %v1254, %v1314
        %v1432 = vmul.f32 %v1259, %v1314
        %v1433 = vmul.f32 %v1264, %v1314
        %v1434 = vmul.f32 %v1269, %v1314
        %v1435 = vmul.f32 %v1274, %v1314
        %v1436 = vmul.f32 %v1279, %v1314
        %v1437 = vmul.f32 %v1284, %v1314
        %v1438 = vmul.f32 %v1289, %v1314
        %v1439 = vmul.f32 %v1294, %v1314
        %v1440 = vmul.f32 %v1299, %v1314
        %v1441 = vmul.f32 %v1304, %v1314
        %v1442 = vmul.f32 %v1309, %v1314
        %1443 = vset.pattern.permute.xlu0 1
        %1444 = vperm.xlu0 %1443, %v541
        %v1445 = vpop.permute.xlu0 %1444
        %1447 = vset.pattern.permute.xlu0 1
        %1448 = vperm.xlu0 %1447, %v542
        %v1449 = vpop.permute.xlu0 %1448
        %1451 = vset.pattern.permute.xlu0 1
        %1452 = vperm.xlu0 %1451, %v543
        %v1453 = vpop.permute.xlu0 %1452
        %1455 = vset.pattern.permute.xlu0 1
        %1456 = vperm.xlu0 %1455, %v544
        %v1457 = vpop.permute.xlu0 %1456
        %1459 = vset.pattern.permute.xlu0 1
        %1460 = vperm.xlu0 %1459, %v545
        %v1461 = vpop.permute.xlu0 %1460
        %1463 = vset.pattern.permute.xlu0 1
        %1464 = vperm.xlu0 %1463, %v546
        %v1465 = vpop.permute.xlu0 %1464
        %1467 = vset.pattern.permute.xlu0 1
        %1468 = vperm.xlu0 %1467, %v547
        %v1469 = vpop.permute.xlu0 %1468
        %1471 = vset.pattern.permute.xlu0 1
        %1472 = vperm.xlu0 %1471, %v548
        %v1473 = vpop.permute.xlu0 %1472
        %1475 = vset.pattern.permute.xlu0 1
        %1476 = vperm.xlu0 %1475, %v549
        %v1477 = vpop.permute.xlu0 %1476
        %1479 = vset.pattern.permute.xlu0 1
        %1480 = vperm.xlu0 %1479, %v550
        %v1481 = vpop.permute.xlu0 %1480
        %1483 = vset.pattern.permute.xlu0 1
        %1484 = vperm.xlu0 %1483, %v551
        %v1485 = vpop.permute.xlu0 %1484
        %1487 = vset.pattern.permute.xlu0 1
        %1488 = vperm.xlu0 %1487, %v552
        %v1489 = vpop.permute.xlu0 %1488
        %1491 = vset.pattern.permute.xlu0 1
        %1492 = vperm.xlu0 %1491, %v553
        %v1493 = vpop.permute.xlu0 %1492
        %1495 = vset.pattern.permute.xlu0 1
        %1496 = vperm.xlu0 %1495, %v554
        %v1497 = vpop.permute.xlu0 %1496
        %1499 = vset.pattern.permute.xlu0 1
        %1500 = vperm.xlu0 %1499, %v555
        %v1501 = vpop.permute.xlu0 %1500
        %1503 = vset.pattern.permute.xlu0 1
        %1504 = vperm.xlu0 %1503, %v556
        %v1505 = vpop.permute.xlu0 %1504
        %1507 = vset.pattern.permute.xlu0 1
        %1508 = vperm.xlu0 %1507, %v557
        %v1509 = vpop.permute.xlu0 %1508
        %1511 = vset.pattern.permute.xlu0 1
        %1512 = vperm.xlu0 %1511, %v558
        %v1513 = vpop.permute.xlu0 %1512
        %1515 = vset.pattern.permute.xlu0 1
        %1516 = vperm.xlu0 %1515, %v559
        %v1517 = vpop.permute.xlu0 %1516
        %1519 = vset.pattern.permute.xlu0 1
        %1520 = vperm.xlu0 %1519, %v560
        %v1521 = vpop.permute.xlu0 %1520
        %1523 = vset.pattern.permute.xlu0 1
        %1524 = vperm.xlu0 %1523, %v561
        %v1525 = vpop.permute.xlu0 %1524
        %1527 = vset.pattern.permute.xlu0 1
        %1528 = vperm.xlu0 %1527, %v562
        %v1529 = vpop.permute.xlu0 %1528
        %1531 = vset.pattern.permute.xlu0 1
        %1532 = vperm.xlu0 %1531, %v563
        %v1533 = vpop.permute.xlu0 %1532
        %1535 = vset.pattern.permute.xlu0 1
        %1536 = vperm.xlu0 %1535, %v564
        %v1537 = vpop.permute.xlu0 %1536
        %1539 = vset.pattern.permute.xlu0 1
        %1540 = vperm.xlu0 %1539, %v565
        %v1541 = vpop.permute.xlu0 %1540
        %1543 = vset.pattern.permute.xlu0 1
        %1544 = vperm.xlu0 %1543, %v566
        %v1545 = vpop.permute.xlu0 %1544
        %1547 = vset.pattern.permute.xlu0 1
        %1548 = vperm.xlu0 %1547, %v567
        %v1549 = vpop.permute.xlu0 %1548
        %1551 = vset.pattern.permute.xlu0 1
        %1552 = vperm.xlu0 %1551, %v568
        %v1553 = vpop.permute.xlu0 %1552
        %1555 = vset.pattern.permute.xlu0 1
        %1556 = vperm.xlu0 %1555, %v569
        %v1557 = vpop.permute.xlu0 %1556
        %1559 = vset.pattern.permute.xlu0 1
        %1560 = vperm.xlu0 %1559, %v570
        %v1561 = vpop.permute.xlu0 %1560
        %1563 = vset.pattern.permute.xlu0 1
        %1564 = vperm.xlu0 %1563, %v571
        %v1565 = vpop.permute.xlu0 %1564
        %1567 = vset.pattern.permute.xlu0 1
        %1568 = vperm.xlu0 %1567, %v572
        %v1569 = vpop.permute.xlu0 %1568
        %1571 = vset.pattern.permute.xlu0 1
        %1572 = vperm.xlu0 %1571, %v573
        %v1573 = vpop.permute.xlu0 %1572
        %1575 = vset.pattern.permute.xlu0 1
        %1576 = vperm.xlu0 %1575, %v574
        %v1577 = vpop.permute.xlu0 %1576
        %1579 = vset.pattern.permute.xlu0 1
        %1580 = vperm.xlu0 %1579, %v575
        %v1581 = vpop.permute.xlu0 %1580
        %1583 = vset.pattern.permute.xlu0 1
        %1584 = vperm.xlu0 %1583, %v576
        %v1585 = vpop.permute.xlu0 %1584
        %1587 = vset.pattern.permute.xlu0 1
        %1588 = vperm.xlu0 %1587, %v577
        %v1589 = vpop.permute.xlu0 %1588
        %1591 = vset.pattern.permute.xlu0 1
        %1592 = vperm.xlu0 %1591, %v578
        %v1593 = vpop.permute.xlu0 %1592
        %1595 = vset.pattern.permute.xlu0 1
        %1596 = vperm.xlu0 %1595, %v579
        %v1597 = vpop.permute.xlu0 %1596
        %1599 = vset.pattern.permute.xlu0 1
        %1600 = vperm.xlu0 %1599, %v580
        %v1601 = vpop.permute.xlu0 %1600
        %1603 = vset.pattern.permute.xlu0 1
        %1604 = vperm.xlu0 %1603, %v581
        %v1605 = vpop.permute.xlu0 %1604
        %1607 = vset.pattern.permute.xlu0 1
        %1608 = vperm.xlu0 %1607, %v582
        %v1609 = vpop.permute.xlu0 %1608
        %1611 = vset.pattern.permute.xlu0 1
        %1612 = vperm.xlu0 %1611, %v583
        %v1613 = vpop.permute.xlu0 %1612
        %1615 = vset.pattern.permute.xlu0 1
        %1616 = vperm.xlu0 %1615, %v584
        %v1617 = vpop.permute.xlu0 %1616
        %1619 = vset.pattern.permute.xlu0 1
        %1620 = vperm.xlu0 %1619, %v585
        %v1621 = vpop.permute.xlu0 %1620
        %1623 = vset.pattern.permute.xlu0 1
        %1624 = vperm.xlu0 %1623, %v586
        %v1625 = vpop.permute.xlu0 %1624
        %1627 = vset.pattern.permute.xlu0 1
        %1628 = vperm.xlu0 %1627, %v587
        %v1629 = vpop.permute.xlu0 %1628
        %1631 = vset.pattern.permute.xlu0 1
        %1632 = vperm.xlu0 %1631, %v588
        %v1633 = vpop.permute.xlu0 %1632
        %1635 = vset.pattern.permute.xlu0 1
        %1636 = vperm.xlu0 %1635, %v589
        %v1637 = vpop.permute.xlu0 %1636
        %1639 = vset.pattern.permute.xlu0 1
        %1640 = vperm.xlu0 %1639, %v590
        %v1641 = vpop.permute.xlu0 %1640
        %1643 = vset.pattern.permute.xlu0 1
        %1644 = vperm.xlu0 %1643, %v591
        %v1645 = vpop.permute.xlu0 %1644
        %1647 = vset.pattern.permute.xlu0 1
        %1648 = vperm.xlu0 %1647, %v592
        %v1649 = vpop.permute.xlu0 %1648
        %1651 = vset.pattern.permute.xlu0 1
        %1652 = vperm.xlu0 %1651, %v593
        %v1653 = vpop.permute.xlu0 %1652
        %1655 = vset.pattern.permute.xlu0 1
        %1656 = vperm.xlu0 %1655, %v594
        %v1657 = vpop.permute.xlu0 %1656
        %1659 = vset.pattern.permute.xlu0 1
        %1660 = vperm.xlu0 %1659, %v595
        %v1661 = vpop.permute.xlu0 %1660
        %1663 = vset.pattern.permute.xlu0 1
        %1664 = vperm.xlu0 %1663, %v596
        %v1665 = vpop.permute.xlu0 %1664
        %1667 = vset.pattern.permute.xlu0 1
        %1668 = vperm.xlu0 %1667, %v597
        %v1669 = vpop.permute.xlu0 %1668
        %1671 = vset.pattern.permute.xlu0 1
        %1672 = vperm.xlu0 %1671, %v598
        %v1673 = vpop.permute.xlu0 %1672
        %1675 = vset.pattern.permute.xlu0 1
        %1676 = vperm.xlu0 %1675, %v599
        %v1677 = vpop.permute.xlu0 %1676
        %1679 = vset.pattern.permute.xlu0 1
        %1680 = vperm.xlu0 %1679, %v600
        %v1681 = vpop.permute.xlu0 %1680
        %1683 = vset.pattern.permute.xlu0 1
        %1684 = vperm.xlu0 %1683, %v601
        %v1685 = vpop.permute.xlu0 %1684
        %1687 = vset.pattern.permute.xlu0 1
        %1688 = vperm.xlu0 %1687, %v602
        %v1689 = vpop.permute.xlu0 %1688
        %1691 = vset.pattern.permute.xlu0 1
        %1692 = vperm.xlu0 %1691, %v603
        %v1693 = vpop.permute.xlu0 %1692
        %1695 = vset.pattern.permute.xlu0 1
        %1696 = vperm.xlu0 %1695, %v604
        %v1697 = vpop.permute.xlu0 %1696
        %1699 = vset.pattern.permute.xlu0 1
        %1700 = vperm.xlu0 %1699, %v605
        %v1701 = vpop.permute.xlu0 %1700
        %1703 = vset.pattern.permute.xlu0 1
        %1704 = vperm.xlu0 %1703, %v606
        %v1705 = vpop.permute.xlu0 %1704
        %1707 = vset.pattern.permute.xlu0 1
        %1708 = vperm.xlu0 %1707, %v607
        %v1709 = vpop.permute.xlu0 %1708
        %1711 = vset.pattern.permute.xlu0 1
        %1712 = vperm.xlu0 %1711, %v608
        %v1713 = vpop.permute.xlu0 %1712
        %1715 = vset.pattern.permute.xlu0 1
        %1716 = vperm.xlu0 %1715, %v609
        %v1717 = vpop.permute.xlu0 %1716
        %1719 = vset.pattern.permute.xlu0 1
        %1720 = vperm.xlu0 %1719, %v610
        %v1721 = vpop.permute.xlu0 %1720
        %1723 = vset.pattern.permute.xlu0 1
        %1724 = vperm.xlu0 %1723, %v611
        %v1725 = vpop.permute.xlu0 %1724
        %1727 = vset.pattern.permute.xlu0 1
        %1728 = vperm.xlu0 %1727, %v612
        %v1729 = vpop.permute.xlu0 %1728
        %1731 = vset.pattern.permute.xlu0 1
        %1732 = vperm.xlu0 %1731, %v613
        %v1733 = vpop.permute.xlu0 %1732
        %1735 = vset.pattern.permute.xlu0 1
        %1736 = vperm.xlu0 %1735, %v614
        %v1737 = vpop.permute.xlu0 %1736
        %1739 = vset.pattern.permute.xlu0 1
        %1740 = vperm.xlu0 %1739, %v615
        %v1741 = vpop.permute.xlu0 %1740
        %1743 = vset.pattern.permute.xlu0 1
        %1744 = vperm.xlu0 %1743, %v616
        %v1745 = vpop.permute.xlu0 %1744
        %1747 = vset.pattern.permute.xlu0 1
        %1748 = vperm.xlu0 %1747, %v617
        %v1749 = vpop.permute.xlu0 %1748
        %1751 = vset.pattern.permute.xlu0 1
        %1752 = vperm.xlu0 %1751, %v618
        %v1753 = vpop.permute.xlu0 %1752
        %1755 = vset.pattern.permute.xlu0 1
        %1756 = vperm.xlu0 %1755, %v619
        %v1757 = vpop.permute.xlu0 %1756
        %1759 = vset.pattern.permute.xlu0 1
        %1760 = vperm.xlu0 %1759, %v620
        %v1761 = vpop.permute.xlu0 %1760
        %1763 = vset.pattern.permute.xlu0 1
        %1764 = vperm.xlu0 %1763, %v621
        %v1765 = vpop.permute.xlu0 %1764
        %1767 = vset.pattern.permute.xlu0 1
        %1768 = vperm.xlu0 %1767, %v622
        %v1769 = vpop.permute.xlu0 %1768
        %1771 = vset.pattern.permute.xlu0 1
        %1772 = vperm.xlu0 %1771, %v623
        %v1773 = vpop.permute.xlu0 %1772
        %1775 = vset.pattern.permute.xlu0 1
        %1776 = vperm.xlu0 %1775, %v624
        %v1777 = vpop.permute.xlu0 %1776
        %1779 = vset.pattern.permute.xlu0 1
        %1780 = vperm.xlu0 %1779, %v625
        %v1781 = vpop.permute.xlu0 %1780
        %1783 = vset.pattern.permute.xlu0 1
        %1784 = vperm.xlu0 %1783, %v626
        %v1785 = vpop.permute.xlu0 %1784
        %1787 = vset.pattern.permute.xlu0 1
        %1788 = vperm.xlu0 %1787, %v627
        %v1789 = vpop.permute.xlu0 %1788
        %1791 = vset.pattern.permute.xlu0 1
        %1792 = vperm.xlu0 %1791, %v628
        %v1793 = vpop.permute.xlu0 %1792
        %1795 = vset.pattern.permute.xlu0 1
        %1796 = vperm.xlu0 %1795, %v629
        %v1797 = vpop.permute.xlu0 %1796
        %1799 = vset.pattern.permute.xlu0 1
        %1800 = vperm.xlu0 %1799, %v630
        %v1801 = vpop.permute.xlu0 %1800
        %1803 = vset.pattern.permute.xlu0 1
        %1804 = vperm.xlu0 %1803, %v631
        %v1805 = vpop.permute.xlu0 %1804
        %1807 = vset.pattern.permute.xlu0 1
        %1808 = vperm.xlu0 %1807, %v632
        %v1809 = vpop.permute.xlu0 %1808
        %1811 = vset.pattern.permute.xlu0 1
        %1812 = vperm.xlu0 %1811, %v633
        %v1813 = vpop.permute.xlu0 %1812
        %1815 = vset.pattern.permute.xlu0 1
        %1816 = vperm.xlu0 %1815, %v634
        %v1817 = vpop.permute.xlu0 %1816
        %1819 = vset.pattern.permute.xlu0 1
        %1820 = vperm.xlu0 %1819, %v635
        %v1821 = vpop.permute.xlu0 %1820
        %1823 = vset.pattern.permute.xlu0 1
        %1824 = vperm.xlu0 %1823, %v636
        %v1825 = vpop.permute.xlu0 %1824
        %1827 = vset.pattern.permute.xlu0 1
        %1828 = vperm.xlu0 %1827, %v637
        %v1829 = vpop.permute.xlu0 %1828
        %1831 = vset.pattern.permute.xlu0 1
        %1832 = vperm.xlu0 %1831, %v638
        %v1833 = vpop.permute.xlu0 %1832
        %1835 = vset.pattern.permute.xlu0 1
        %1836 = vperm.xlu0 %1835, %v639
        %v1837 = vpop.permute.xlu0 %1836
        %1839 = vset.pattern.permute.xlu0 1
        %1840 = vperm.xlu0 %1839, %v640
        %v1841 = vpop.permute.xlu0 %1840
        %1843 = vset.pattern.permute.xlu0 1
        %1844 = vperm.xlu0 %1843, %v641
        %v1845 = vpop.permute.xlu0 %1844
        %1847 = vset.pattern.permute.xlu0 1
        %1848 = vperm.xlu0 %1847, %v642
        %v1849 = vpop.permute.xlu0 %1848
        %1851 = vset.pattern.permute.xlu0 1
        %1852 = vperm.xlu0 %1851, %v643
        %v1853 = vpop.permute.xlu0 %1852
        %1855 = vset.pattern.permute.xlu0 1
        %1856 = vperm.xlu0 %1855, %v644
        %v1857 = vpop.permute.xlu0 %1856
        %1859 = vset.pattern.permute.xlu0 1
        %1860 = vperm.xlu0 %1859, %v645
        %v1861 = vpop.permute.xlu0 %1860
        %1863 = vset.pattern.permute.xlu0 1
        %1864 = vperm.xlu0 %1863, %v646
        %v1865 = vpop.permute.xlu0 %1864
        %1867 = vset.pattern.permute.xlu0 1
        %1868 = vperm.xlu0 %1867, %v647
        %v1869 = vpop.permute.xlu0 %1868
        %1871 = vset.pattern.permute.xlu0 1
        %1872 = vperm.xlu0 %1871, %v648
        %v1873 = vpop.permute.xlu0 %1872
        %1875 = vset.pattern.permute.xlu0 1
        %1876 = vperm.xlu0 %1875, %v649
        %v1877 = vpop.permute.xlu0 %1876
        %1879 = vset.pattern.permute.xlu0 1
        %1880 = vperm.xlu0 %1879, %v650
        %v1881 = vpop.permute.xlu0 %1880
        %1883 = vset.pattern.permute.xlu0 1
        %1884 = vperm.xlu0 %1883, %v651
        %v1885 = vpop.permute.xlu0 %1884
        %1887 = vset.pattern.permute.xlu0 1
        %1888 = vperm.xlu0 %1887, %v652
        %v1889 = vpop.permute.xlu0 %1888
        %1891 = vset.pattern.permute.xlu0 1
        %1892 = vperm.xlu0 %1891, %v653
        %v1893 = vpop.permute.xlu0 %1892
        %1895 = vset.pattern.permute.xlu0 1
        %1896 = vperm.xlu0 %1895, %v654
        %v1897 = vpop.permute.xlu0 %1896
        %1899 = vset.pattern.permute.xlu0 1
        %1900 = vperm.xlu0 %1899, %v655
        %v1901 = vpop.permute.xlu0 %1900
        %1903 = vset.pattern.permute.xlu0 1
        %1904 = vperm.xlu0 %1903, %v656
        %v1905 = vpop.permute.xlu0 %1904
        %1907 = vset.pattern.permute.xlu0 1
        %1908 = vperm.xlu0 %1907, %v657
        %v1909 = vpop.permute.xlu0 %1908
        %1911 = vset.pattern.permute.xlu0 1
        %1912 = vperm.xlu0 %1911, %v658
        %v1913 = vpop.permute.xlu0 %1912
        %1915 = vset.pattern.permute.xlu0 1
        %1916 = vperm.xlu0 %1915, %v659
        %v1917 = vpop.permute.xlu0 %1916
        %1919 = vset.pattern.permute.xlu0 1
        %1920 = vperm.xlu0 %1919, %v660
        %v1921 = vpop.permute.xlu0 %1920
        %1923 = vset.pattern.permute.xlu0 1
        %1924 = vperm.xlu0 %1923, %v661
        %v1925 = vpop.permute.xlu0 %1924
        %1927 = vset.pattern.permute.xlu0 1
        %1928 = vperm.xlu0 %1927, %v662
        %v1929 = vpop.permute.xlu0 %1928
        %1931 = vset.pattern.permute.xlu0 1
        %1932 = vperm.xlu0 %1931, %v663
        %v1933 = vpop.permute.xlu0 %1932
        %1935 = vset.pattern.permute.xlu0 1
        %1936 = vperm.xlu0 %1935, %v664
        %v1937 = vpop.permute.xlu0 %1936
        %1939 = vset.pattern.permute.xlu0 1
        %1940 = vperm.xlu0 %1939, %v665
        %v1941 = vpop.permute.xlu0 %1940
        %1943 = vset.pattern.permute.xlu0 1
        %1944 = vperm.xlu0 %1943, %v666
        %v1945 = vpop.permute.xlu0 %1944
        %1947 = vset.pattern.permute.xlu0 1
        %1948 = vperm.xlu0 %1947, %v667
        %v1949 = vpop.permute.xlu0 %1948
        %1951 = vset.pattern.permute.xlu0 1
        %1952 = vperm.xlu0 %1951, %v668
        %v1953 = vpop.permute.xlu0 %1952
        %v1955 = vlaneseq
        %v1956 = vshrl.u32 %v1955, 7
        %v1957 = vsub.s32 1, %v1956
        %v1958 = vrot.slane %v670, %v1957
        %v1959 = vmul.f32 %v1445, %v1958
        %v1960 = vmul.f32 %v1449, %v1958
        %v1961 = vmul.f32 %v1453, %v1958
        %v1962 = vmul.f32 %v1457, %v1958
        %v1963 = vmul.f32 %v1461, %v1958
        %v1964 = vmul.f32 %v1465, %v1958
        %v1965 = vmul.f32 %v1469, %v1958
        %v1966 = vmul.f32 %v1473, %v1958
        %v1967 = vmul.f32 %v1477, %v1958
        %v1968 = vmul.f32 %v1481, %v1958
        %v1969 = vmul.f32 %v1485, %v1958
        %v1970 = vmul.f32 %v1489, %v1958
        %v1971 = vmul.f32 %v1493, %v1958
        %v1972 = vmul.f32 %v1497, %v1958
        %v1973 = vmul.f32 %v1501, %v1958
        %v1974 = vmul.f32 %v1505, %v1958
        %v1975 = vmul.f32 %v1509, %v1958
        %v1976 = vmul.f32 %v1513, %v1958
        %v1977 = vmul.f32 %v1517, %v1958
        %v1978 = vmul.f32 %v1521, %v1958
        %v1979 = vmul.f32 %v1525, %v1958
        %v1980 = vmul.f32 %v1529, %v1958
        %v1981 = vmul.f32 %v1533, %v1958
        %v1982 = vmul.f32 %v1537, %v1958
        %v1983 = vmul.f32 %v1541, %v1958
        %v1984 = vmul.f32 %v1545, %v1958
        %v1985 = vmul.f32 %v1549, %v1958
        %v1986 = vmul.f32 %v1553, %v1958
        %v1987 = vmul.f32 %v1557, %v1958
        %v1988 = vmul.f32 %v1561, %v1958
        %v1989 = vmul.f32 %v1565, %v1958
        %v1990 = vmul.f32 %v1569, %v1958
        %v1991 = vmul.f32 %v1573, %v1958
        %v1992 = vmul.f32 %v1577, %v1958
        %v1993 = vmul.f32 %v1581, %v1958
        %v1994 = vmul.f32 %v1585, %v1958
        %v1995 = vmul.f32 %v1589, %v1958
        %v1996 = vmul.f32 %v1593, %v1958
        %v1997 = vmul.f32 %v1597, %v1958
        %v1998 = vmul.f32 %v1601, %v1958
        %v1999 = vmul.f32 %v1605, %v1958
        %v2000 = vmul.f32 %v1609, %v1958
        %v2001 = vmul.f32 %v1613, %v1958
        %v2002 = vmul.f32 %v1617, %v1958
        %v2003 = vmul.f32 %v1621, %v1958
        %v2004 = vmul.f32 %v1625, %v1958
        %v2005 = vmul.f32 %v1629, %v1958
        %v2006 = vmul.f32 %v1633, %v1958
        %v2007 = vmul.f32 %v1637, %v1958
        %v2008 = vmul.f32 %v1641, %v1958
        %v2009 = vmul.f32 %v1645, %v1958
        %v2010 = vmul.f32 %v1649, %v1958
        %v2011 = vmul.f32 %v1653, %v1958
        %v2012 = vmul.f32 %v1657, %v1958
        %v2013 = vmul.f32 %v1661, %v1958
        %v2014 = vmul.f32 %v1665, %v1958
        %v2015 = vmul.f32 %v1669, %v1958
        %v2016 = vmul.f32 %v1673, %v1958
        %v2017 = vmul.f32 %v1677, %v1958
        %v2018 = vmul.f32 %v1681, %v1958
        %v2019 = vmul.f32 %v1685, %v1958
        %v2020 = vmul.f32 %v1689, %v1958
        %v2021 = vmul.f32 %v1693, %v1958
        %v2022 = vmul.f32 %v1697, %v1958
        %v2023 = vmul.f32 %v1701, %v1958
        %v2024 = vmul.f32 %v1705, %v1958
        %v2025 = vmul.f32 %v1709, %v1958
        %v2026 = vmul.f32 %v1713, %v1958
        %v2027 = vmul.f32 %v1717, %v1958
        %v2028 = vmul.f32 %v1721, %v1958
        %v2029 = vmul.f32 %v1725, %v1958
        %v2030 = vmul.f32 %v1729, %v1958
        %v2031 = vmul.f32 %v1733, %v1958
        %v2032 = vmul.f32 %v1737, %v1958
        %v2033 = vmul.f32 %v1741, %v1958
        %v2034 = vmul.f32 %v1745, %v1958
        %v2035 = vmul.f32 %v1749, %v1958
        %v2036 = vmul.f32 %v1753, %v1958
        %v2037 = vmul.f32 %v1757, %v1958
        %v2038 = vmul.f32 %v1761, %v1958
        %v2039 = vmul.f32 %v1765, %v1958
        %v2040 = vmul.f32 %v1769, %v1958
        %v2041 = vmul.f32 %v1773, %v1958
        %v2042 = vmul.f32 %v1777, %v1958
        %v2043 = vmul.f32 %v1781, %v1958
        %v2044 = vmul.f32 %v1785, %v1958
        %v2045 = vmul.f32 %v1789, %v1958
        %v2046 = vmul.f32 %v1793, %v1958
        %v2047 = vmul.f32 %v1797, %v1958
        %v2048 = vmul.f32 %v1801, %v1958
        %v2049 = vmul.f32 %v1805, %v1958
        %v2050 = vmul.f32 %v1809, %v1958
        %v2051 = vmul.f32 %v1813, %v1958
        %v2052 = vmul.f32 %v1817, %v1958
        %v2053 = vmul.f32 %v1821, %v1958
        %v2054 = vmul.f32 %v1825, %v1958
        %v2055 = vmul.f32 %v1829, %v1958
        %v2056 = vmul.f32 %v1833, %v1958
        %v2057 = vmul.f32 %v1837, %v1958
        %v2058 = vmul.f32 %v1841, %v1958
        %v2059 = vmul.f32 %v1845, %v1958
        %v2060 = vmul.f32 %v1849, %v1958
        %v2061 = vmul.f32 %v1853, %v1958
        %v2062 = vmul.f32 %v1857, %v1958
        %v2063 = vmul.f32 %v1861, %v1958
        %v2064 = vmul.f32 %v1865, %v1958
        %v2065 = vmul.f32 %v1869, %v1958
        %v2066 = vmul.f32 %v1873, %v1958
        %v2067 = vmul.f32 %v1877, %v1958
        %v2068 = vmul.f32 %v1881, %v1958
        %v2069 = vmul.f32 %v1885, %v1958
        %v2070 = vmul.f32 %v1889, %v1958
        %v2071 = vmul.f32 %v1893, %v1958
        %v2072 = vmul.f32 %v1897, %v1958
        %v2073 = vmul.f32 %v1901, %v1958
        %v2074 = vmul.f32 %v1905, %v1958
        %v2075 = vmul.f32 %v1909, %v1958
        %v2076 = vmul.f32 %v1913, %v1958
        %v2077 = vmul.f32 %v1917, %v1958
        %v2078 = vmul.f32 %v1921, %v1958
        %v2079 = vmul.f32 %v1925, %v1958
        %v2080 = vmul.f32 %v1929, %v1958
        %v2081 = vmul.f32 %v1933, %v1958
        %v2082 = vmul.f32 %v1937, %v1958
        %v2083 = vmul.f32 %v1941, %v1958
        %v2084 = vmul.f32 %v1945, %v1958
        %v2085 = vmul.f32 %v1949, %v1958
        %v2086 = vmul.f32 %v1953, %v1958
        %v2087 = vadd.f32 %v1315, %v1959
        %v2088 = vadd.f32 %v1316, %v1960
        %v2089 = vadd.f32 %v1317, %v1961
        %v2090 = vadd.f32 %v1318, %v1962
        %v2091 = vadd.f32 %v1319, %v1963
        %v2092 = vadd.f32 %v1320, %v1964
        %v2093 = vadd.f32 %v1321, %v1965
        %v2094 = vadd.f32 %v1322, %v1966
        %v2095 = vadd.f32 %v1323, %v1967
        %v2096 = vadd.f32 %v1324, %v1968
        %v2097 = vadd.f32 %v1325, %v1969
        %v2098 = vadd.f32 %v1326, %v1970
        %v2099 = vadd.f32 %v1327, %v1971
        %v2100 = vadd.f32 %v1328, %v1972
        %v2101 = vadd.f32 %v1329, %v1973
        %v2102 = vadd.f32 %v1330, %v1974
        %v2103 = vadd.f32 %v1331, %v1975
        %v2104 = vadd.f32 %v1332, %v1976
        %v2105 = vadd.f32 %v1333, %v1977
        %v2106 = vadd.f32 %v1334, %v1978
        %v2107 = vadd.f32 %v1335, %v1979
        %v2108 = vadd.f32 %v1336, %v1980
        %v2109 = vadd.f32 %v1337, %v1981
        %v2110 = vadd.f32 %v1338, %v1982
        %v2111 = vadd.f32 %v1339, %v1983
        %v2112 = vadd.f32 %v1340, %v1984
        %v2113 = vadd.f32 %v1341, %v1985
        %v2114 = vadd.f32 %v1342, %v1986
        %v2115 = vadd.f32 %v1343, %v1987
        %v2116 = vadd.f32 %v1344, %v1988
        %v2117 = vadd.f32 %v1345, %v1989
        %v2118 = vadd.f32 %v1346, %v1990
        %v2119 = vadd.f32 %v1347, %v1991
        %v2120 = vadd.f32 %v1348, %v1992
        %v2121 = vadd.f32 %v1349, %v1993
        %v2122 = vadd.f32 %v1350, %v1994
        %v2123 = vadd.f32 %v1351, %v1995
        %v2124 = vadd.f32 %v1352, %v1996
        %v2125 = vadd.f32 %v1353, %v1997
        %v2126 = vadd.f32 %v1354, %v1998
        %v2127 = vadd.f32 %v1355, %v1999
        %v2128 = vadd.f32 %v1356, %v2000
        %v2129 = vadd.f32 %v1357, %v2001
        %v2130 = vadd.f32 %v1358, %v2002
        %v2131 = vadd.f32 %v1359, %v2003
        %v2132 = vadd.f32 %v1360, %v2004
        %v2133 = vadd.f32 %v1361, %v2005
        %v2134 = vadd.f32 %v1362, %v2006
        %v2135 = vadd.f32 %v1363, %v2007
        %v2136 = vadd.f32 %v1364, %v2008
        %v2137 = vadd.f32 %v1365, %v2009
        %v2138 = vadd.f32 %v1366, %v2010
        %v2139 = vadd.f32 %v1367, %v2011
        %v2140 = vadd.f32 %v1368, %v2012
        %v2141 = vadd.f32 %v1369, %v2013
        %v2142 = vadd.f32 %v1370, %v2014
        %v2143 = vadd.f32 %v1371, %v2015
        %v2144 = vadd.f32 %v1372, %v2016
        %v2145 = vadd.f32 %v1373, %v2017
        %v2146 = vadd.f32 %v1374, %v2018
        %v2147 = vadd.f32 %v1375, %v2019
        %v2148 = vadd.f32 %v1376, %v2020
        %v2149 = vadd.f32 %v1377, %v2021
        %v2150 = vadd.f32 %v1378, %v2022
        %v2151 = vadd.f32 %v1379, %v2023
        %v2152 = vadd.f32 %v1380, %v2024
        %v2153 = vadd.f32 %v1381, %v2025
        %v2154 = vadd.f32 %v1382, %v2026
        %v2155 = vadd.f32 %v1383, %v2027
        %v2156 = vadd.f32 %v1384, %v2028
        %v2157 = vadd.f32 %v1385, %v2029
        %v2158 = vadd.f32 %v1386, %v2030
        %v2159 = vadd.f32 %v1387, %v2031
        %v2160 = vadd.f32 %v1388, %v2032
        %v2161 = vadd.f32 %v1389, %v2033
        %v2162 = vadd.f32 %v1390, %v2034
        %v2163 = vadd.f32 %v1391, %v2035
        %v2164 = vadd.f32 %v1392, %v2036
        %v2165 = vadd.f32 %v1393, %v2037
        %v2166 = vadd.f32 %v1394, %v2038
        %v2167 = vadd.f32 %v1395, %v2039
        %v2168 = vadd.f32 %v1396, %v2040
        %v2169 = vadd.f32 %v1397, %v2041
        %v2170 = vadd.f32 %v1398, %v2042
        %v2171 = vadd.f32 %v1399, %v2043
        %v2172 = vadd.f32 %v1400, %v2044
        %v2173 = vadd.f32 %v1401, %v2045
        %v2174 = vadd.f32 %v1402, %v2046
        %v2175 = vadd.f32 %v1403, %v2047
        %v2176 = vadd.f32 %v1404, %v2048
        %v2177 = vadd.f32 %v1405, %v2049
        %v2178 = vadd.f32 %v1406, %v2050
        %v2179 = vadd.f32 %v1407, %v2051
        %v2180 = vadd.f32 %v1408, %v2052
        %v2181 = vadd.f32 %v1409, %v2053
        %v2182 = vadd.f32 %v1410, %v2054
        %v2183 = vadd.f32 %v1411, %v2055
        %v2184 = vadd.f32 %v1412, %v2056
        %v2185 = vadd.f32 %v1413, %v2057
        %v2186 = vadd.f32 %v1414, %v2058
        %v2187 = vadd.f32 %v1415, %v2059
        %v2188 = vadd.f32 %v1416, %v2060
        %v2189 = vadd.f32 %v1417, %v2061
        %v2190 = vadd.f32 %v1418, %v2062
        %v2191 = vadd.f32 %v1419, %v2063
        %v2192 = vadd.f32 %v1420, %v2064
        %v2193 = vadd.f32 %v1421, %v2065
        %v2194 = vadd.f32 %v1422, %v2066
        %v2195 = vadd.f32 %v1423, %v2067
        %v2196 = vadd.f32 %v1424, %v2068
        %v2197 = vadd.f32 %v1425, %v2069
        %v2198 = vadd.f32 %v1426, %v2070
        %v2199 = vadd.f32 %v1427, %v2071
        %v2200 = vadd.f32 %v1428, %v2072
        %v2201 = vadd.f32 %v1429, %v2073
        %v2202 = vadd.f32 %v1430, %v2074
        %v2203 = vadd.f32 %v1431, %v2075
        %v2204 = vadd.f32 %v1432, %v2076
        %v2205 = vadd.f32 %v1433, %v2077
        %v2206 = vadd.f32 %v1434, %v2078
        %v2207 = vadd.f32 %v1435, %v2079
        %v2208 = vadd.f32 %v1436, %v2080
        %v2209 = vadd.f32 %v1437, %v2081
        %v2210 = vadd.f32 %v1438, %v2082
        %v2211 = vadd.f32 %v1439, %v2083
        %v2212 = vadd.f32 %v1440, %v2084
        %v2213 = vadd.f32 %v1441, %v2085
        %v2214 = vadd.f32 %v1442, %v2086
        %2215 = vset.pattern.permute.xlu0 2
        %2216 = vperm.xlu0 %2215, %v541
        %v2217 = vpop.permute.xlu0 %2216
        %2219 = vset.pattern.permute.xlu0 2
        %2220 = vperm.xlu0 %2219, %v542
        %v2221 = vpop.permute.xlu0 %2220
        %2223 = vset.pattern.permute.xlu0 2
        %2224 = vperm.xlu0 %2223, %v543
        %v2225 = vpop.permute.xlu0 %2224
        %2227 = vset.pattern.permute.xlu0 2
        %2228 = vperm.xlu0 %2227, %v544
        %v2229 = vpop.permute.xlu0 %2228
        %2231 = vset.pattern.permute.xlu0 2
        %2232 = vperm.xlu0 %2231, %v545
        %v2233 = vpop.permute.xlu0 %2232
        %2235 = vset.pattern.permute.xlu0 2
        %2236 = vperm.xlu0 %2235, %v546
        %v2237 = vpop.permute.xlu0 %2236
        %2239 = vset.pattern.permute.xlu0 2
        %2240 = vperm.xlu0 %2239, %v547
        %v2241 = vpop.permute.xlu0 %2240
        %2243 = vset.pattern.permute.xlu0 2
        %2244 = vperm.xlu0 %2243, %v548
        %v2245 = vpop.permute.xlu0 %2244
        %2247 = vset.pattern.permute.xlu0 2
        %2248 = vperm.xlu0 %2247, %v549
        %v2249 = vpop.permute.xlu0 %2248
        %2251 = vset.pattern.permute.xlu0 2
        %2252 = vperm.xlu0 %2251, %v550
        %v2253 = vpop.permute.xlu0 %2252
        %2255 = vset.pattern.permute.xlu0 2
        %2256 = vperm.xlu0 %2255, %v551
        %v2257 = vpop.permute.xlu0 %2256
        %2259 = vset.pattern.permute.xlu0 2
        %2260 = vperm.xlu0 %2259, %v552
        %v2261 = vpop.permute.xlu0 %2260
        %2263 = vset.pattern.permute.xlu0 2
        %2264 = vperm.xlu0 %2263, %v553
        %v2265 = vpop.permute.xlu0 %2264
        %2267 = vset.pattern.permute.xlu0 2
        %2268 = vperm.xlu0 %2267, %v554
        %v2269 = vpop.permute.xlu0 %2268
        %2271 = vset.pattern.permute.xlu0 2
        %2272 = vperm.xlu0 %2271, %v555
        %v2273 = vpop.permute.xlu0 %2272
        %2275 = vset.pattern.permute.xlu0 2
        %2276 = vperm.xlu0 %2275, %v556
        %v2277 = vpop.permute.xlu0 %2276
        %2279 = vset.pattern.permute.xlu0 2
        %2280 = vperm.xlu0 %2279, %v557
        %v2281 = vpop.permute.xlu0 %2280
        %2283 = vset.pattern.permute.xlu0 2
        %2284 = vperm.xlu0 %2283, %v558
        %v2285 = vpop.permute.xlu0 %2284
        %2287 = vset.pattern.permute.xlu0 2
        %2288 = vperm.xlu0 %2287, %v559
        %v2289 = vpop.permute.xlu0 %2288
        %2291 = vset.pattern.permute.xlu0 2
        %2292 = vperm.xlu0 %2291, %v560
        %v2293 = vpop.permute.xlu0 %2292
        %2295 = vset.pattern.permute.xlu0 2
        %2296 = vperm.xlu0 %2295, %v561
        %v2297 = vpop.permute.xlu0 %2296
        %2299 = vset.pattern.permute.xlu0 2
        %2300 = vperm.xlu0 %2299, %v562
        %v2301 = vpop.permute.xlu0 %2300
        %2303 = vset.pattern.permute.xlu0 2
        %2304 = vperm.xlu0 %2303, %v563
        %v2305 = vpop.permute.xlu0 %2304
        %2307 = vset.pattern.permute.xlu0 2
        %2308 = vperm.xlu0 %2307, %v564
        %v2309 = vpop.permute.xlu0 %2308
        %2311 = vset.pattern.permute.xlu0 2
        %2312 = vperm.xlu0 %2311, %v565
        %v2313 = vpop.permute.xlu0 %2312
        %2315 = vset.pattern.permute.xlu0 2
        %2316 = vperm.xlu0 %2315, %v566
        %v2317 = vpop.permute.xlu0 %2316
        %2319 = vset.pattern.permute.xlu0 2
        %2320 = vperm.xlu0 %2319, %v567
        %v2321 = vpop.permute.xlu0 %2320
        %2323 = vset.pattern.permute.xlu0 2
        %2324 = vperm.xlu0 %2323, %v568
        %v2325 = vpop.permute.xlu0 %2324
        %2327 = vset.pattern.permute.xlu0 2
        %2328 = vperm.xlu0 %2327, %v569
        %v2329 = vpop.permute.xlu0 %2328
        %2331 = vset.pattern.permute.xlu0 2
        %2332 = vperm.xlu0 %2331, %v570
        %v2333 = vpop.permute.xlu0 %2332
        %2335 = vset.pattern.permute.xlu0 2
        %2336 = vperm.xlu0 %2335, %v571
        %v2337 = vpop.permute.xlu0 %2336
        %2339 = vset.pattern.permute.xlu0 2
        %2340 = vperm.xlu0 %2339, %v572
        %v2341 = vpop.permute.xlu0 %2340
        %2343 = vset.pattern.permute.xlu0 2
        %2344 = vperm.xlu0 %2343, %v573
        %v2345 = vpop.permute.xlu0 %2344
        %2347 = vset.pattern.permute.xlu0 2
        %2348 = vperm.xlu0 %2347, %v574
        %v2349 = vpop.permute.xlu0 %2348
        %2351 = vset.pattern.permute.xlu0 2
        %2352 = vperm.xlu0 %2351, %v575
        %v2353 = vpop.permute.xlu0 %2352
        %2355 = vset.pattern.permute.xlu0 2
        %2356 = vperm.xlu0 %2355, %v576
        %v2357 = vpop.permute.xlu0 %2356
        %2359 = vset.pattern.permute.xlu0 2
        %2360 = vperm.xlu0 %2359, %v577
        %v2361 = vpop.permute.xlu0 %2360
        %2363 = vset.pattern.permute.xlu0 2
        %2364 = vperm.xlu0 %2363, %v578
        %v2365 = vpop.permute.xlu0 %2364
        %2367 = vset.pattern.permute.xlu0 2
        %2368 = vperm.xlu0 %2367, %v579
        %v2369 = vpop.permute.xlu0 %2368
        %2371 = vset.pattern.permute.xlu0 2
        %2372 = vperm.xlu0 %2371, %v580
        %v2373 = vpop.permute.xlu0 %2372
        %2375 = vset.pattern.permute.xlu0 2
        %2376 = vperm.xlu0 %2375, %v581
        %v2377 = vpop.permute.xlu0 %2376
        %2379 = vset.pattern.permute.xlu0 2
        %2380 = vperm.xlu0 %2379, %v582
        %v2381 = vpop.permute.xlu0 %2380
        %2383 = vset.pattern.permute.xlu0 2
        %2384 = vperm.xlu0 %2383, %v583
        %v2385 = vpop.permute.xlu0 %2384
        %2387 = vset.pattern.permute.xlu0 2
        %2388 = vperm.xlu0 %2387, %v584
        %v2389 = vpop.permute.xlu0 %2388
        %2391 = vset.pattern.permute.xlu0 2
        %2392 = vperm.xlu0 %2391, %v585
        %v2393 = vpop.permute.xlu0 %2392
        %2395 = vset.pattern.permute.xlu0 2
        %2396 = vperm.xlu0 %2395, %v586
        %v2397 = vpop.permute.xlu0 %2396
        %2399 = vset.pattern.permute.xlu0 2
        %2400 = vperm.xlu0 %2399, %v587
        %v2401 = vpop.permute.xlu0 %2400
        %2403 = vset.pattern.permute.xlu0 2
        %2404 = vperm.xlu0 %2403, %v588
        %v2405 = vpop.permute.xlu0 %2404
        %2407 = vset.pattern.permute.xlu0 2
        %2408 = vperm.xlu0 %2407, %v589
        %v2409 = vpop.permute.xlu0 %2408
        %2411 = vset.pattern.permute.xlu0 2
        %2412 = vperm.xlu0 %2411, %v590
        %v2413 = vpop.permute.xlu0 %2412
        %2415 = vset.pattern.permute.xlu0 2
        %2416 = vperm.xlu0 %2415, %v591
        %v2417 = vpop.permute.xlu0 %2416
        %2419 = vset.pattern.permute.xlu0 2
        %2420 = vperm.xlu0 %2419, %v592
        %v2421 = vpop.permute.xlu0 %2420
        %2423 = vset.pattern.permute.xlu0 2
        %2424 = vperm.xlu0 %2423, %v593
        %v2425 = vpop.permute.xlu0 %2424
        %2427 = vset.pattern.permute.xlu0 2
        %2428 = vperm.xlu0 %2427, %v594
        %v2429 = vpop.permute.xlu0 %2428
        %2431 = vset.pattern.permute.xlu0 2
        %2432 = vperm.xlu0 %2431, %v595
        %v2433 = vpop.permute.xlu0 %2432
        %2435 = vset.pattern.permute.xlu0 2
        %2436 = vperm.xlu0 %2435, %v596
        %v2437 = vpop.permute.xlu0 %2436
        %2439 = vset.pattern.permute.xlu0 2
        %2440 = vperm.xlu0 %2439, %v597
        %v2441 = vpop.permute.xlu0 %2440
        %2443 = vset.pattern.permute.xlu0 2
        %2444 = vperm.xlu0 %2443, %v598
        %v2445 = vpop.permute.xlu0 %2444
        %2447 = vset.pattern.permute.xlu0 2
        %2448 = vperm.xlu0 %2447, %v599
        %v2449 = vpop.permute.xlu0 %2448
        %2451 = vset.pattern.permute.xlu0 2
        %2452 = vperm.xlu0 %2451, %v600
        %v2453 = vpop.permute.xlu0 %2452
        %2455 = vset.pattern.permute.xlu0 2
        %2456 = vperm.xlu0 %2455, %v601
        %v2457 = vpop.permute.xlu0 %2456
        %2459 = vset.pattern.permute.xlu0 2
        %2460 = vperm.xlu0 %2459, %v602
        %v2461 = vpop.permute.xlu0 %2460
        %2463 = vset.pattern.permute.xlu0 2
        %2464 = vperm.xlu0 %2463, %v603
        %v2465 = vpop.permute.xlu0 %2464
        %2467 = vset.pattern.permute.xlu0 2
        %2468 = vperm.xlu0 %2467, %v604
        %v2469 = vpop.permute.xlu0 %2468
        %2471 = vset.pattern.permute.xlu0 2
        %2472 = vperm.xlu0 %2471, %v605
        %v2473 = vpop.permute.xlu0 %2472
        %2475 = vset.pattern.permute.xlu0 2
        %2476 = vperm.xlu0 %2475, %v606
        %v2477 = vpop.permute.xlu0 %2476
        %2479 = vset.pattern.permute.xlu0 2
        %2480 = vperm.xlu0 %2479, %v607
        %v2481 = vpop.permute.xlu0 %2480
        %2483 = vset.pattern.permute.xlu0 2
        %2484 = vperm.xlu0 %2483, %v608
        %v2485 = vpop.permute.xlu0 %2484
        %2487 = vset.pattern.permute.xlu0 2
        %2488 = vperm.xlu0 %2487, %v609
        %v2489 = vpop.permute.xlu0 %2488
        %2491 = vset.pattern.permute.xlu0 2
        %2492 = vperm.xlu0 %2491, %v610
        %v2493 = vpop.permute.xlu0 %2492
        %2495 = vset.pattern.permute.xlu0 2
        %2496 = vperm.xlu0 %2495, %v611
        %v2497 = vpop.permute.xlu0 %2496
        %2499 = vset.pattern.permute.xlu0 2
        %2500 = vperm.xlu0 %2499, %v612
        %v2501 = vpop.permute.xlu0 %2500
        %2503 = vset.pattern.permute.xlu0 2
        %2504 = vperm.xlu0 %2503, %v613
        %v2505 = vpop.permute.xlu0 %2504
        %2507 = vset.pattern.permute.xlu0 2
        %2508 = vperm.xlu0 %2507, %v614
        %v2509 = vpop.permute.xlu0 %2508
        %2511 = vset.pattern.permute.xlu0 2
        %2512 = vperm.xlu0 %2511, %v615
        %v2513 = vpop.permute.xlu0 %2512
        %2515 = vset.pattern.permute.xlu0 2
        %2516 = vperm.xlu0 %2515, %v616
        %v2517 = vpop.permute.xlu0 %2516
        %2519 = vset.pattern.permute.xlu0 2
        %2520 = vperm.xlu0 %2519, %v617
        %v2521 = vpop.permute.xlu0 %2520
        %2523 = vset.pattern.permute.xlu0 2
        %2524 = vperm.xlu0 %2523, %v618
        %v2525 = vpop.permute.xlu0 %2524
        %2527 = vset.pattern.permute.xlu0 2
        %2528 = vperm.xlu0 %2527, %v619
        %v2529 = vpop.permute.xlu0 %2528
        %2531 = vset.pattern.permute.xlu0 2
        %2532 = vperm.xlu0 %2531, %v620
        %v2533 = vpop.permute.xlu0 %2532
        %2535 = vset.pattern.permute.xlu0 2
        %2536 = vperm.xlu0 %2535, %v621
        %v2537 = vpop.permute.xlu0 %2536
        %2539 = vset.pattern.permute.xlu0 2
        %2540 = vperm.xlu0 %2539, %v622
        %v2541 = vpop.permute.xlu0 %2540
        %2543 = vset.pattern.permute.xlu0 2
        %2544 = vperm.xlu0 %2543, %v623
        %v2545 = vpop.permute.xlu0 %2544
        %2547 = vset.pattern.permute.xlu0 2
        %2548 = vperm.xlu0 %2547, %v624
        %v2549 = vpop.permute.xlu0 %2548
        %2551 = vset.pattern.permute.xlu0 2
        %2552 = vperm.xlu0 %2551, %v625
        %v2553 = vpop.permute.xlu0 %2552
        %2555 = vset.pattern.permute.xlu0 2
        %2556 = vperm.xlu0 %2555, %v626
        %v2557 = vpop.permute.xlu0 %2556
        %2559 = vset.pattern.permute.xlu0 2
        %2560 = vperm.xlu0 %2559, %v627
        %v2561 = vpop.permute.xlu0 %2560
        %2563 = vset.pattern.permute.xlu0 2
        %2564 = vperm.xlu0 %2563, %v628
        %v2565 = vpop.permute.xlu0 %2564
        %2567 = vset.pattern.permute.xlu0 2
        %2568 = vperm.xlu0 %2567, %v629
        %v2569 = vpop.permute.xlu0 %2568
        %2571 = vset.pattern.permute.xlu0 2
        %2572 = vperm.xlu0 %2571, %v630
        %v2573 = vpop.permute.xlu0 %2572
        %2575 = vset.pattern.permute.xlu0 2
        %2576 = vperm.xlu0 %2575, %v631
        %v2577 = vpop.permute.xlu0 %2576
        %2579 = vset.pattern.permute.xlu0 2
        %2580 = vperm.xlu0 %2579, %v632
        %v2581 = vpop.permute.xlu0 %2580
        %2583 = vset.pattern.permute.xlu0 2
        %2584 = vperm.xlu0 %2583, %v633
        %v2585 = vpop.permute.xlu0 %2584
        %2587 = vset.pattern.permute.xlu0 2
        %2588 = vperm.xlu0 %2587, %v634
        %v2589 = vpop.permute.xlu0 %2588
        %2591 = vset.pattern.permute.xlu0 2
        %2592 = vperm.xlu0 %2591, %v635
        %v2593 = vpop.permute.xlu0 %2592
        %2595 = vset.pattern.permute.xlu0 2
        %2596 = vperm.xlu0 %2595, %v636
        %v2597 = vpop.permute.xlu0 %2596
        %2599 = vset.pattern.permute.xlu0 2
        %2600 = vperm.xlu0 %2599, %v637
        %v2601 = vpop.permute.xlu0 %2600
        %2603 = vset.pattern.permute.xlu0 2
        %2604 = vperm.xlu0 %2603, %v638
        %v2605 = vpop.permute.xlu0 %2604
        %2607 = vset.pattern.permute.xlu0 2
        %2608 = vperm.xlu0 %2607, %v639
        %v2609 = vpop.permute.xlu0 %2608
        %2611 = vset.pattern.permute.xlu0 2
        %2612 = vperm.xlu0 %2611, %v640
        %v2613 = vpop.permute.xlu0 %2612
        %2615 = vset.pattern.permute.xlu0 2
        %2616 = vperm.xlu0 %2615, %v641
        %v2617 = vpop.permute.xlu0 %2616
        %2619 = vset.pattern.permute.xlu0 2
        %2620 = vperm.xlu0 %2619, %v642
        %v2621 = vpop.permute.xlu0 %2620
        %2623 = vset.pattern.permute.xlu0 2
        %2624 = vperm.xlu0 %2623, %v643
        %v2625 = vpop.permute.xlu0 %2624
        %2627 = vset.pattern.permute.xlu0 2
        %2628 = vperm.xlu0 %2627, %v644
        %v2629 = vpop.permute.xlu0 %2628
        %2631 = vset.pattern.permute.xlu0 2
        %2632 = vperm.xlu0 %2631, %v645
        %v2633 = vpop.permute.xlu0 %2632
        %2635 = vset.pattern.permute.xlu0 2
        %2636 = vperm.xlu0 %2635, %v646
        %v2637 = vpop.permute.xlu0 %2636
        %2639 = vset.pattern.permute.xlu0 2
        %2640 = vperm.xlu0 %2639, %v647
        %v2641 = vpop.permute.xlu0 %2640
        %2643 = vset.pattern.permute.xlu0 2
        %2644 = vperm.xlu0 %2643, %v648
        %v2645 = vpop.permute.xlu0 %2644
        %2647 = vset.pattern.permute.xlu0 2
        %2648 = vperm.xlu0 %2647, %v649
        %v2649 = vpop.permute.xlu0 %2648
        %2651 = vset.pattern.permute.xlu0 2
        %2652 = vperm.xlu0 %2651, %v650
        %v2653 = vpop.permute.xlu0 %2652
        %2655 = vset.pattern.permute.xlu0 2
        %2656 = vperm.xlu0 %2655, %v651
        %v2657 = vpop.permute.xlu0 %2656
        %2659 = vset.pattern.permute.xlu0 2
        %2660 = vperm.xlu0 %2659, %v652
        %v2661 = vpop.permute.xlu0 %2660
        %2663 = vset.pattern.permute.xlu0 2
        %2664 = vperm.xlu0 %2663, %v653
        %v2665 = vpop.permute.xlu0 %2664
        %2667 = vset.pattern.permute.xlu0 2
        %2668 = vperm.xlu0 %2667, %v654
        %v2669 = vpop.permute.xlu0 %2668
        %2671 = vset.pattern.permute.xlu0 2
        %2672 = vperm.xlu0 %2671, %v655
        %v2673 = vpop.permute.xlu0 %2672
        %2675 = vset.pattern.permute.xlu0 2
        %2676 = vperm.xlu0 %2675, %v656
        %v2677 = vpop.permute.xlu0 %2676
        %2679 = vset.pattern.permute.xlu0 2
        %2680 = vperm.xlu0 %2679, %v657
        %v2681 = vpop.permute.xlu0 %2680
        %2683 = vset.pattern.permute.xlu0 2
        %2684 = vperm.xlu0 %2683, %v658
        %v2685 = vpop.permute.xlu0 %2684
        %2687 = vset.pattern.permute.xlu0 2
        %2688 = vperm.xlu0 %2687, %v659
        %v2689 = vpop.permute.xlu0 %2688
        %2691 = vset.pattern.permute.xlu0 2
        %2692 = vperm.xlu0 %2691, %v660
        %v2693 = vpop.permute.xlu0 %2692
        %2695 = vset.pattern.permute.xlu0 2
        %2696 = vperm.xlu0 %2695, %v661
        %v2697 = vpop.permute.xlu0 %2696
        %2699 = vset.pattern.permute.xlu0 2
        %2700 = vperm.xlu0 %2699, %v662
        %v2701 = vpop.permute.xlu0 %2700
        %2703 = vset.pattern.permute.xlu0 2
        %2704 = vperm.xlu0 %2703, %v663
        %v2705 = vpop.permute.xlu0 %2704
        %2707 = vset.pattern.permute.xlu0 2
        %2708 = vperm.xlu0 %2707, %v664
        %v2709 = vpop.permute.xlu0 %2708
        %2711 = vset.pattern.permute.xlu0 2
        %2712 = vperm.xlu0 %2711, %v665
        %v2713 = vpop.permute.xlu0 %2712
        %2715 = vset.pattern.permute.xlu0 2
        %2716 = vperm.xlu0 %2715, %v666
        %v2717 = vpop.permute.xlu0 %2716
        %2719 = vset.pattern.permute.xlu0 2
        %2720 = vperm.xlu0 %2719, %v667
        %v2721 = vpop.permute.xlu0 %2720
        %2723 = vset.pattern.permute.xlu0 2
        %2724 = vperm.xlu0 %2723, %v668
        %v2725 = vpop.permute.xlu0 %2724
        %v2727 = vlaneseq
        %v2728 = vshrl.u32 %v2727, 7
        %v2729 = vsub.s32 2, %v2728
        %v2730 = vrot.slane %v670, %v2729
        %v2731 = vmul.f32 %v2217, %v2730
        %v2732 = vmul.f32 %v2221, %v2730
        %v2733 = vmul.f32 %v2225, %v2730
        %v2734 = vmul.f32 %v2229, %v2730
        %v2735 = vmul.f32 %v2233, %v2730
        %v2736 = vmul.f32 %v2237, %v2730
        %v2737 = vmul.f32 %v2241, %v2730
        %v2738 = vmul.f32 %v2245, %v2730
        %v2739 = vmul.f32 %v2249, %v2730
        %v2740 = vmul.f32 %v2253, %v2730
        %v2741 = vmul.f32 %v2257, %v2730
        %v2742 = vmul.f32 %v2261, %v2730
        %v2743 = vmul.f32 %v2265, %v2730
        %v2744 = vmul.f32 %v2269, %v2730
        %v2745 = vmul.f32 %v2273, %v2730
        %v2746 = vmul.f32 %v2277, %v2730
        %v2747 = vmul.f32 %v2281, %v2730
        %v2748 = vmul.f32 %v2285, %v2730
        %v2749 = vmul.f32 %v2289, %v2730
        %v2750 = vmul.f32 %v2293, %v2730
        %v2751 = vmul.f32 %v2297, %v2730
        %v2752 = vmul.f32 %v2301, %v2730
        %v2753 = vmul.f32 %v2305, %v2730
        %v2754 = vmul.f32 %v2309, %v2730
        %v2755 = vmul.f32 %v2313, %v2730
        %v2756 = vmul.f32 %v2317, %v2730
        %v2757 = vmul.f32 %v2321, %v2730
        %v2758 = vmul.f32 %v2325, %v2730
        %v2759 = vmul.f32 %v2329, %v2730
        %v2760 = vmul.f32 %v2333, %v2730
        %v2761 = vmul.f32 %v2337, %v2730
        %v2762 = vmul.f32 %v2341, %v2730
        %v2763 = vmul.f32 %v2345, %v2730
        %v2764 = vmul.f32 %v2349, %v2730
        %v2765 = vmul.f32 %v2353, %v2730
        %v2766 = vmul.f32 %v2357, %v2730
        %v2767 = vmul.f32 %v2361, %v2730
        %v2768 = vmul.f32 %v2365, %v2730
        %v2769 = vmul.f32 %v2369, %v2730
        %v2770 = vmul.f32 %v2373, %v2730
        %v2771 = vmul.f32 %v2377, %v2730
        %v2772 = vmul.f32 %v2381, %v2730
        %v2773 = vmul.f32 %v2385, %v2730
        %v2774 = vmul.f32 %v2389, %v2730
        %v2775 = vmul.f32 %v2393, %v2730
        %v2776 = vmul.f32 %v2397, %v2730
        %v2777 = vmul.f32 %v2401, %v2730
        %v2778 = vmul.f32 %v2405, %v2730
        %v2779 = vmul.f32 %v2409, %v2730
        %v2780 = vmul.f32 %v2413, %v2730
        %v2781 = vmul.f32 %v2417, %v2730
        %v2782 = vmul.f32 %v2421, %v2730
        %v2783 = vmul.f32 %v2425, %v2730
        %v2784 = vmul.f32 %v2429, %v2730
        %v2785 = vmul.f32 %v2433, %v2730
        %v2786 = vmul.f32 %v2437, %v2730
        %v2787 = vmul.f32 %v2441, %v2730
        %v2788 = vmul.f32 %v2445, %v2730
        %v2789 = vmul.f32 %v2449, %v2730
        %v2790 = vmul.f32 %v2453, %v2730
        %v2791 = vmul.f32 %v2457, %v2730
        %v2792 = vmul.f32 %v2461, %v2730
        %v2793 = vmul.f32 %v2465, %v2730
        %v2794 = vmul.f32 %v2469, %v2730
        %v2795 = vmul.f32 %v2473, %v2730
        %v2796 = vmul.f32 %v2477, %v2730
        %v2797 = vmul.f32 %v2481, %v2730
        %v2798 = vmul.f32 %v2485, %v2730
        %v2799 = vmul.f32 %v2489, %v2730
        %v2800 = vmul.f32 %v2493, %v2730
        %v2801 = vmul.f32 %v2497, %v2730
        %v2802 = vmul.f32 %v2501, %v2730
        %v2803 = vmul.f32 %v2505, %v2730
        %v2804 = vmul.f32 %v2509, %v2730
        %v2805 = vmul.f32 %v2513, %v2730
        %v2806 = vmul.f32 %v2517, %v2730
        %v2807 = vmul.f32 %v2521, %v2730
        %v2808 = vmul.f32 %v2525, %v2730
        %v2809 = vmul.f32 %v2529, %v2730
        %v2810 = vmul.f32 %v2533, %v2730
        %v2811 = vmul.f32 %v2537, %v2730
        %v2812 = vmul.f32 %v2541, %v2730
        %v2813 = vmul.f32 %v2545, %v2730
        %v2814 = vmul.f32 %v2549, %v2730
        %v2815 = vmul.f32 %v2553, %v2730
        %v2816 = vmul.f32 %v2557, %v2730
        %v2817 = vmul.f32 %v2561, %v2730
        %v2818 = vmul.f32 %v2565, %v2730
        %v2819 = vmul.f32 %v2569, %v2730
        %v2820 = vmul.f32 %v2573, %v2730
        %v2821 = vmul.f32 %v2577, %v2730
        %v2822 = vmul.f32 %v2581, %v2730
        %v2823 = vmul.f32 %v2585, %v2730
        %v2824 = vmul.f32 %v2589, %v2730
        %v2825 = vmul.f32 %v2593, %v2730
        %v2826 = vmul.f32 %v2597, %v2730
        %v2827 = vmul.f32 %v2601, %v2730
        %v2828 = vmul.f32 %v2605, %v2730
        %v2829 = vmul.f32 %v2609, %v2730
        %v2830 = vmul.f32 %v2613, %v2730
        %v2831 = vmul.f32 %v2617, %v2730
        %v2832 = vmul.f32 %v2621, %v2730
        %v2833 = vmul.f32 %v2625, %v2730
        %v2834 = vmul.f32 %v2629, %v2730
        %v2835 = vmul.f32 %v2633, %v2730
        %v2836 = vmul.f32 %v2637, %v2730
        %v2837 = vmul.f32 %v2641, %v2730
        %v2838 = vmul.f32 %v2645, %v2730
        %v2839 = vmul.f32 %v2649, %v2730
        %v2840 = vmul.f32 %v2653, %v2730
        %v2841 = vmul.f32 %v2657, %v2730
        %v2842 = vmul.f32 %v2661, %v2730
        %v2843 = vmul.f32 %v2665, %v2730
        %v2844 = vmul.f32 %v2669, %v2730
        %v2845 = vmul.f32 %v2673, %v2730
        %v2846 = vmul.f32 %v2677, %v2730
        %v2847 = vmul.f32 %v2681, %v2730
        %v2848 = vmul.f32 %v2685, %v2730
        %v2849 = vmul.f32 %v2689, %v2730
        %v2850 = vmul.f32 %v2693, %v2730
        %v2851 = vmul.f32 %v2697, %v2730
        %v2852 = vmul.f32 %v2701, %v2730
        %v2853 = vmul.f32 %v2705, %v2730
        %v2854 = vmul.f32 %v2709, %v2730
        %v2855 = vmul.f32 %v2713, %v2730
        %v2856 = vmul.f32 %v2717, %v2730
        %v2857 = vmul.f32 %v2721, %v2730
        %v2858 = vmul.f32 %v2725, %v2730
        %v2859 = vadd.f32 %v2087, %v2731
        %v2860 = vadd.f32 %v2088, %v2732
        %v2861 = vadd.f32 %v2089, %v2733
        %v2862 = vadd.f32 %v2090, %v2734
        %v2863 = vadd.f32 %v2091, %v2735
        %v2864 = vadd.f32 %v2092, %v2736
        %v2865 = vadd.f32 %v2093, %v2737
        %v2866 = vadd.f32 %v2094, %v2738
        %v2867 = vadd.f32 %v2095, %v2739
        %v2868 = vadd.f32 %v2096, %v2740
        %v2869 = vadd.f32 %v2097, %v2741
        %v2870 = vadd.f32 %v2098, %v2742
        %v2871 = vadd.f32 %v2099, %v2743
        %v2872 = vadd.f32 %v2100, %v2744
        %v2873 = vadd.f32 %v2101, %v2745
        %v2874 = vadd.f32 %v2102, %v2746
        %v2875 = vadd.f32 %v2103, %v2747
        %v2876 = vadd.f32 %v2104, %v2748
        %v2877 = vadd.f32 %v2105, %v2749
        %v2878 = vadd.f32 %v2106, %v2750
        %v2879 = vadd.f32 %v2107, %v2751
        %v2880 = vadd.f32 %v2108, %v2752
        %v2881 = vadd.f32 %v2109, %v2753
        %v2882 = vadd.f32 %v2110, %v2754
        %v2883 = vadd.f32 %v2111, %v2755
        %v2884 = vadd.f32 %v2112, %v2756
        %v2885 = vadd.f32 %v2113, %v2757
        %v2886 = vadd.f32 %v2114, %v2758
        %v2887 = vadd.f32 %v2115, %v2759
        %v2888 = vadd.f32 %v2116, %v2760
        %v2889 = vadd.f32 %v2117, %v2761
        %v2890 = vadd.f32 %v2118, %v2762
        %v2891 = vadd.f32 %v2119, %v2763
        %v2892 = vadd.f32 %v2120, %v2764
        %v2893 = vadd.f32 %v2121, %v2765
        %v2894 = vadd.f32 %v2122, %v2766
        %v2895 = vadd.f32 %v2123, %v2767
        %v2896 = vadd.f32 %v2124, %v2768
        %v2897 = vadd.f32 %v2125, %v2769
        %v2898 = vadd.f32 %v2126, %v2770
        %v2899 = vadd.f32 %v2127, %v2771
        %v2900 = vadd.f32 %v2128, %v2772
        %v2901 = vadd.f32 %v2129, %v2773
        %v2902 = vadd.f32 %v2130, %v2774
        %v2903 = vadd.f32 %v2131, %v2775
        %v2904 = vadd.f32 %v2132, %v2776
        %v2905 = vadd.f32 %v2133, %v2777
        %v2906 = vadd.f32 %v2134, %v2778
        %v2907 = vadd.f32 %v2135, %v2779
        %v2908 = vadd.f32 %v2136, %v2780
        %v2909 = vadd.f32 %v2137, %v2781
        %v2910 = vadd.f32 %v2138, %v2782
        %v2911 = vadd.f32 %v2139, %v2783
        %v2912 = vadd.f32 %v2140, %v2784
        %v2913 = vadd.f32 %v2141, %v2785
        %v2914 = vadd.f32 %v2142, %v2786
        %v2915 = vadd.f32 %v2143, %v2787
        %v2916 = vadd.f32 %v2144, %v2788
        %v2917 = vadd.f32 %v2145, %v2789
        %v2918 = vadd.f32 %v2146, %v2790
        %v2919 = vadd.f32 %v2147, %v2791
        %v2920 = vadd.f32 %v2148, %v2792
        %v2921 = vadd.f32 %v2149, %v2793
        %v2922 = vadd.f32 %v2150, %v2794
        %v2923 = vadd.f32 %v2151, %v2795
        %v2924 = vadd.f32 %v2152, %v2796
        %v2925 = vadd.f32 %v2153, %v2797
        %v2926 = vadd.f32 %v2154, %v2798
        %v2927 = vadd.f32 %v2155, %v2799
        %v2928 = vadd.f32 %v2156, %v2800
        %v2929 = vadd.f32 %v2157, %v2801
        %v2930 = vadd.f32 %v2158, %v2802
        %v2931 = vadd.f32 %v2159, %v2803
        %v2932 = vadd.f32 %v2160, %v2804
        %v2933 = vadd.f32 %v2161, %v2805
        %v2934 = vadd.f32 %v2162, %v2806
        %v2935 = vadd.f32 %v2163, %v2807
        %v2936 = vadd.f32 %v2164, %v2808
        %v2937 = vadd.f32 %v2165, %v2809
        %v2938 = vadd.f32 %v2166, %v2810
        %v2939 = vadd.f32 %v2167, %v2811
        %v2940 = vadd.f32 %v2168, %v2812
        %v2941 = vadd.f32 %v2169, %v2813
        %v2942 = vadd.f32 %v2170, %v2814
        %v2943 = vadd.f32 %v2171, %v2815
        %v2944 = vadd.f32 %v2172, %v2816
        %v2945 = vadd.f32 %v2173, %v2817
        %v2946 = vadd.f32 %v2174, %v2818
        %v2947 = vadd.f32 %v2175, %v2819
        %v2948 = vadd.f32 %v2176, %v2820
        %v2949 = vadd.f32 %v2177, %v2821
        %v2950 = vadd.f32 %v2178, %v2822
        %v2951 = vadd.f32 %v2179, %v2823
        %v2952 = vadd.f32 %v2180, %v2824
        %v2953 = vadd.f32 %v2181, %v2825
        %v2954 = vadd.f32 %v2182, %v2826
        %v2955 = vadd.f32 %v2183, %v2827
        %v2956 = vadd.f32 %v2184, %v2828
        %v2957 = vadd.f32 %v2185, %v2829
        %v2958 = vadd.f32 %v2186, %v2830
        %v2959 = vadd.f32 %v2187, %v2831
        %v2960 = vadd.f32 %v2188, %v2832
        %v2961 = vadd.f32 %v2189, %v2833
        %v2962 = vadd.f32 %v2190, %v2834
        %v2963 = vadd.f32 %v2191, %v2835
        %v2964 = vadd.f32 %v2192, %v2836
        %v2965 = vadd.f32 %v2193, %v2837
        %v2966 = vadd.f32 %v2194, %v2838
        %v2967 = vadd.f32 %v2195, %v2839
        %v2968 = vadd.f32 %v2196, %v2840
        %v2969 = vadd.f32 %v2197, %v2841
        %v2970 = vadd.f32 %v2198, %v2842
        %v2971 = vadd.f32 %v2199, %v2843
        %v2972 = vadd.f32 %v2200, %v2844
        %v2973 = vadd.f32 %v2201, %v2845
        %v2974 = vadd.f32 %v2202, %v2846
        %v2975 = vadd.f32 %v2203, %v2847
        %v2976 = vadd.f32 %v2204, %v2848
        %v2977 = vadd.f32 %v2205, %v2849
        %v2978 = vadd.f32 %v2206, %v2850
        %v2979 = vadd.f32 %v2207, %v2851
        %v2980 = vadd.f32 %v2208, %v2852
        %v2981 = vadd.f32 %v2209, %v2853
        %v2982 = vadd.f32 %v2210, %v2854
        %v2983 = vadd.f32 %v2211, %v2855
        %v2984 = vadd.f32 %v2212, %v2856
        %v2985 = vadd.f32 %v2213, %v2857
        %v2986 = vadd.f32 %v2214, %v2858
        %2987 = vset.pattern.permute.xlu0 3
        %2988 = vperm.xlu0 %2987, %v541
        %v2989 = vpop.permute.xlu0 %2988
        %2991 = vset.pattern.permute.xlu0 3
        %2992 = vperm.xlu0 %2991, %v542
        %v2993 = vpop.permute.xlu0 %2992
        %2995 = vset.pattern.permute.xlu0 3
        %2996 = vperm.xlu0 %2995, %v543
        %v2997 = vpop.permute.xlu0 %2996
        %2999 = vset.pattern.permute.xlu0 3
        %3000 = vperm.xlu0 %2999, %v544
        %v3001 = vpop.permute.xlu0 %3000
        %3003 = vset.pattern.permute.xlu0 3
        %3004 = vperm.xlu0 %3003, %v545
        %v3005 = vpop.permute.xlu0 %3004
        %3007 = vset.pattern.permute.xlu0 3
        %3008 = vperm.xlu0 %3007, %v546
        %v3009 = vpop.permute.xlu0 %3008
        %3011 = vset.pattern.permute.xlu0 3
        %3012 = vperm.xlu0 %3011, %v547
        %v3013 = vpop.permute.xlu0 %3012
        %3015 = vset.pattern.permute.xlu0 3
        %3016 = vperm.xlu0 %3015, %v548
        %v3017 = vpop.permute.xlu0 %3016
        %3019 = vset.pattern.permute.xlu0 3
        %3020 = vperm.xlu0 %3019, %v549
        %v3021 = vpop.permute.xlu0 %3020
        %3023 = vset.pattern.permute.xlu0 3
        %3024 = vperm.xlu0 %3023, %v550
        %v3025 = vpop.permute.xlu0 %3024
        %3027 = vset.pattern.permute.xlu0 3
        %3028 = vperm.xlu0 %3027, %v551
        %v3029 = vpop.permute.xlu0 %3028
        %3031 = vset.pattern.permute.xlu0 3
        %3032 = vperm.xlu0 %3031, %v552
        %v3033 = vpop.permute.xlu0 %3032
        %3035 = vset.pattern.permute.xlu0 3
        %3036 = vperm.xlu0 %3035, %v553
        %v3037 = vpop.permute.xlu0 %3036
        %3039 = vset.pattern.permute.xlu0 3
        %3040 = vperm.xlu0 %3039, %v554
        %v3041 = vpop.permute.xlu0 %3040
        %3043 = vset.pattern.permute.xlu0 3
        %3044 = vperm.xlu0 %3043, %v555
        %v3045 = vpop.permute.xlu0 %3044
        %3047 = vset.pattern.permute.xlu0 3
        %3048 = vperm.xlu0 %3047, %v556
        %v3049 = vpop.permute.xlu0 %3048
        %3051 = vset.pattern.permute.xlu0 3
        %3052 = vperm.xlu0 %3051, %v557
        %v3053 = vpop.permute.xlu0 %3052
        %3055 = vset.pattern.permute.xlu0 3
        %3056 = vperm.xlu0 %3055, %v558
        %v3057 = vpop.permute.xlu0 %3056
        %3059 = vset.pattern.permute.xlu0 3
        %3060 = vperm.xlu0 %3059, %v559
        %v3061 = vpop.permute.xlu0 %3060
        %3063 = vset.pattern.permute.xlu0 3
        %3064 = vperm.xlu0 %3063, %v560
        %v3065 = vpop.permute.xlu0 %3064
        %3067 = vset.pattern.permute.xlu0 3
        %3068 = vperm.xlu0 %3067, %v561
        %v3069 = vpop.permute.xlu0 %3068
        %3071 = vset.pattern.permute.xlu0 3
        %3072 = vperm.xlu0 %3071, %v562
        %v3073 = vpop.permute.xlu0 %3072
        %3075 = vset.pattern.permute.xlu0 3
        %3076 = vperm.xlu0 %3075, %v563
        %v3077 = vpop.permute.xlu0 %3076
        %3079 = vset.pattern.permute.xlu0 3
        %3080 = vperm.xlu0 %3079, %v564
        %v3081 = vpop.permute.xlu0 %3080
        %3083 = vset.pattern.permute.xlu0 3
        %3084 = vperm.xlu0 %3083, %v565
        %v3085 = vpop.permute.xlu0 %3084
        %3087 = vset.pattern.permute.xlu0 3
        %3088 = vperm.xlu0 %3087, %v566
        %v3089 = vpop.permute.xlu0 %3088
        %3091 = vset.pattern.permute.xlu0 3
        %3092 = vperm.xlu0 %3091, %v567
        %v3093 = vpop.permute.xlu0 %3092
        %3095 = vset.pattern.permute.xlu0 3
        %3096 = vperm.xlu0 %3095, %v568
        %v3097 = vpop.permute.xlu0 %3096
        %3099 = vset.pattern.permute.xlu0 3
        %3100 = vperm.xlu0 %3099, %v569
        %v3101 = vpop.permute.xlu0 %3100
        %3103 = vset.pattern.permute.xlu0 3
        %3104 = vperm.xlu0 %3103, %v570
        %v3105 = vpop.permute.xlu0 %3104
        %3107 = vset.pattern.permute.xlu0 3
        %3108 = vperm.xlu0 %3107, %v571
        %v3109 = vpop.permute.xlu0 %3108
        %3111 = vset.pattern.permute.xlu0 3
        %3112 = vperm.xlu0 %3111, %v572
        %v3113 = vpop.permute.xlu0 %3112
        %3115 = vset.pattern.permute.xlu0 3
        %3116 = vperm.xlu0 %3115, %v573
        %v3117 = vpop.permute.xlu0 %3116
        %3119 = vset.pattern.permute.xlu0 3
        %3120 = vperm.xlu0 %3119, %v574
        %v3121 = vpop.permute.xlu0 %3120
        %3123 = vset.pattern.permute.xlu0 3
        %3124 = vperm.xlu0 %3123, %v575
        %v3125 = vpop.permute.xlu0 %3124
        %3127 = vset.pattern.permute.xlu0 3
        %3128 = vperm.xlu0 %3127, %v576
        %v3129 = vpop.permute.xlu0 %3128
        %3131 = vset.pattern.permute.xlu0 3
        %3132 = vperm.xlu0 %3131, %v577
        %v3133 = vpop.permute.xlu0 %3132
        %3135 = vset.pattern.permute.xlu0 3
        %3136 = vperm.xlu0 %3135, %v578
        %v3137 = vpop.permute.xlu0 %3136
        %3139 = vset.pattern.permute.xlu0 3
        %3140 = vperm.xlu0 %3139, %v579
        %v3141 = vpop.permute.xlu0 %3140
        %3143 = vset.pattern.permute.xlu0 3
        %3144 = vperm.xlu0 %3143, %v580
        %v3145 = vpop.permute.xlu0 %3144
        %3147 = vset.pattern.permute.xlu0 3
        %3148 = vperm.xlu0 %3147, %v581
        %v3149 = vpop.permute.xlu0 %3148
        %3151 = vset.pattern.permute.xlu0 3
        %3152 = vperm.xlu0 %3151, %v582
        %v3153 = vpop.permute.xlu0 %3152
        %3155 = vset.pattern.permute.xlu0 3
        %3156 = vperm.xlu0 %3155, %v583
        %v3157 = vpop.permute.xlu0 %3156
        %3159 = vset.pattern.permute.xlu0 3
        %3160 = vperm.xlu0 %3159, %v584
        %v3161 = vpop.permute.xlu0 %3160
        %3163 = vset.pattern.permute.xlu0 3
        %3164 = vperm.xlu0 %3163, %v585
        %v3165 = vpop.permute.xlu0 %3164
        %3167 = vset.pattern.permute.xlu0 3
        %3168 = vperm.xlu0 %3167, %v586
        %v3169 = vpop.permute.xlu0 %3168
        %3171 = vset.pattern.permute.xlu0 3
        %3172 = vperm.xlu0 %3171, %v587
        %v3173 = vpop.permute.xlu0 %3172
        %3175 = vset.pattern.permute.xlu0 3
        %3176 = vperm.xlu0 %3175, %v588
        %v3177 = vpop.permute.xlu0 %3176
        %3179 = vset.pattern.permute.xlu0 3
        %3180 = vperm.xlu0 %3179, %v589
        %v3181 = vpop.permute.xlu0 %3180
        %3183 = vset.pattern.permute.xlu0 3
        %3184 = vperm.xlu0 %3183, %v590
        %v3185 = vpop.permute.xlu0 %3184
        %3187 = vset.pattern.permute.xlu0 3
        %3188 = vperm.xlu0 %3187, %v591
        %v3189 = vpop.permute.xlu0 %3188
        %3191 = vset.pattern.permute.xlu0 3
        %3192 = vperm.xlu0 %3191, %v592
        %v3193 = vpop.permute.xlu0 %3192
        %3195 = vset.pattern.permute.xlu0 3
        %3196 = vperm.xlu0 %3195, %v593
        %v3197 = vpop.permute.xlu0 %3196
        %3199 = vset.pattern.permute.xlu0 3
        %3200 = vperm.xlu0 %3199, %v594
        %v3201 = vpop.permute.xlu0 %3200
        %3203 = vset.pattern.permute.xlu0 3
        %3204 = vperm.xlu0 %3203, %v595
        %v3205 = vpop.permute.xlu0 %3204
        %3207 = vset.pattern.permute.xlu0 3
        %3208 = vperm.xlu0 %3207, %v596
        %v3209 = vpop.permute.xlu0 %3208
        %3211 = vset.pattern.permute.xlu0 3
        %3212 = vperm.xlu0 %3211, %v597
        %v3213 = vpop.permute.xlu0 %3212
        %3215 = vset.pattern.permute.xlu0 3
        %3216 = vperm.xlu0 %3215, %v598
        %v3217 = vpop.permute.xlu0 %3216
        %3219 = vset.pattern.permute.xlu0 3
        %3220 = vperm.xlu0 %3219, %v599
        %v3221 = vpop.permute.xlu0 %3220
        %3223 = vset.pattern.permute.xlu0 3
        %3224 = vperm.xlu0 %3223, %v600
        %v3225 = vpop.permute.xlu0 %3224
        %3227 = vset.pattern.permute.xlu0 3
        %3228 = vperm.xlu0 %3227, %v601
        %v3229 = vpop.permute.xlu0 %3228
        %3231 = vset.pattern.permute.xlu0 3
        %3232 = vperm.xlu0 %3231, %v602
        %v3233 = vpop.permute.xlu0 %3232
        %3235 = vset.pattern.permute.xlu0 3
        %3236 = vperm.xlu0 %3235, %v603
        %v3237 = vpop.permute.xlu0 %3236
        %3239 = vset.pattern.permute.xlu0 3
        %3240 = vperm.xlu0 %3239, %v604
        %v3241 = vpop.permute.xlu0 %3240
        %3243 = vset.pattern.permute.xlu0 3
        %3244 = vperm.xlu0 %3243, %v605
        %v3245 = vpop.permute.xlu0 %3244
        %3247 = vset.pattern.permute.xlu0 3
        %3248 = vperm.xlu0 %3247, %v606
        %v3249 = vpop.permute.xlu0 %3248
        %3251 = vset.pattern.permute.xlu0 3
        %3252 = vperm.xlu0 %3251, %v607
        %v3253 = vpop.permute.xlu0 %3252
        %3255 = vset.pattern.permute.xlu0 3
        %3256 = vperm.xlu0 %3255, %v608
        %v3257 = vpop.permute.xlu0 %3256
        %3259 = vset.pattern.permute.xlu0 3
        %3260 = vperm.xlu0 %3259, %v609
        %v3261 = vpop.permute.xlu0 %3260
        %3263 = vset.pattern.permute.xlu0 3
        %3264 = vperm.xlu0 %3263, %v610
        %v3265 = vpop.permute.xlu0 %3264
        %3267 = vset.pattern.permute.xlu0 3
        %3268 = vperm.xlu0 %3267, %v611
        %v3269 = vpop.permute.xlu0 %3268
        %3271 = vset.pattern.permute.xlu0 3
        %3272 = vperm.xlu0 %3271, %v612
        %v3273 = vpop.permute.xlu0 %3272
        %3275 = vset.pattern.permute.xlu0 3
        %3276 = vperm.xlu0 %3275, %v613
        %v3277 = vpop.permute.xlu0 %3276
        %3279 = vset.pattern.permute.xlu0 3
        %3280 = vperm.xlu0 %3279, %v614
        %v3281 = vpop.permute.xlu0 %3280
        %3283 = vset.pattern.permute.xlu0 3
        %3284 = vperm.xlu0 %3283, %v615
        %v3285 = vpop.permute.xlu0 %3284
        %3287 = vset.pattern.permute.xlu0 3
        %3288 = vperm.xlu0 %3287, %v616
        %v3289 = vpop.permute.xlu0 %3288
        %3291 = vset.pattern.permute.xlu0 3
        %3292 = vperm.xlu0 %3291, %v617
        %v3293 = vpop.permute.xlu0 %3292
        %3295 = vset.pattern.permute.xlu0 3
        %3296 = vperm.xlu0 %3295, %v618
        %v3297 = vpop.permute.xlu0 %3296
        %3299 = vset.pattern.permute.xlu0 3
        %3300 = vperm.xlu0 %3299, %v619
        %v3301 = vpop.permute.xlu0 %3300
        %3303 = vset.pattern.permute.xlu0 3
        %3304 = vperm.xlu0 %3303, %v620
        %v3305 = vpop.permute.xlu0 %3304
        %3307 = vset.pattern.permute.xlu0 3
        %3308 = vperm.xlu0 %3307, %v621
        %v3309 = vpop.permute.xlu0 %3308
        %3311 = vset.pattern.permute.xlu0 3
        %3312 = vperm.xlu0 %3311, %v622
        %v3313 = vpop.permute.xlu0 %3312
        %3315 = vset.pattern.permute.xlu0 3
        %3316 = vperm.xlu0 %3315, %v623
        %v3317 = vpop.permute.xlu0 %3316
        %3319 = vset.pattern.permute.xlu0 3
        %3320 = vperm.xlu0 %3319, %v624
        %v3321 = vpop.permute.xlu0 %3320
        %3323 = vset.pattern.permute.xlu0 3
        %3324 = vperm.xlu0 %3323, %v625
        %v3325 = vpop.permute.xlu0 %3324
        %3327 = vset.pattern.permute.xlu0 3
        %3328 = vperm.xlu0 %3327, %v626
        %v3329 = vpop.permute.xlu0 %3328
        %3331 = vset.pattern.permute.xlu0 3
        %3332 = vperm.xlu0 %3331, %v627
        %v3333 = vpop.permute.xlu0 %3332
        %3335 = vset.pattern.permute.xlu0 3
        %3336 = vperm.xlu0 %3335, %v628
        %v3337 = vpop.permute.xlu0 %3336
        %3339 = vset.pattern.permute.xlu0 3
        %3340 = vperm.xlu0 %3339, %v629
        %v3341 = vpop.permute.xlu0 %3340
        %3343 = vset.pattern.permute.xlu0 3
        %3344 = vperm.xlu0 %3343, %v630
        %v3345 = vpop.permute.xlu0 %3344
        %3347 = vset.pattern.permute.xlu0 3
        %3348 = vperm.xlu0 %3347, %v631
        %v3349 = vpop.permute.xlu0 %3348
        %3351 = vset.pattern.permute.xlu0 3
        %3352 = vperm.xlu0 %3351, %v632
        %v3353 = vpop.permute.xlu0 %3352
        %3355 = vset.pattern.permute.xlu0 3
        %3356 = vperm.xlu0 %3355, %v633
        %v3357 = vpop.permute.xlu0 %3356
        %3359 = vset.pattern.permute.xlu0 3
        %3360 = vperm.xlu0 %3359, %v634
        %v3361 = vpop.permute.xlu0 %3360
        %3363 = vset.pattern.permute.xlu0 3
        %3364 = vperm.xlu0 %3363, %v635
        %v3365 = vpop.permute.xlu0 %3364
        %3367 = vset.pattern.permute.xlu0 3
        %3368 = vperm.xlu0 %3367, %v636
        %v3369 = vpop.permute.xlu0 %3368
        %3371 = vset.pattern.permute.xlu0 3
        %3372 = vperm.xlu0 %3371, %v637
        %v3373 = vpop.permute.xlu0 %3372
        %3375 = vset.pattern.permute.xlu0 3
        %3376 = vperm.xlu0 %3375, %v638
        %v3377 = vpop.permute.xlu0 %3376
        %3379 = vset.pattern.permute.xlu0 3
        %3380 = vperm.xlu0 %3379, %v639
        %v3381 = vpop.permute.xlu0 %3380
        %3383 = vset.pattern.permute.xlu0 3
        %3384 = vperm.xlu0 %3383, %v640
        %v3385 = vpop.permute.xlu0 %3384
        %3387 = vset.pattern.permute.xlu0 3
        %3388 = vperm.xlu0 %3387, %v641
        %v3389 = vpop.permute.xlu0 %3388
        %3391 = vset.pattern.permute.xlu0 3
        %3392 = vperm.xlu0 %3391, %v642
        %v3393 = vpop.permute.xlu0 %3392
        %3395 = vset.pattern.permute.xlu0 3
        %3396 = vperm.xlu0 %3395, %v643
        %v3397 = vpop.permute.xlu0 %3396
        %3399 = vset.pattern.permute.xlu0 3
        %3400 = vperm.xlu0 %3399, %v644
        %v3401 = vpop.permute.xlu0 %3400
        %3403 = vset.pattern.permute.xlu0 3
        %3404 = vperm.xlu0 %3403, %v645
        %v3405 = vpop.permute.xlu0 %3404
        %3407 = vset.pattern.permute.xlu0 3
        %3408 = vperm.xlu0 %3407, %v646
        %v3409 = vpop.permute.xlu0 %3408
        %3411 = vset.pattern.permute.xlu0 3
        %3412 = vperm.xlu0 %3411, %v647
        %v3413 = vpop.permute.xlu0 %3412
        %3415 = vset.pattern.permute.xlu0 3
        %3416 = vperm.xlu0 %3415, %v648
        %v3417 = vpop.permute.xlu0 %3416
        %3419 = vset.pattern.permute.xlu0 3
        %3420 = vperm.xlu0 %3419, %v649
        %v3421 = vpop.permute.xlu0 %3420
        %3423 = vset.pattern.permute.xlu0 3
        %3424 = vperm.xlu0 %3423, %v650
        %v3425 = vpop.permute.xlu0 %3424
        %3427 = vset.pattern.permute.xlu0 3
        %3428 = vperm.xlu0 %3427, %v651
        %v3429 = vpop.permute.xlu0 %3428
        %3431 = vset.pattern.permute.xlu0 3
        %3432 = vperm.xlu0 %3431, %v652
        %v3433 = vpop.permute.xlu0 %3432
        %3435 = vset.pattern.permute.xlu0 3
        %3436 = vperm.xlu0 %3435, %v653
        %v3437 = vpop.permute.xlu0 %3436
        %3439 = vset.pattern.permute.xlu0 3
        %3440 = vperm.xlu0 %3439, %v654
        %v3441 = vpop.permute.xlu0 %3440
        %3443 = vset.pattern.permute.xlu0 3
        %3444 = vperm.xlu0 %3443, %v655
        %v3445 = vpop.permute.xlu0 %3444
        %3447 = vset.pattern.permute.xlu0 3
        %3448 = vperm.xlu0 %3447, %v656
        %v3449 = vpop.permute.xlu0 %3448
        %3451 = vset.pattern.permute.xlu0 3
        %3452 = vperm.xlu0 %3451, %v657
        %v3453 = vpop.permute.xlu0 %3452
        %3455 = vset.pattern.permute.xlu0 3
        %3456 = vperm.xlu0 %3455, %v658
        %v3457 = vpop.permute.xlu0 %3456
        %3459 = vset.pattern.permute.xlu0 3
        %3460 = vperm.xlu0 %3459, %v659
        %v3461 = vpop.permute.xlu0 %3460
        %3463 = vset.pattern.permute.xlu0 3
        %3464 = vperm.xlu0 %3463, %v660
        %v3465 = vpop.permute.xlu0 %3464
        %3467 = vset.pattern.permute.xlu0 3
        %3468 = vperm.xlu0 %3467, %v661
        %v3469 = vpop.permute.xlu0 %3468
        %3471 = vset.pattern.permute.xlu0 3
        %3472 = vperm.xlu0 %3471, %v662
        %v3473 = vpop.permute.xlu0 %3472
        %3475 = vset.pattern.permute.xlu0 3
        %3476 = vperm.xlu0 %3475, %v663
        %v3477 = vpop.permute.xlu0 %3476
        %3479 = vset.pattern.permute.xlu0 3
        %3480 = vperm.xlu0 %3479, %v664
        %v3481 = vpop.permute.xlu0 %3480
        %3483 = vset.pattern.permute.xlu0 3
        %3484 = vperm.xlu0 %3483, %v665
        %v3485 = vpop.permute.xlu0 %3484
        %3487 = vset.pattern.permute.xlu0 3
        %3488 = vperm.xlu0 %3487, %v666
        %v3489 = vpop.permute.xlu0 %3488
        %3491 = vset.pattern.permute.xlu0 3
        %3492 = vperm.xlu0 %3491, %v667
        %v3493 = vpop.permute.xlu0 %3492
        %3495 = vset.pattern.permute.xlu0 3
        %3496 = vperm.xlu0 %3495, %v668
        %v3497 = vpop.permute.xlu0 %3496
        %v3499 = vlaneseq
        %v3500 = vshrl.u32 %v3499, 7
        %v3501 = vsub.s32 3, %v3500
        %v3502 = vrot.slane %v670, %v3501
        %v3503 = vmul.f32 %v2989, %v3502
        %v3504 = vmul.f32 %v2993, %v3502
        %v3505 = vmul.f32 %v2997, %v3502
        %v3506 = vmul.f32 %v3001, %v3502
        %v3507 = vmul.f32 %v3005, %v3502
        %v3508 = vmul.f32 %v3009, %v3502
        %v3509 = vmul.f32 %v3013, %v3502
        %v3510 = vmul.f32 %v3017, %v3502
        %v3511 = vmul.f32 %v3021, %v3502
        %v3512 = vmul.f32 %v3025, %v3502
        %v3513 = vmul.f32 %v3029, %v3502
        %v3514 = vmul.f32 %v3033, %v3502
        %v3515 = vmul.f32 %v3037, %v3502
        %v3516 = vmul.f32 %v3041, %v3502
        %v3517 = vmul.f32 %v3045, %v3502
        %v3518 = vmul.f32 %v3049, %v3502
        %v3519 = vmul.f32 %v3053, %v3502
        %v3520 = vmul.f32 %v3057, %v3502
        %v3521 = vmul.f32 %v3061, %v3502
        %v3522 = vmul.f32 %v3065, %v3502
        %v3523 = vmul.f32 %v3069, %v3502
        %v3524 = vmul.f32 %v3073, %v3502
        %v3525 = vmul.f32 %v3077, %v3502
        %v3526 = vmul.f32 %v3081, %v3502
        %v3527 = vmul.f32 %v3085, %v3502
        %v3528 = vmul.f32 %v3089, %v3502
        %v3529 = vmul.f32 %v3093, %v3502
        %v3530 = vmul.f32 %v3097, %v3502
        %v3531 = vmul.f32 %v3101, %v3502
        %v3532 = vmul.f32 %v3105, %v3502
        %v3533 = vmul.f32 %v3109, %v3502
        %v3534 = vmul.f32 %v3113, %v3502
        %v3535 = vmul.f32 %v3117, %v3502
        %v3536 = vmul.f32 %v3121, %v3502
        %v3537 = vmul.f32 %v3125, %v3502
        %v3538 = vmul.f32 %v3129, %v3502
        %v3539 = vmul.f32 %v3133, %v3502
        %v3540 = vmul.f32 %v3137, %v3502
        %v3541 = vmul.f32 %v3141, %v3502
        %v3542 = vmul.f32 %v3145, %v3502
        %v3543 = vmul.f32 %v3149, %v3502
        %v3544 = vmul.f32 %v3153, %v3502
        %v3545 = vmul.f32 %v3157, %v3502
        %v3546 = vmul.f32 %v3161, %v3502
        %v3547 = vmul.f32 %v3165, %v3502
        %v3548 = vmul.f32 %v3169, %v3502
        %v3549 = vmul.f32 %v3173, %v3502
        %v3550 = vmul.f32 %v3177, %v3502
        %v3551 = vmul.f32 %v3181, %v3502
        %v3552 = vmul.f32 %v3185, %v3502
        %v3553 = vmul.f32 %v3189, %v3502
        %v3554 = vmul.f32 %v3193, %v3502
        %v3555 = vmul.f32 %v3197, %v3502
        %v3556 = vmul.f32 %v3201, %v3502
        %v3557 = vmul.f32 %v3205, %v3502
        %v3558 = vmul.f32 %v3209, %v3502
        %v3559 = vmul.f32 %v3213, %v3502
        %v3560 = vmul.f32 %v3217, %v3502
        %v3561 = vmul.f32 %v3221, %v3502
        %v3562 = vmul.f32 %v3225, %v3502
        %v3563 = vmul.f32 %v3229, %v3502
        %v3564 = vmul.f32 %v3233, %v3502
        %v3565 = vmul.f32 %v3237, %v3502
        %v3566 = vmul.f32 %v3241, %v3502
        %v3567 = vmul.f32 %v3245, %v3502
        %v3568 = vmul.f32 %v3249, %v3502
        %v3569 = vmul.f32 %v3253, %v3502
        %v3570 = vmul.f32 %v3257, %v3502
        %v3571 = vmul.f32 %v3261, %v3502
        %v3572 = vmul.f32 %v3265, %v3502
        %v3573 = vmul.f32 %v3269, %v3502
        %v3574 = vmul.f32 %v3273, %v3502
        %v3575 = vmul.f32 %v3277, %v3502
        %v3576 = vmul.f32 %v3281, %v3502
        %v3577 = vmul.f32 %v3285, %v3502
        %v3578 = vmul.f32 %v3289, %v3502
        %v3579 = vmul.f32 %v3293, %v3502
        %v3580 = vmul.f32 %v3297, %v3502
        %v3581 = vmul.f32 %v3301, %v3502
        %v3582 = vmul.f32 %v3305, %v3502
        %v3583 = vmul.f32 %v3309, %v3502
        %v3584 = vmul.f32 %v3313, %v3502
        %v3585 = vmul.f32 %v3317, %v3502
        %v3586 = vmul.f32 %v3321, %v3502
        %v3587 = vmul.f32 %v3325, %v3502
        %v3588 = vmul.f32 %v3329, %v3502
        %v3589 = vmul.f32 %v3333, %v3502
        %v3590 = vmul.f32 %v3337, %v3502
        %v3591 = vmul.f32 %v3341, %v3502
        %v3592 = vmul.f32 %v3345, %v3502
        %v3593 = vmul.f32 %v3349, %v3502
        %v3594 = vmul.f32 %v3353, %v3502
        %v3595 = vmul.f32 %v3357, %v3502
        %v3596 = vmul.f32 %v3361, %v3502
        %v3597 = vmul.f32 %v3365, %v3502
        %v3598 = vmul.f32 %v3369, %v3502
        %v3599 = vmul.f32 %v3373, %v3502
        %v3600 = vmul.f32 %v3377, %v3502
        %v3601 = vmul.f32 %v3381, %v3502
        %v3602 = vmul.f32 %v3385, %v3502
        %v3603 = vmul.f32 %v3389, %v3502
        %v3604 = vmul.f32 %v3393, %v3502
        %v3605 = vmul.f32 %v3397, %v3502
        %v3606 = vmul.f32 %v3401, %v3502
        %v3607 = vmul.f32 %v3405, %v3502
        %v3608 = vmul.f32 %v3409, %v3502
        %v3609 = vmul.f32 %v3413, %v3502
        %v3610 = vmul.f32 %v3417, %v3502
        %v3611 = vmul.f32 %v3421, %v3502
        %v3612 = vmul.f32 %v3425, %v3502
        %v3613 = vmul.f32 %v3429, %v3502
        %v3614 = vmul.f32 %v3433, %v3502
        %v3615 = vmul.f32 %v3437, %v3502
        %v3616 = vmul.f32 %v3441, %v3502
        %v3617 = vmul.f32 %v3445, %v3502
        %v3618 = vmul.f32 %v3449, %v3502
        %v3619 = vmul.f32 %v3453, %v3502
        %v3620 = vmul.f32 %v3457, %v3502
        %v3621 = vmul.f32 %v3461, %v3502
        %v3622 = vmul.f32 %v3465, %v3502
        %v3623 = vmul.f32 %v3469, %v3502
        %v3624 = vmul.f32 %v3473, %v3502
        %v3625 = vmul.f32 %v3477, %v3502
        %v3626 = vmul.f32 %v3481, %v3502
        %v3627 = vmul.f32 %v3485, %v3502
        %v3628 = vmul.f32 %v3489, %v3502
        %v3629 = vmul.f32 %v3493, %v3502
        %v3630 = vmul.f32 %v3497, %v3502
        %v3631 = vadd.f32 %v2859, %v3503
        %v3632 = vadd.f32 %v2860, %v3504
        %v3633 = vadd.f32 %v2861, %v3505
        %v3634 = vadd.f32 %v2862, %v3506
        %v3635 = vadd.f32 %v2863, %v3507
        %v3636 = vadd.f32 %v2864, %v3508
        %v3637 = vadd.f32 %v2865, %v3509
        %v3638 = vadd.f32 %v2866, %v3510
        %v3639 = vadd.f32 %v2867, %v3511
        %v3640 = vadd.f32 %v2868, %v3512
        %v3641 = vadd.f32 %v2869, %v3513
        %v3642 = vadd.f32 %v2870, %v3514
        %v3643 = vadd.f32 %v2871, %v3515
        %v3644 = vadd.f32 %v2872, %v3516
        %v3645 = vadd.f32 %v2873, %v3517
        %v3646 = vadd.f32 %v2874, %v3518
        %v3647 = vadd.f32 %v2875, %v3519
        %v3648 = vadd.f32 %v2876, %v3520
        %v3649 = vadd.f32 %v2877, %v3521
        %v3650 = vadd.f32 %v2878, %v3522
        %v3651 = vadd.f32 %v2879, %v3523
        %v3652 = vadd.f32 %v2880, %v3524
        %v3653 = vadd.f32 %v2881, %v3525
        %v3654 = vadd.f32 %v2882, %v3526
        %v3655 = vadd.f32 %v2883, %v3527
        %v3656 = vadd.f32 %v2884, %v3528
        %v3657 = vadd.f32 %v2885, %v3529
        %v3658 = vadd.f32 %v2886, %v3530
        %v3659 = vadd.f32 %v2887, %v3531
        %v3660 = vadd.f32 %v2888, %v3532
        %v3661 = vadd.f32 %v2889, %v3533
        %v3662 = vadd.f32 %v2890, %v3534
        %v3663 = vadd.f32 %v2891, %v3535
        %v3664 = vadd.f32 %v2892, %v3536
        %v3665 = vadd.f32 %v2893, %v3537
        %v3666 = vadd.f32 %v2894, %v3538
        %v3667 = vadd.f32 %v2895, %v3539
        %v3668 = vadd.f32 %v2896, %v3540
        %v3669 = vadd.f32 %v2897, %v3541
        %v3670 = vadd.f32 %v2898, %v3542
        %v3671 = vadd.f32 %v2899, %v3543
        %v3672 = vadd.f32 %v2900, %v3544
        %v3673 = vadd.f32 %v2901, %v3545
        %v3674 = vadd.f32 %v2902, %v3546
        %v3675 = vadd.f32 %v2903, %v3547
        %v3676 = vadd.f32 %v2904, %v3548
        %v3677 = vadd.f32 %v2905, %v3549
        %v3678 = vadd.f32 %v2906, %v3550
        %v3679 = vadd.f32 %v2907, %v3551
        %v3680 = vadd.f32 %v2908, %v3552
        %v3681 = vadd.f32 %v2909, %v3553
        %v3682 = vadd.f32 %v2910, %v3554
        %v3683 = vadd.f32 %v2911, %v3555
        %v3684 = vadd.f32 %v2912, %v3556
        %v3685 = vadd.f32 %v2913, %v3557
        %v3686 = vadd.f32 %v2914, %v3558
        %v3687 = vadd.f32 %v2915, %v3559
        %v3688 = vadd.f32 %v2916, %v3560
        %v3689 = vadd.f32 %v2917, %v3561
        %v3690 = vadd.f32 %v2918, %v3562
        %v3691 = vadd.f32 %v2919, %v3563
        %v3692 = vadd.f32 %v2920, %v3564
        %v3693 = vadd.f32 %v2921, %v3565
        %v3694 = vadd.f32 %v2922, %v3566
        %v3695 = vadd.f32 %v2923, %v3567
        %v3696 = vadd.f32 %v2924, %v3568
        %v3697 = vadd.f32 %v2925, %v3569
        %v3698 = vadd.f32 %v2926, %v3570
        %v3699 = vadd.f32 %v2927, %v3571
        %v3700 = vadd.f32 %v2928, %v3572
        %v3701 = vadd.f32 %v2929, %v3573
        %v3702 = vadd.f32 %v2930, %v3574
        %v3703 = vadd.f32 %v2931, %v3575
        %v3704 = vadd.f32 %v2932, %v3576
        %v3705 = vadd.f32 %v2933, %v3577
        %v3706 = vadd.f32 %v2934, %v3578
        %v3707 = vadd.f32 %v2935, %v3579
        %v3708 = vadd.f32 %v2936, %v3580
        %v3709 = vadd.f32 %v2937, %v3581
        %v3710 = vadd.f32 %v2938, %v3582
        %v3711 = vadd.f32 %v2939, %v3583
        %v3712 = vadd.f32 %v2940, %v3584
        %v3713 = vadd.f32 %v2941, %v3585
        %v3714 = vadd.f32 %v2942, %v3586
        %v3715 = vadd.f32 %v2943, %v3587
        %v3716 = vadd.f32 %v2944, %v3588
        %v3717 = vadd.f32 %v2945, %v3589
        %v3718 = vadd.f32 %v2946, %v3590
        %v3719 = vadd.f32 %v2947, %v3591
        %v3720 = vadd.f32 %v2948, %v3592
        %v3721 = vadd.f32 %v2949, %v3593
        %v3722 = vadd.f32 %v2950, %v3594
        %v3723 = vadd.f32 %v2951, %v3595
        %v3724 = vadd.f32 %v2952, %v3596
        %v3725 = vadd.f32 %v2953, %v3597
        %v3726 = vadd.f32 %v2954, %v3598
        %v3727 = vadd.f32 %v2955, %v3599
        %v3728 = vadd.f32 %v2956, %v3600
        %v3729 = vadd.f32 %v2957, %v3601
        %v3730 = vadd.f32 %v2958, %v3602
        %v3731 = vadd.f32 %v2959, %v3603
        %v3732 = vadd.f32 %v2960, %v3604
        %v3733 = vadd.f32 %v2961, %v3605
        %v3734 = vadd.f32 %v2962, %v3606
        %v3735 = vadd.f32 %v2963, %v3607
        %v3736 = vadd.f32 %v2964, %v3608
        %v3737 = vadd.f32 %v2965, %v3609
        %v3738 = vadd.f32 %v2966, %v3610
        %v3739 = vadd.f32 %v2967, %v3611
        %v3740 = vadd.f32 %v2968, %v3612
        %v3741 = vadd.f32 %v2969, %v3613
        %v3742 = vadd.f32 %v2970, %v3614
        %v3743 = vadd.f32 %v2971, %v3615
        %v3744 = vadd.f32 %v2972, %v3616
        %v3745 = vadd.f32 %v2973, %v3617
        %v3746 = vadd.f32 %v2974, %v3618
        %v3747 = vadd.f32 %v2975, %v3619
        %v3748 = vadd.f32 %v2976, %v3620
        %v3749 = vadd.f32 %v2977, %v3621
        %v3750 = vadd.f32 %v2978, %v3622
        %v3751 = vadd.f32 %v2979, %v3623
        %v3752 = vadd.f32 %v2980, %v3624
        %v3753 = vadd.f32 %v2981, %v3625
        %v3754 = vadd.f32 %v2982, %v3626
        %v3755 = vadd.f32 %v2983, %v3627
        %v3756 = vadd.f32 %v2984, %v3628
        %v3757 = vadd.f32 %v2985, %v3629
        %v3758 = vadd.f32 %v2986, %v3630
        %3760 = vset.pattern.permute.xlu0 0
        %3761 = vperm.xlu0 %3760, %v245
        %v3762 = vpop.permute.xlu0 %3761
        %3765 = vset.pattern.permute.xlu0 0
        %3766 = vperm.xlu0 %3765, %v246
        %v3767 = vpop.permute.xlu0 %3766
        %3770 = vset.pattern.permute.xlu0 0
        %3771 = vperm.xlu0 %3770, %v247
        %v3772 = vpop.permute.xlu0 %3771
        %3775 = vset.pattern.permute.xlu0 0
        %3776 = vperm.xlu0 %3775, %v248
        %v3777 = vpop.permute.xlu0 %3776
        %3780 = vset.pattern.permute.xlu0 0
        %3781 = vperm.xlu0 %3780, %v249
        %v3782 = vpop.permute.xlu0 %3781
        %3785 = vset.pattern.permute.xlu0 0
        %3786 = vperm.xlu0 %3785, %v250
        %v3787 = vpop.permute.xlu0 %3786
        %3790 = vset.pattern.permute.xlu0 0
        %3791 = vperm.xlu0 %3790, %v251
        %v3792 = vpop.permute.xlu0 %3791
        %3795 = vset.pattern.permute.xlu0 0
        %3796 = vperm.xlu0 %3795, %v252
        %v3797 = vpop.permute.xlu0 %3796
        %3800 = vset.pattern.permute.xlu0 0
        %3801 = vperm.xlu0 %3800, %v253
        %v3802 = vpop.permute.xlu0 %3801
        %3805 = vset.pattern.permute.xlu0 0
        %3806 = vperm.xlu0 %3805, %v254
        %v3807 = vpop.permute.xlu0 %3806
        %3810 = vset.pattern.permute.xlu0 0
        %3811 = vperm.xlu0 %3810, %v255
        %v3812 = vpop.permute.xlu0 %3811
        %3815 = vset.pattern.permute.xlu0 0
        %3816 = vperm.xlu0 %3815, %v256
        %v3817 = vpop.permute.xlu0 %3816
        %3820 = vset.pattern.permute.xlu0 0
        %3821 = vperm.xlu0 %3820, %v257
        %v3822 = vpop.permute.xlu0 %3821
        %3825 = vset.pattern.permute.xlu0 0
        %3826 = vperm.xlu0 %3825, %v258
        %v3827 = vpop.permute.xlu0 %3826
        %3830 = vset.pattern.permute.xlu0 0
        %3831 = vperm.xlu0 %3830, %v259
        %v3832 = vpop.permute.xlu0 %3831
        %3835 = vset.pattern.permute.xlu0 0
        %3836 = vperm.xlu0 %3835, %v260
        %v3837 = vpop.permute.xlu0 %3836
        %3840 = vset.pattern.permute.xlu0 0
        %3841 = vperm.xlu0 %3840, %v261
        %v3842 = vpop.permute.xlu0 %3841
        %3845 = vset.pattern.permute.xlu0 0
        %3846 = vperm.xlu0 %3845, %v262
        %v3847 = vpop.permute.xlu0 %3846
        %3850 = vset.pattern.permute.xlu0 0
        %3851 = vperm.xlu0 %3850, %v263
        %v3852 = vpop.permute.xlu0 %3851
        %3855 = vset.pattern.permute.xlu0 0
        %3856 = vperm.xlu0 %3855, %v264
        %v3857 = vpop.permute.xlu0 %3856
        %3860 = vset.pattern.permute.xlu0 0
        %3861 = vperm.xlu0 %3860, %v265
        %v3862 = vpop.permute.xlu0 %3861
        %3865 = vset.pattern.permute.xlu0 0
        %3866 = vperm.xlu0 %3865, %v266
        %v3867 = vpop.permute.xlu0 %3866
        %3870 = vset.pattern.permute.xlu0 0
        %3871 = vperm.xlu0 %3870, %v267
        %v3872 = vpop.permute.xlu0 %3871
        %3875 = vset.pattern.permute.xlu0 0
        %3876 = vperm.xlu0 %3875, %v268
        %v3877 = vpop.permute.xlu0 %3876
        %3880 = vset.pattern.permute.xlu0 0
        %3881 = vperm.xlu0 %3880, %v269
        %v3882 = vpop.permute.xlu0 %3881
        %3885 = vset.pattern.permute.xlu0 0
        %3886 = vperm.xlu0 %3885, %v270
        %v3887 = vpop.permute.xlu0 %3886
        %3890 = vset.pattern.permute.xlu0 0
        %3891 = vperm.xlu0 %3890, %v271
        %v3892 = vpop.permute.xlu0 %3891
        %3895 = vset.pattern.permute.xlu0 0
        %3896 = vperm.xlu0 %3895, %v272
        %v3897 = vpop.permute.xlu0 %3896
        %3900 = vset.pattern.permute.xlu0 0
        %3901 = vperm.xlu0 %3900, %v273
        %v3902 = vpop.permute.xlu0 %3901
        %3905 = vset.pattern.permute.xlu0 0
        %3906 = vperm.xlu0 %3905, %v274
        %v3907 = vpop.permute.xlu0 %3906
        %3910 = vset.pattern.permute.xlu0 0
        %3911 = vperm.xlu0 %3910, %v275
        %v3912 = vpop.permute.xlu0 %3911
        %3915 = vset.pattern.permute.xlu0 0
        %3916 = vperm.xlu0 %3915, %v276
        %v3917 = vpop.permute.xlu0 %3916
        %3920 = vset.pattern.permute.xlu0 0
        %3921 = vperm.xlu0 %3920, %v277
        %v3922 = vpop.permute.xlu0 %3921
        %3925 = vset.pattern.permute.xlu0 0
        %3926 = vperm.xlu0 %3925, %v278
        %v3927 = vpop.permute.xlu0 %3926
        %3930 = vset.pattern.permute.xlu0 0
        %3931 = vperm.xlu0 %3930, %v279
        %v3932 = vpop.permute.xlu0 %3931
        %3935 = vset.pattern.permute.xlu0 0
        %3936 = vperm.xlu0 %3935, %v280
        %v3937 = vpop.permute.xlu0 %3936
        %3940 = vset.pattern.permute.xlu0 0
        %3941 = vperm.xlu0 %3940, %v281
        %v3942 = vpop.permute.xlu0 %3941
        %3945 = vset.pattern.permute.xlu0 0
        %3946 = vperm.xlu0 %3945, %v282
        %v3947 = vpop.permute.xlu0 %3946
        %3950 = vset.pattern.permute.xlu0 0
        %3951 = vperm.xlu0 %3950, %v283
        %v3952 = vpop.permute.xlu0 %3951
        %3955 = vset.pattern.permute.xlu0 0
        %3956 = vperm.xlu0 %3955, %v284
        %v3957 = vpop.permute.xlu0 %3956
        %3960 = vset.pattern.permute.xlu0 0
        %3961 = vperm.xlu0 %3960, %v285
        %v3962 = vpop.permute.xlu0 %3961
        %3965 = vset.pattern.permute.xlu0 0
        %3966 = vperm.xlu0 %3965, %v286
        %v3967 = vpop.permute.xlu0 %3966
        %3970 = vset.pattern.permute.xlu0 0
        %3971 = vperm.xlu0 %3970, %v287
        %v3972 = vpop.permute.xlu0 %3971
        %3975 = vset.pattern.permute.xlu0 0
        %3976 = vperm.xlu0 %3975, %v288
        %v3977 = vpop.permute.xlu0 %3976
        %3980 = vset.pattern.permute.xlu0 0
        %3981 = vperm.xlu0 %3980, %v289
        %v3982 = vpop.permute.xlu0 %3981
        %3985 = vset.pattern.permute.xlu0 0
        %3986 = vperm.xlu0 %3985, %v290
        %v3987 = vpop.permute.xlu0 %3986
        %3990 = vset.pattern.permute.xlu0 0
        %3991 = vperm.xlu0 %3990, %v291
        %v3992 = vpop.permute.xlu0 %3991
        %3995 = vset.pattern.permute.xlu0 0
        %3996 = vperm.xlu0 %3995, %v292
        %v3997 = vpop.permute.xlu0 %3996
        %4000 = vset.pattern.permute.xlu0 0
        %4001 = vperm.xlu0 %4000, %v293
        %v4002 = vpop.permute.xlu0 %4001
        %4005 = vset.pattern.permute.xlu0 0
        %4006 = vperm.xlu0 %4005, %v294
        %v4007 = vpop.permute.xlu0 %4006
        %4010 = vset.pattern.permute.xlu0 0
        %4011 = vperm.xlu0 %4010, %v295
        %v4012 = vpop.permute.xlu0 %4011
        %4015 = vset.pattern.permute.xlu0 0
        %4016 = vperm.xlu0 %4015, %v296
        %v4017 = vpop.permute.xlu0 %4016
        %4020 = vset.pattern.permute.xlu0 0
        %4021 = vperm.xlu0 %4020, %v297
        %v4022 = vpop.permute.xlu0 %4021
        %4025 = vset.pattern.permute.xlu0 0
        %4026 = vperm.xlu0 %4025, %v298
        %v4027 = vpop.permute.xlu0 %4026
        %4030 = vset.pattern.permute.xlu0 0
        %4031 = vperm.xlu0 %4030, %v299
        %v4032 = vpop.permute.xlu0 %4031
        %4035 = vset.pattern.permute.xlu0 0
        %4036 = vperm.xlu0 %4035, %v300
        %v4037 = vpop.permute.xlu0 %4036
        %4040 = vset.pattern.permute.xlu0 0
        %4041 = vperm.xlu0 %4040, %v301
        %v4042 = vpop.permute.xlu0 %4041
        %4045 = vset.pattern.permute.xlu0 0
        %4046 = vperm.xlu0 %4045, %v302
        %v4047 = vpop.permute.xlu0 %4046
        %4050 = vset.pattern.permute.xlu0 0
        %4051 = vperm.xlu0 %4050, %v303
        %v4052 = vpop.permute.xlu0 %4051
        %4055 = vset.pattern.permute.xlu0 0
        %4056 = vperm.xlu0 %4055, %v304
        %v4057 = vpop.permute.xlu0 %4056
        %4060 = vset.pattern.permute.xlu0 0
        %4061 = vperm.xlu0 %4060, %v305
        %v4062 = vpop.permute.xlu0 %4061
        %4065 = vset.pattern.permute.xlu0 0
        %4066 = vperm.xlu0 %4065, %v306
        %v4067 = vpop.permute.xlu0 %4066
        %4070 = vset.pattern.permute.xlu0 0
        %4071 = vperm.xlu0 %4070, %v307
        %v4072 = vpop.permute.xlu0 %4071
        %4075 = vset.pattern.permute.xlu0 0
        %4076 = vperm.xlu0 %4075, %v308
        %v4077 = vpop.permute.xlu0 %4076
        %4080 = vset.pattern.permute.xlu0 0
        %4081 = vperm.xlu0 %4080, %v309
        %v4082 = vpop.permute.xlu0 %4081
        %4085 = vset.pattern.permute.xlu0 0
        %4086 = vperm.xlu0 %4085, %v310
        %v4087 = vpop.permute.xlu0 %4086
        %4090 = vset.pattern.permute.xlu0 0
        %4091 = vperm.xlu0 %4090, %v311
        %v4092 = vpop.permute.xlu0 %4091
        %4095 = vset.pattern.permute.xlu0 0
        %4096 = vperm.xlu0 %4095, %v312
        %v4097 = vpop.permute.xlu0 %4096
        %4100 = vset.pattern.permute.xlu0 0
        %4101 = vperm.xlu0 %4100, %v313
        %v4102 = vpop.permute.xlu0 %4101
        %4105 = vset.pattern.permute.xlu0 0
        %4106 = vperm.xlu0 %4105, %v314
        %v4107 = vpop.permute.xlu0 %4106
        %4110 = vset.pattern.permute.xlu0 0
        %4111 = vperm.xlu0 %4110, %v315
        %v4112 = vpop.permute.xlu0 %4111
        %4115 = vset.pattern.permute.xlu0 0
        %4116 = vperm.xlu0 %4115, %v316
        %v4117 = vpop.permute.xlu0 %4116
        %4120 = vset.pattern.permute.xlu0 0
        %4121 = vperm.xlu0 %4120, %v317
        %v4122 = vpop.permute.xlu0 %4121
        %4125 = vset.pattern.permute.xlu0 0
        %4126 = vperm.xlu0 %4125, %v318
        %v4127 = vpop.permute.xlu0 %4126
        %4130 = vset.pattern.permute.xlu0 0
        %4131 = vperm.xlu0 %4130, %v319
        %v4132 = vpop.permute.xlu0 %4131
        %4135 = vset.pattern.permute.xlu0 0
        %4136 = vperm.xlu0 %4135, %v320
        %v4137 = vpop.permute.xlu0 %4136
        %4140 = vset.pattern.permute.xlu0 0
        %4141 = vperm.xlu0 %4140, %v321
        %v4142 = vpop.permute.xlu0 %4141
        %4145 = vset.pattern.permute.xlu0 0
        %4146 = vperm.xlu0 %4145, %v322
        %v4147 = vpop.permute.xlu0 %4146
        %4150 = vset.pattern.permute.xlu0 0
        %4151 = vperm.xlu0 %4150, %v323
        %v4152 = vpop.permute.xlu0 %4151
        %4155 = vset.pattern.permute.xlu0 0
        %4156 = vperm.xlu0 %4155, %v324
        %v4157 = vpop.permute.xlu0 %4156
        %4160 = vset.pattern.permute.xlu0 0
        %4161 = vperm.xlu0 %4160, %v325
        %v4162 = vpop.permute.xlu0 %4161
        %4165 = vset.pattern.permute.xlu0 0
        %4166 = vperm.xlu0 %4165, %v326
        %v4167 = vpop.permute.xlu0 %4166
        %4170 = vset.pattern.permute.xlu0 0
        %4171 = vperm.xlu0 %4170, %v327
        %v4172 = vpop.permute.xlu0 %4171
        %4175 = vset.pattern.permute.xlu0 0
        %4176 = vperm.xlu0 %4175, %v328
        %v4177 = vpop.permute.xlu0 %4176
        %4180 = vset.pattern.permute.xlu0 0
        %4181 = vperm.xlu0 %4180, %v329
        %v4182 = vpop.permute.xlu0 %4181
        %4185 = vset.pattern.permute.xlu0 0
        %4186 = vperm.xlu0 %4185, %v330
        %v4187 = vpop.permute.xlu0 %4186
        %4190 = vset.pattern.permute.xlu0 0
        %4191 = vperm.xlu0 %4190, %v331
        %v4192 = vpop.permute.xlu0 %4191
        %4195 = vset.pattern.permute.xlu0 0
        %4196 = vperm.xlu0 %4195, %v332
        %v4197 = vpop.permute.xlu0 %4196
        %4200 = vset.pattern.permute.xlu0 0
        %4201 = vperm.xlu0 %4200, %v333
        %v4202 = vpop.permute.xlu0 %4201
        %4205 = vset.pattern.permute.xlu0 0
        %4206 = vperm.xlu0 %4205, %v334
        %v4207 = vpop.permute.xlu0 %4206
        %4210 = vset.pattern.permute.xlu0 0
        %4211 = vperm.xlu0 %4210, %v335
        %v4212 = vpop.permute.xlu0 %4211
        %4215 = vset.pattern.permute.xlu0 0
        %4216 = vperm.xlu0 %4215, %v336
        %v4217 = vpop.permute.xlu0 %4216
        %4220 = vset.pattern.permute.xlu0 0
        %4221 = vperm.xlu0 %4220, %v337
        %v4222 = vpop.permute.xlu0 %4221
        %4225 = vset.pattern.permute.xlu0 0
        %4226 = vperm.xlu0 %4225, %v338
        %v4227 = vpop.permute.xlu0 %4226
        %4230 = vset.pattern.permute.xlu0 0
        %4231 = vperm.xlu0 %4230, %v339
        %v4232 = vpop.permute.xlu0 %4231
        %4235 = vset.pattern.permute.xlu0 0
        %4236 = vperm.xlu0 %4235, %v340
        %v4237 = vpop.permute.xlu0 %4236
        %4240 = vset.pattern.permute.xlu0 0
        %4241 = vperm.xlu0 %4240, %v341
        %v4242 = vpop.permute.xlu0 %4241
        %4245 = vset.pattern.permute.xlu0 0
        %4246 = vperm.xlu0 %4245, %v342
        %v4247 = vpop.permute.xlu0 %4246
        %4250 = vset.pattern.permute.xlu0 0
        %4251 = vperm.xlu0 %4250, %v343
        %v4252 = vpop.permute.xlu0 %4251
        %4255 = vset.pattern.permute.xlu0 0
        %4256 = vperm.xlu0 %4255, %v344
        %v4257 = vpop.permute.xlu0 %4256
        %4260 = vset.pattern.permute.xlu0 0
        %4261 = vperm.xlu0 %4260, %v345
        %v4262 = vpop.permute.xlu0 %4261
        %4265 = vset.pattern.permute.xlu0 0
        %4266 = vperm.xlu0 %4265, %v346
        %v4267 = vpop.permute.xlu0 %4266
        %4270 = vset.pattern.permute.xlu0 0
        %4271 = vperm.xlu0 %4270, %v347
        %v4272 = vpop.permute.xlu0 %4271
        %4275 = vset.pattern.permute.xlu0 0
        %4276 = vperm.xlu0 %4275, %v348
        %v4277 = vpop.permute.xlu0 %4276
        %4280 = vset.pattern.permute.xlu0 0
        %4281 = vperm.xlu0 %4280, %v349
        %v4282 = vpop.permute.xlu0 %4281
        %4285 = vset.pattern.permute.xlu0 0
        %4286 = vperm.xlu0 %4285, %v350
        %v4287 = vpop.permute.xlu0 %4286
        %4290 = vset.pattern.permute.xlu0 0
        %4291 = vperm.xlu0 %4290, %v351
        %v4292 = vpop.permute.xlu0 %4291
        %4295 = vset.pattern.permute.xlu0 0
        %4296 = vperm.xlu0 %4295, %v352
        %v4297 = vpop.permute.xlu0 %4296
        %4300 = vset.pattern.permute.xlu0 0
        %4301 = vperm.xlu0 %4300, %v353
        %v4302 = vpop.permute.xlu0 %4301
        %4305 = vset.pattern.permute.xlu0 0
        %4306 = vperm.xlu0 %4305, %v354
        %v4307 = vpop.permute.xlu0 %4306
        %4310 = vset.pattern.permute.xlu0 0
        %4311 = vperm.xlu0 %4310, %v355
        %v4312 = vpop.permute.xlu0 %4311
        %4315 = vset.pattern.permute.xlu0 0
        %4316 = vperm.xlu0 %4315, %v356
        %v4317 = vpop.permute.xlu0 %4316
        %4320 = vset.pattern.permute.xlu0 0
        %4321 = vperm.xlu0 %4320, %v357
        %v4322 = vpop.permute.xlu0 %4321
        %4325 = vset.pattern.permute.xlu0 0
        %4326 = vperm.xlu0 %4325, %v358
        %v4327 = vpop.permute.xlu0 %4326
        %4330 = vset.pattern.permute.xlu0 0
        %4331 = vperm.xlu0 %4330, %v359
        %v4332 = vpop.permute.xlu0 %4331
        %4335 = vset.pattern.permute.xlu0 0
        %4336 = vperm.xlu0 %4335, %v360
        %v4337 = vpop.permute.xlu0 %4336
        %4340 = vset.pattern.permute.xlu0 0
        %4341 = vperm.xlu0 %4340, %v361
        %v4342 = vpop.permute.xlu0 %4341
        %4345 = vset.pattern.permute.xlu0 0
        %4346 = vperm.xlu0 %4345, %v362
        %v4347 = vpop.permute.xlu0 %4346
        %4350 = vset.pattern.permute.xlu0 0
        %4351 = vperm.xlu0 %4350, %v363
        %v4352 = vpop.permute.xlu0 %4351
        %4355 = vset.pattern.permute.xlu0 0
        %4356 = vperm.xlu0 %4355, %v364
        %v4357 = vpop.permute.xlu0 %4356
        %4360 = vset.pattern.permute.xlu0 0
        %4361 = vperm.xlu0 %4360, %v365
        %v4362 = vpop.permute.xlu0 %4361
        %4365 = vset.pattern.permute.xlu0 0
        %4366 = vperm.xlu0 %4365, %v366
        %v4367 = vpop.permute.xlu0 %4366
        %4370 = vset.pattern.permute.xlu0 0
        %4371 = vperm.xlu0 %4370, %v367
        %v4372 = vpop.permute.xlu0 %4371
        %4375 = vset.pattern.permute.xlu0 0
        %4376 = vperm.xlu0 %4375, %v368
        %v4377 = vpop.permute.xlu0 %4376
        %4380 = vset.pattern.permute.xlu0 0
        %4381 = vperm.xlu0 %4380, %v369
        %v4382 = vpop.permute.xlu0 %4381
        %4385 = vset.pattern.permute.xlu0 0
        %4386 = vperm.xlu0 %4385, %v370
        %v4387 = vpop.permute.xlu0 %4386
        %4390 = vset.pattern.permute.xlu0 0
        %4391 = vperm.xlu0 %4390, %v371
        %v4392 = vpop.permute.xlu0 %4391
        %4395 = vset.pattern.permute.xlu0 0
        %4396 = vperm.xlu0 %4395, %v372
        %v4397 = vpop.permute.xlu0 %4396
        %v4399 = vadd.f32 %v3631, %v3762
        %v4400 = vadd.f32 %v3632, %v3767
        %v4401 = vadd.f32 %v3633, %v3772
        %v4402 = vadd.f32 %v3634, %v3777
        %v4403 = vadd.f32 %v3635, %v3782
        %v4404 = vadd.f32 %v3636, %v3787
        %v4405 = vadd.f32 %v3637, %v3792
        %v4406 = vadd.f32 %v3638, %v3797
        %v4407 = vadd.f32 %v3639, %v3802
        %v4408 = vadd.f32 %v3640, %v3807
        %v4409 = vadd.f32 %v3641, %v3812
        %v4410 = vadd.f32 %v3642, %v3817
        %v4411 = vadd.f32 %v3643, %v3822
        %v4412 = vadd.f32 %v3644, %v3827
        %v4413 = vadd.f32 %v3645, %v3832
        %v4414 = vadd.f32 %v3646, %v3837
        %v4415 = vadd.f32 %v3647, %v3842
        %v4416 = vadd.f32 %v3648, %v3847
        %v4417 = vadd.f32 %v3649, %v3852
        %v4418 = vadd.f32 %v3650, %v3857
        %v4419 = vadd.f32 %v3651, %v3862
        %v4420 = vadd.f32 %v3652, %v3867
        %v4421 = vadd.f32 %v3653, %v3872
        %v4422 = vadd.f32 %v3654, %v3877
        %v4423 = vadd.f32 %v3655, %v3882
        %v4424 = vadd.f32 %v3656, %v3887
        %v4425 = vadd.f32 %v3657, %v3892
        %v4426 = vadd.f32 %v3658, %v3897
        %v4427 = vadd.f32 %v3659, %v3902
        %v4428 = vadd.f32 %v3660, %v3907
        %v4429 = vadd.f32 %v3661, %v3912
        %v4430 = vadd.f32 %v3662, %v3917
        %v4431 = vadd.f32 %v3663, %v3922
        %v4432 = vadd.f32 %v3664, %v3927
        %v4433 = vadd.f32 %v3665, %v3932
        %v4434 = vadd.f32 %v3666, %v3937
        %v4435 = vadd.f32 %v3667, %v3942
        %v4436 = vadd.f32 %v3668, %v3947
        %v4437 = vadd.f32 %v3669, %v3952
        %v4438 = vadd.f32 %v3670, %v3957
        %v4439 = vadd.f32 %v3671, %v3962
        %v4440 = vadd.f32 %v3672, %v3967
        %v4441 = vadd.f32 %v3673, %v3972
        %v4442 = vadd.f32 %v3674, %v3977
        %v4443 = vadd.f32 %v3675, %v3982
        %v4444 = vadd.f32 %v3676, %v3987
        %v4445 = vadd.f32 %v3677, %v3992
        %v4446 = vadd.f32 %v3678, %v3997
        %v4447 = vadd.f32 %v3679, %v4002
        %v4448 = vadd.f32 %v3680, %v4007
        %v4449 = vadd.f32 %v3681, %v4012
        %v4450 = vadd.f32 %v3682, %v4017
        %v4451 = vadd.f32 %v3683, %v4022
        %v4452 = vadd.f32 %v3684, %v4027
        %v4453 = vadd.f32 %v3685, %v4032
        %v4454 = vadd.f32 %v3686, %v4037
        %v4455 = vadd.f32 %v3687, %v4042
        %v4456 = vadd.f32 %v3688, %v4047
        %v4457 = vadd.f32 %v3689, %v4052
        %v4458 = vadd.f32 %v3690, %v4057
        %v4459 = vadd.f32 %v3691, %v4062
        %v4460 = vadd.f32 %v3692, %v4067
        %v4461 = vadd.f32 %v3693, %v4072
        %v4462 = vadd.f32 %v3694, %v4077
        %v4463 = vadd.f32 %v3695, %v4082
        %v4464 = vadd.f32 %v3696, %v4087
        %v4465 = vadd.f32 %v3697, %v4092
        %v4466 = vadd.f32 %v3698, %v4097
        %v4467 = vadd.f32 %v3699, %v4102
        %v4468 = vadd.f32 %v3700, %v4107
        %v4469 = vadd.f32 %v3701, %v4112
        %v4470 = vadd.f32 %v3702, %v4117
        %v4471 = vadd.f32 %v3703, %v4122
        %v4472 = vadd.f32 %v3704, %v4127
        %v4473 = vadd.f32 %v3705, %v4132
        %v4474 = vadd.f32 %v3706, %v4137
        %v4475 = vadd.f32 %v3707, %v4142
        %v4476 = vadd.f32 %v3708, %v4147
        %v4477 = vadd.f32 %v3709, %v4152
        %v4478 = vadd.f32 %v3710, %v4157
        %v4479 = vadd.f32 %v3711, %v4162
        %v4480 = vadd.f32 %v3712, %v4167
        %v4481 = vadd.f32 %v3713, %v4172
        %v4482 = vadd.f32 %v3714, %v4177
        %v4483 = vadd.f32 %v3715, %v4182
        %v4484 = vadd.f32 %v3716, %v4187
        %v4485 = vadd.f32 %v3717, %v4192
        %v4486 = vadd.f32 %v3718, %v4197
        %v4487 = vadd.f32 %v3719, %v4202
        %v4488 = vadd.f32 %v3720, %v4207
        %v4489 = vadd.f32 %v3721, %v4212
        %v4490 = vadd.f32 %v3722, %v4217
        %v4491 = vadd.f32 %v3723, %v4222
        %v4492 = vadd.f32 %v3724, %v4227
        %v4493 = vadd.f32 %v3725, %v4232
        %v4494 = vadd.f32 %v3726, %v4237
        %v4495 = vadd.f32 %v3727, %v4242
        %v4496 = vadd.f32 %v3728, %v4247
        %v4497 = vadd.f32 %v3729, %v4252
        %v4498 = vadd.f32 %v3730, %v4257
        %v4499 = vadd.f32 %v3731, %v4262
        %v4500 = vadd.f32 %v3732, %v4267
        %v4501 = vadd.f32 %v3733, %v4272
        %v4502 = vadd.f32 %v3734, %v4277
        %v4503 = vadd.f32 %v3735, %v4282
        %v4504 = vadd.f32 %v3736, %v4287
        %v4505 = vadd.f32 %v3737, %v4292
        %v4506 = vadd.f32 %v3738, %v4297
        %v4507 = vadd.f32 %v3739, %v4302
        %v4508 = vadd.f32 %v3740, %v4307
        %v4509 = vadd.f32 %v3741, %v4312
        %v4510 = vadd.f32 %v3742, %v4317
        %v4511 = vadd.f32 %v3743, %v4322
        %v4512 = vadd.f32 %v3744, %v4327
        %v4513 = vadd.f32 %v3745, %v4332
        %v4514 = vadd.f32 %v3746, %v4337
        %v4515 = vadd.f32 %v3747, %v4342
        %v4516 = vadd.f32 %v3748, %v4347
        %v4517 = vadd.f32 %v3749, %v4352
        %v4518 = vadd.f32 %v3750, %v4357
        %v4519 = vadd.f32 %v3751, %v4362
        %v4520 = vadd.f32 %v3752, %v4367
        %v4521 = vadd.f32 %v3753, %v4372
        %v4522 = vadd.f32 %v3754, %v4377
        %v4523 = vadd.f32 %v3755, %v4382
        %v4524 = vadd.f32 %v3756, %v4387
        %v4525 = vadd.f32 %v3757, %v4392
        %v4526 = vadd.f32 %v3758, %v4397
        %v4527 = vmax.f32 %v4399, 0.0
        %v4528 = vmax.f32 %v4400, 0.0
        %v4529 = vmax.f32 %v4401, 0.0
        %v4530 = vmax.f32 %v4402, 0.0
        %v4531 = vmax.f32 %v4403, 0.0
        %v4532 = vmax.f32 %v4404, 0.0
        %v4533 = vmax.f32 %v4405, 0.0
        %v4534 = vmax.f32 %v4406, 0.0
        %v4535 = vmax.f32 %v4407, 0.0
        %v4536 = vmax.f32 %v4408, 0.0
        %v4537 = vmax.f32 %v4409, 0.0
        %v4538 = vmax.f32 %v4410, 0.0
        %v4539 = vmax.f32 %v4411, 0.0
        %v4540 = vmax.f32 %v4412, 0.0
        %v4541 = vmax.f32 %v4413, 0.0
        %v4542 = vmax.f32 %v4414, 0.0
        %v4543 = vmax.f32 %v4415, 0.0
        %v4544 = vmax.f32 %v4416, 0.0
        %v4545 = vmax.f32 %v4417, 0.0
        %v4546 = vmax.f32 %v4418, 0.0
        %v4547 = vmax.f32 %v4419, 0.0
        %v4548 = vmax.f32 %v4420, 0.0
        %v4549 = vmax.f32 %v4421, 0.0
        %v4550 = vmax.f32 %v4422, 0.0
        %v4551 = vmax.f32 %v4423, 0.0
        %v4552 = vmax.f32 %v4424, 0.0
        %v4553 = vmax.f32 %v4425, 0.0
        %v4554 = vmax.f32 %v4426, 0.0
        %v4555 = vmax.f32 %v4427, 0.0
        %v4556 = vmax.f32 %v4428, 0.0
        %v4557 = vmax.f32 %v4429, 0.0
        %v4558 = vmax.f32 %v4430, 0.0
        %v4559 = vmax.f32 %v4431, 0.0
        %v4560 = vmax.f32 %v4432, 0.0
        %v4561 = vmax.f32 %v4433, 0.0
        %v4562 = vmax.f32 %v4434, 0.0
        %v4563 = vmax.f32 %v4435, 0.0
        %v4564 = vmax.f32 %v4436, 0.0
        %v4565 = vmax.f32 %v4437, 0.0
        %v4566 = vmax.f32 %v4438, 0.0
        %v4567 = vmax.f32 %v4439, 0.0
        %v4568 = vmax.f32 %v4440, 0.0
        %v4569 = vmax.f32 %v4441, 0.0
        %v4570 = vmax.f32 %v4442, 0.0
        %v4571 = vmax.f32 %v4443, 0.0
        %v4572 = vmax.f32 %v4444, 0.0
        %v4573 = vmax.f32 %v4445, 0.0
        %v4574 = vmax.f32 %v4446, 0.0
        %v4575 = vmax.f32 %v4447, 0.0
        %v4576 = vmax.f32 %v4448, 0.0
        %v4577 = vmax.f32 %v4449, 0.0
        %v4578 = vmax.f32 %v4450, 0.0
        %v4579 = vmax.f32 %v4451, 0.0
        %v4580 = vmax.f32 %v4452, 0.0
        %v4581 = vmax.f32 %v4453, 0.0
        %v4582 = vmax.f32 %v4454, 0.0
        %v4583 = vmax.f32 %v4455, 0.0
        %v4584 = vmax.f32 %v4456, 0.0
        %v4585 = vmax.f32 %v4457, 0.0
        %v4586 = vmax.f32 %v4458, 0.0
        %v4587 = vmax.f32 %v4459, 0.0
        %v4588 = vmax.f32 %v4460, 0.0
        %v4589 = vmax.f32 %v4461, 0.0
        %v4590 = vmax.f32 %v4462, 0.0
        %v4591 = vmax.f32 %v4463, 0.0
        %v4592 = vmax.f32 %v4464, 0.0
        %v4593 = vmax.f32 %v4465, 0.0
        %v4594 = vmax.f32 %v4466, 0.0
        %v4595 = vmax.f32 %v4467, 0.0
        %v4596 = vmax.f32 %v4468, 0.0
        %v4597 = vmax.f32 %v4469, 0.0
        %v4598 = vmax.f32 %v4470, 0.0
        %v4599 = vmax.f32 %v4471, 0.0
        %v4600 = vmax.f32 %v4472, 0.0
        %v4601 = vmax.f32 %v4473, 0.0
        %v4602 = vmax.f32 %v4474, 0.0
        %v4603 = vmax.f32 %v4475, 0.0
        %v4604 = vmax.f32 %v4476, 0.0
        %v4605 = vmax.f32 %v4477, 0.0
        %v4606 = vmax.f32 %v4478, 0.0
        %v4607 = vmax.f32 %v4479, 0.0
        %v4608 = vmax.f32 %v4480, 0.0
        %v4609 = vmax.f32 %v4481, 0.0
        %v4610 = vmax.f32 %v4482, 0.0
        %v4611 = vmax.f32 %v4483, 0.0
        %v4612 = vmax.f32 %v4484, 0.0
        %v4613 = vmax.f32 %v4485, 0.0
        %v4614 = vmax.f32 %v4486, 0.0
        %v4615 = vmax.f32 %v4487, 0.0
        %v4616 = vmax.f32 %v4488, 0.0
        %v4617 = vmax.f32 %v4489, 0.0
        %v4618 = vmax.f32 %v4490, 0.0
        %v4619 = vmax.f32 %v4491, 0.0
        %v4620 = vmax.f32 %v4492, 0.0
        %v4621 = vmax.f32 %v4493, 0.0
        %v4622 = vmax.f32 %v4494, 0.0
        %v4623 = vmax.f32 %v4495, 0.0
        %v4624 = vmax.f32 %v4496, 0.0
        %v4625 = vmax.f32 %v4497, 0.0
        %v4626 = vmax.f32 %v4498, 0.0
        %v4627 = vmax.f32 %v4499, 0.0
        %v4628 = vmax.f32 %v4500, 0.0
        %v4629 = vmax.f32 %v4501, 0.0
        %v4630 = vmax.f32 %v4502, 0.0
        %v4631 = vmax.f32 %v4503, 0.0
        %v4632 = vmax.f32 %v4504, 0.0
        %v4633 = vmax.f32 %v4505, 0.0
        %v4634 = vmax.f32 %v4506, 0.0
        %v4635 = vmax.f32 %v4507, 0.0
        %v4636 = vmax.f32 %v4508, 0.0
        %v4637 = vmax.f32 %v4509, 0.0
        %v4638 = vmax.f32 %v4510, 0.0
        %v4639 = vmax.f32 %v4511, 0.0
        %v4640 = vmax.f32 %v4512, 0.0
        %v4641 = vmax.f32 %v4513, 0.0
        %v4642 = vmax.f32 %v4514, 0.0
        %v4643 = vmax.f32 %v4515, 0.0
        %v4644 = vmax.f32 %v4516, 0.0
        %v4645 = vmax.f32 %v4517, 0.0
        %v4646 = vmax.f32 %v4518, 0.0
        %v4647 = vmax.f32 %v4519, 0.0
        %v4648 = vmax.f32 %v4520, 0.0
        %v4649 = vmax.f32 %v4521, 0.0
        %v4650 = vmax.f32 %v4522, 0.0
        %v4651 = vmax.f32 %v4523, 0.0
        %v4652 = vmax.f32 %v4524, 0.0
        %v4653 = vmax.f32 %v4525, 0.0
        %v4654 = vmax.f32 %v4526, 0.0
        %v4655 = vpack.c.bf16 %v4528, %v4527
        %v4656 = vpack.c.bf16 %v4530, %v4529
        %v4657 = vpack.c.bf16 %v4532, %v4531
        %v4658 = vpack.c.bf16 %v4534, %v4533
        %v4659 = vpack.c.bf16 %v4536, %v4535
        %v4660 = vpack.c.bf16 %v4538, %v4537
        %v4661 = vpack.c.bf16 %v4540, %v4539
        %v4662 = vpack.c.bf16 %v4542, %v4541
        %v4663 = vpack.c.bf16 %v4544, %v4543
        %v4664 = vpack.c.bf16 %v4546, %v4545
        %v4665 = vpack.c.bf16 %v4548, %v4547
        %v4666 = vpack.c.bf16 %v4550, %v4549
        %v4667 = vpack.c.bf16 %v4552, %v4551
        %v4668 = vpack.c.bf16 %v4554, %v4553
        %v4669 = vpack.c.bf16 %v4556, %v4555
        %v4670 = vpack.c.bf16 %v4558, %v4557
        %v4671 = vpack.c.bf16 %v4560, %v4559
        %v4672 = vpack.c.bf16 %v4562, %v4561
        %v4673 = vpack.c.bf16 %v4564, %v4563
        %v4674 = vpack.c.bf16 %v4566, %v4565
        %v4675 = vpack.c.bf16 %v4568, %v4567
        %v4676 = vpack.c.bf16 %v4570, %v4569
        %v4677 = vpack.c.bf16 %v4572, %v4571
        %v4678 = vpack.c.bf16 %v4574, %v4573
        %v4679 = vpack.c.bf16 %v4576, %v4575
        %v4680 = vpack.c.bf16 %v4578, %v4577
        %v4681 = vpack.c.bf16 %v4580, %v4579
        %v4682 = vpack.c.bf16 %v4582, %v4581
        %v4683 = vpack.c.bf16 %v4584, %v4583
        %v4684 = vpack.c.bf16 %v4586, %v4585
        %v4685 = vpack.c.bf16 %v4588, %v4587
        %v4686 = vpack.c.bf16 %v4590, %v4589
        %v4687 = vpack.c.bf16 %v4592, %v4591
        %v4688 = vpack.c.bf16 %v4594, %v4593
        %v4689 = vpack.c.bf16 %v4596, %v4595
        %v4690 = vpack.c.bf16 %v4598, %v4597
        %v4691 = vpack.c.bf16 %v4600, %v4599
        %v4692 = vpack.c.bf16 %v4602, %v4601
        %v4693 = vpack.c.bf16 %v4604, %v4603
        %v4694 = vpack.c.bf16 %v4606, %v4605
        %v4695 = vpack.c.bf16 %v4608, %v4607
        %v4696 = vpack.c.bf16 %v4610, %v4609
        %v4697 = vpack.c.bf16 %v4612, %v4611
        %v4698 = vpack.c.bf16 %v4614, %v4613
        %v4699 = vpack.c.bf16 %v4616, %v4615
        %v4700 = vpack.c.bf16 %v4618, %v4617
        %v4701 = vpack.c.bf16 %v4620, %v4619
        %v4702 = vpack.c.bf16 %v4622, %v4621
        %v4703 = vpack.c.bf16 %v4624, %v4623
        %v4704 = vpack.c.bf16 %v4626, %v4625
        %v4705 = vpack.c.bf16 %v4628, %v4627
        %v4706 = vpack.c.bf16 %v4630, %v4629
        %v4707 = vpack.c.bf16 %v4632, %v4631
        %v4708 = vpack.c.bf16 %v4634, %v4633
        %v4709 = vpack.c.bf16 %v4636, %v4635
        %v4710 = vpack.c.bf16 %v4638, %v4637
        %v4711 = vpack.c.bf16 %v4640, %v4639
        %v4712 = vpack.c.bf16 %v4642, %v4641
        %v4713 = vpack.c.bf16 %v4644, %v4643
        %v4714 = vpack.c.bf16 %v4646, %v4645
        %v4715 = vpack.c.bf16 %v4648, %v4647
        %v4716 = vpack.c.bf16 %v4650, %v4649
        %v4717 = vpack.c.bf16 %v4652, %v4651
        %v4718 = vpack.c.bf16 %v4654, %v4653
        %v4719 = vld [vmem:[%s3] sm:$0xff]
        %v4720 = vld [vmem:[%s3 + $0x8] sm:$0xff]
        %v4721 = vld [vmem:[%s3 + $0x10] sm:$0xff]
        %v4722 = vld [vmem:[%s3 + $0x18] sm:$0xff]
        %v4723 = vld [vmem:[%s3 + $0x20] sm:$0xff]
        %v4724 = vld [vmem:[%s3 + $0x28] sm:$0xff]
        %v4725 = vld [vmem:[%s3 + $0x30] sm:$0xff]
        %v4726 = vld [vmem:[%s3 + $0x38] sm:$0xff]
        %v4727 = vld [vmem:[%s3 + $0x40] sm:$0xff]
        %v4728 = vld [vmem:[%s3 + $0x48] sm:$0xff]
        %v4729 = vld [vmem:[%s3 + $0x50] sm:$0xff]
        %v4730 = vld [vmem:[%s3 + $0x58] sm:$0xff]
        %v4731 = vld [vmem:[%s3 + $0x60] sm:$0xff]
        %v4732 = vld [vmem:[%s3 + $0x68] sm:$0xff]
        %v4733 = vld [vmem:[%s3 + $0x70] sm:$0xff]
        %v4734 = vld [vmem:[%s3 + $0x78] sm:$0xff]
        %v4735 = vld [vmem:[%s3 + $0x80] sm:$0xff]
        %v4736 = vld [vmem:[%s3 + $0x88] sm:$0xff]
        %v4737 = vld [vmem:[%s3 + $0x90] sm:$0xff]
        %v4738 = vld [vmem:[%s3 + $0x98] sm:$0xff]
        %v4739 = vld [vmem:[%s3 + $0xa0] sm:$0xff]
        %v4740 = vld [vmem:[%s3 + $0xa8] sm:$0xff]
        %v4741 = vld [vmem:[%s3 + $0xb0] sm:$0xff]
        %v4742 = vld [vmem:[%s3 + $0xb8] sm:$0xff]
        %v4743 = vld [vmem:[%s3 + $0xc0] sm:$0xff]
        %v4744 = vld [vmem:[%s3 + $0xc8] sm:$0xff]
        %v4745 = vld [vmem:[%s3 + $0xd0] sm:$0xff]
        %v4746 = vld [vmem:[%s3 + $0xd8] sm:$0xff]
        %v4747 = vld [vmem:[%s3 + $0xe0] sm:$0xff]
        %v4748 = vld [vmem:[%s3 + $0xe8] sm:$0xff]
        %v4749 = vld [vmem:[%s3 + $0xf0] sm:$0xff]
        %v4750 = vld [vmem:[%s3 + $0xf8] sm:$0xff]
        %v4751 = vld [vmem:[%s3 + $0x100] sm:$0xff]
        %v4752 = vld [vmem:[%s3 + $0x108] sm:$0xff]
        %v4753 = vld [vmem:[%s3 + $0x110] sm:$0xff]
        %v4754 = vld [vmem:[%s3 + $0x118] sm:$0xff]
        %v4755 = vld [vmem:[%s3 + $0x120] sm:$0xff]
        %v4756 = vld [vmem:[%s3 + $0x128] sm:$0xff]
        %v4757 = vld [vmem:[%s3 + $0x130] sm:$0xff]
        %v4758 = vld [vmem:[%s3 + $0x138] sm:$0xff]
        %v4759 = vld [vmem:[%s3 + $0x140] sm:$0xff]
        %v4760 = vld [vmem:[%s3 + $0x148] sm:$0xff]
        %v4761 = vld [vmem:[%s3 + $0x150] sm:$0xff]
        %v4762 = vld [vmem:[%s3 + $0x158] sm:$0xff]
        %v4763 = vld [vmem:[%s3 + $0x160] sm:$0xff]
        %v4764 = vld [vmem:[%s3 + $0x168] sm:$0xff]
        %v4765 = vld [vmem:[%s3 + $0x170] sm:$0xff]
        %v4766 = vld [vmem:[%s3 + $0x178] sm:$0xff]
        %v4767 = vld [vmem:[%s3 + $0x180] sm:$0xff]
        %v4768 = vld [vmem:[%s3 + $0x188] sm:$0xff]
        %v4769 = vld [vmem:[%s3 + $0x190] sm:$0xff]
        %v4770 = vld [vmem:[%s3 + $0x198] sm:$0xff]
        %v4771 = vld [vmem:[%s3 + $0x1a0] sm:$0xff]
        %v4772 = vld [vmem:[%s3 + $0x1a8] sm:$0xff]
        %v4773 = vld [vmem:[%s3 + $0x1b0] sm:$0xff]
        %v4774 = vld [vmem:[%s3 + $0x1b8] sm:$0xff]
        %v4775 = vld [vmem:[%s3 + $0x1c0] sm:$0xff]
        %v4776 = vld [vmem:[%s3 + $0x1c8] sm:$0xff]
        %v4777 = vld [vmem:[%s3 + $0x1d0] sm:$0xff]
        %v4778 = vld [vmem:[%s3 + $0x1d8] sm:$0xff]
        %v4779 = vld [vmem:[%s3 + $0x1e0] sm:$0xff]
        %v4780 = vld [vmem:[%s3 + $0x1e8] sm:$0xff]
        %v4781 = vld [vmem:[%s3 + $0x1f0] sm:$0xff]
        %v4782 = vld [vmem:[%s3 + $0x1f8] sm:$0xff]
        %v4783 = vld [vmem:[%s3 + $0x200] sm:$0xff]
        %v4784 = vld [vmem:[%s3 + $0x208] sm:$0xff]
        %v4785 = vld [vmem:[%s3 + $0x210] sm:$0xff]
        %v4786 = vld [vmem:[%s3 + $0x218] sm:$0xff]
        %v4787 = vld [vmem:[%s3 + $0x220] sm:$0xff]
        %v4788 = vld [vmem:[%s3 + $0x228] sm:$0xff]
        %v4789 = vld [vmem:[%s3 + $0x230] sm:$0xff]
        %v4790 = vld [vmem:[%s3 + $0x238] sm:$0xff]
        %v4791 = vld [vmem:[%s3 + $0x240] sm:$0xff]
        %v4792 = vld [vmem:[%s3 + $0x248] sm:$0xff]
        %v4793 = vld [vmem:[%s3 + $0x250] sm:$0xff]
        %v4794 = vld [vmem:[%s3 + $0x258] sm:$0xff]
        %v4795 = vld [vmem:[%s3 + $0x260] sm:$0xff]
        %v4796 = vld [vmem:[%s3 + $0x268] sm:$0xff]
        %v4797 = vld [vmem:[%s3 + $0x270] sm:$0xff]
        %v4798 = vld [vmem:[%s3 + $0x278] sm:$0xff]
        %v4799 = vld [vmem:[%s3 + $0x280] sm:$0xff]
        %v4800 = vld [vmem:[%s3 + $0x288] sm:$0xff]
        %v4801 = vld [vmem:[%s3 + $0x290] sm:$0xff]
        %v4802 = vld [vmem:[%s3 + $0x298] sm:$0xff]
        %v4803 = vld [vmem:[%s3 + $0x2a0] sm:$0xff]
        %v4804 = vld [vmem:[%s3 + $0x2a8] sm:$0xff]
        %v4805 = vld [vmem:[%s3 + $0x2b0] sm:$0xff]
        %v4806 = vld [vmem:[%s3 + $0x2b8] sm:$0xff]
        %v4807 = vld [vmem:[%s3 + $0x2c0] sm:$0xff]
        %v4808 = vld [vmem:[%s3 + $0x2c8] sm:$0xff]
        %v4809 = vld [vmem:[%s3 + $0x2d0] sm:$0xff]
        %v4810 = vld [vmem:[%s3 + $0x2d8] sm:$0xff]
        %v4811 = vld [vmem:[%s3 + $0x2e0] sm:$0xff]
        %v4812 = vld [vmem:[%s3 + $0x2e8] sm:$0xff]
        %v4813 = vld [vmem:[%s3 + $0x2f0] sm:$0xff]
        %v4814 = vld [vmem:[%s3 + $0x2f8] sm:$0xff]
        %v4815 = vld [vmem:[%s3 + $0x300] sm:$0xff]
        %v4816 = vld [vmem:[%s3 + $0x308] sm:$0xff]
        %v4817 = vld [vmem:[%s3 + $0x310] sm:$0xff]
        %v4818 = vld [vmem:[%s3 + $0x318] sm:$0xff]
        %v4819 = vld [vmem:[%s3 + $0x320] sm:$0xff]
        %v4820 = vld [vmem:[%s3 + $0x328] sm:$0xff]
        %v4821 = vld [vmem:[%s3 + $0x330] sm:$0xff]
        %v4822 = vld [vmem:[%s3 + $0x338] sm:$0xff]
        %v4823 = vld [vmem:[%s3 + $0x340] sm:$0xff]
        %v4824 = vld [vmem:[%s3 + $0x348] sm:$0xff]
        %v4825 = vld [vmem:[%s3 + $0x350] sm:$0xff]
        %v4826 = vld [vmem:[%s3 + $0x358] sm:$0xff]
        %v4827 = vld [vmem:[%s3 + $0x360] sm:$0xff]
        %v4828 = vld [vmem:[%s3 + $0x368] sm:$0xff]
        %v4829 = vld [vmem:[%s3 + $0x370] sm:$0xff]
        %v4830 = vld [vmem:[%s3 + $0x378] sm:$0xff]
        %v4831 = vld [vmem:[%s3 + $0x380] sm:$0xff]
        %v4832 = vld [vmem:[%s3 + $0x388] sm:$0xff]
        %v4833 = vld [vmem:[%s3 + $0x390] sm:$0xff]
        %v4834 = vld [vmem:[%s3 + $0x398] sm:$0xff]
        %v4835 = vld [vmem:[%s3 + $0x3a0] sm:$0xff]
        %v4836 = vld [vmem:[%s3 + $0x3a8] sm:$0xff]
        %v4837 = vld [vmem:[%s3 + $0x3b0] sm:$0xff]
        %v4838 = vld [vmem:[%s3 + $0x3b8] sm:$0xff]
        %v4839 = vld [vmem:[%s3 + $0x3c0] sm:$0xff]
        %v4840 = vld [vmem:[%s3 + $0x3c8] sm:$0xff]
        %v4841 = vld [vmem:[%s3 + $0x3d0] sm:$0xff]
        %v4842 = vld [vmem:[%s3 + $0x3d8] sm:$0xff]
        %v4843 = vld [vmem:[%s3 + $0x3e0] sm:$0xff]
        %v4844 = vld [vmem:[%s3 + $0x3e8] sm:$0xff]
        %v4845 = vld [vmem:[%s3 + $0x3f0] sm:$0xff]
        %v4846 = vld [vmem:[%s3 + $0x3f8] sm:$0xff]
        %v4847 = vld [vmem:[%s3 + $0x400] sm:$0xff]
        %v4848 = vld [vmem:[%s3 + $0x408] sm:$0xff]
        %v4849 = vld [vmem:[%s3 + $0x410] sm:$0xff]
        %v4850 = vld [vmem:[%s3 + $0x418] sm:$0xff]
        %v4851 = vld [vmem:[%s3 + $0x420] sm:$0xff]
        %v4852 = vld [vmem:[%s3 + $0x428] sm:$0xff]
        %v4853 = vld [vmem:[%s3 + $0x430] sm:$0xff]
        %v4854 = vld [vmem:[%s3 + $0x438] sm:$0xff]
        %v4855 = vld [vmem:[%s3 + $0x440] sm:$0xff]
        %v4856 = vld [vmem:[%s3 + $0x448] sm:$0xff]
        %v4857 = vld [vmem:[%s3 + $0x450] sm:$0xff]
        %v4858 = vld [vmem:[%s3 + $0x458] sm:$0xff]
        %v4859 = vld [vmem:[%s3 + $0x460] sm:$0xff]
        %v4860 = vld [vmem:[%s3 + $0x468] sm:$0xff]
        %v4861 = vld [vmem:[%s3 + $0x470] sm:$0xff]
        %v4862 = vld [vmem:[%s3 + $0x478] sm:$0xff]
        %v4863 = vld [vmem:[%s3 + $0x480] sm:$0xff]
        %v4864 = vld [vmem:[%s3 + $0x488] sm:$0xff]
        %v4865 = vld [vmem:[%s3 + $0x490] sm:$0xff]
        %v4866 = vld [vmem:[%s3 + $0x498] sm:$0xff]
        %v4867 = vld [vmem:[%s3 + $0x4a0] sm:$0xff]
        %v4868 = vld [vmem:[%s3 + $0x4a8] sm:$0xff]
        %v4869 = vld [vmem:[%s3 + $0x4b0] sm:$0xff]
        %v4870 = vld [vmem:[%s3 + $0x4b8] sm:$0xff]
        %v4871 = vld [vmem:[%s3 + $0x4c0] sm:$0xff]
        %v4872 = vld [vmem:[%s3 + $0x4c8] sm:$0xff]
        %v4873 = vld [vmem:[%s3 + $0x4d0] sm:$0xff]
        %v4874 = vld [vmem:[%s3 + $0x4d8] sm:$0xff]
        %v4875 = vld [vmem:[%s3 + $0x4e0] sm:$0xff]
        %v4876 = vld [vmem:[%s3 + $0x4e8] sm:$0xff]
        %v4877 = vld [vmem:[%s3 + $0x4f0] sm:$0xff]
        %v4878 = vld [vmem:[%s3 + $0x4f8] sm:$0xff]
        %4880 = vset.pattern.permute.xlu0 0
        %4881 = vperm.xlu0 %4880, %v373
        %v4882 = vpop.permute.xlu0 %4881
        %4885 = vset.pattern.permute.xlu0 0
        %4886 = vperm.xlu0 %4885, %v374
        %v4887 = vpop.permute.xlu0 %4886
        %4890 = vset.pattern.permute.xlu0 0
        %4891 = vperm.xlu0 %4890, %v375
        %v4892 = vpop.permute.xlu0 %4891
        %4895 = vset.pattern.permute.xlu0 0
        %4896 = vperm.xlu0 %4895, %v376
        %v4897 = vpop.permute.xlu0 %4896
        %4900 = vset.pattern.permute.xlu0 0
        %4901 = vperm.xlu0 %4900, %v377
        %v4902 = vpop.permute.xlu0 %4901
        %4905 = vset.pattern.permute.xlu0 0
        %4906 = vperm.xlu0 %4905, %v378
        %v4907 = vpop.permute.xlu0 %4906
        %4910 = vset.pattern.permute.xlu0 0
        %4911 = vperm.xlu0 %4910, %v379
        %v4912 = vpop.permute.xlu0 %4911
        %4915 = vset.pattern.permute.xlu0 0
        %4916 = vperm.xlu0 %4915, %v380
        %v4917 = vpop.permute.xlu0 %4916
        %4920 = vset.pattern.permute.xlu0 0
        %4921 = vperm.xlu0 %4920, %v381
        %v4922 = vpop.permute.xlu0 %4921
        %4925 = vset.pattern.permute.xlu0 0
        %4926 = vperm.xlu0 %4925, %v382
        %v4927 = vpop.permute.xlu0 %4926
        %4930 = vset.pattern.permute.xlu0 0
        %4931 = vperm.xlu0 %4930, %v383
        %v4932 = vpop.permute.xlu0 %4931
        %4935 = vset.pattern.permute.xlu0 0
        %4936 = vperm.xlu0 %4935, %v384
        %v4937 = vpop.permute.xlu0 %4936
        %4940 = vset.pattern.permute.xlu0 0
        %4941 = vperm.xlu0 %4940, %v385
        %v4942 = vpop.permute.xlu0 %4941
        %4945 = vset.pattern.permute.xlu0 0
        %4946 = vperm.xlu0 %4945, %v386
        %v4947 = vpop.permute.xlu0 %4946
        %4950 = vset.pattern.permute.xlu0 0
        %4951 = vperm.xlu0 %4950, %v387
        %v4952 = vpop.permute.xlu0 %4951
        %4955 = vset.pattern.permute.xlu0 0
        %4956 = vperm.xlu0 %4955, %v388
        %v4957 = vpop.permute.xlu0 %4956
        %4960 = vset.pattern.permute.xlu0 0
        %4961 = vperm.xlu0 %4960, %v389
        %v4962 = vpop.permute.xlu0 %4961
        %4965 = vset.pattern.permute.xlu0 0
        %4966 = vperm.xlu0 %4965, %v390
        %v4967 = vpop.permute.xlu0 %4966
        %4970 = vset.pattern.permute.xlu0 0
        %4971 = vperm.xlu0 %4970, %v391
        %v4972 = vpop.permute.xlu0 %4971
        %4975 = vset.pattern.permute.xlu0 0
        %4976 = vperm.xlu0 %4975, %v392
        %v4977 = vpop.permute.xlu0 %4976
        %4980 = vset.pattern.permute.xlu0 0
        %4981 = vperm.xlu0 %4980, %v393
        %v4982 = vpop.permute.xlu0 %4981
        %4985 = vset.pattern.permute.xlu0 0
        %4986 = vperm.xlu0 %4985, %v394
        %v4987 = vpop.permute.xlu0 %4986
        %4990 = vset.pattern.permute.xlu0 0
        %4991 = vperm.xlu0 %4990, %v395
        %v4992 = vpop.permute.xlu0 %4991
        %4995 = vset.pattern.permute.xlu0 0
        %4996 = vperm.xlu0 %4995, %v396
        %v4997 = vpop.permute.xlu0 %4996
        %5000 = vset.pattern.permute.xlu0 0
        %5001 = vperm.xlu0 %5000, %v397
        %v5002 = vpop.permute.xlu0 %5001
        %5005 = vset.pattern.permute.xlu0 0
        %5006 = vperm.xlu0 %5005, %v398
        %v5007 = vpop.permute.xlu0 %5006
        %5010 = vset.pattern.permute.xlu0 0
        %5011 = vperm.xlu0 %5010, %v399
        %v5012 = vpop.permute.xlu0 %5011
        %5015 = vset.pattern.permute.xlu0 0
        %5016 = vperm.xlu0 %5015, %v400
        %v5017 = vpop.permute.xlu0 %5016
        %5020 = vset.pattern.permute.xlu0 0
        %5021 = vperm.xlu0 %5020, %v401
        %v5022 = vpop.permute.xlu0 %5021
        %5025 = vset.pattern.permute.xlu0 0
        %5026 = vperm.xlu0 %5025, %v402
        %v5027 = vpop.permute.xlu0 %5026
        %5030 = vset.pattern.permute.xlu0 0
        %5031 = vperm.xlu0 %5030, %v403
        %v5032 = vpop.permute.xlu0 %5031
        %5035 = vset.pattern.permute.xlu0 0
        %5036 = vperm.xlu0 %5035, %v404
        %v5037 = vpop.permute.xlu0 %5036
        %5040 = vset.pattern.permute.xlu0 0
        %5041 = vperm.xlu0 %5040, %v405
        %v5042 = vpop.permute.xlu0 %5041
        %5045 = vset.pattern.permute.xlu0 0
        %5046 = vperm.xlu0 %5045, %v406
        %v5047 = vpop.permute.xlu0 %5046
        %5050 = vset.pattern.permute.xlu0 0
        %5051 = vperm.xlu0 %5050, %v407
        %v5052 = vpop.permute.xlu0 %5051
        %5055 = vset.pattern.permute.xlu0 0
        %5056 = vperm.xlu0 %5055, %v408
        %v5057 = vpop.permute.xlu0 %5056
        %5060 = vset.pattern.permute.xlu0 0
        %5061 = vperm.xlu0 %5060, %v409
        %v5062 = vpop.permute.xlu0 %5061
        %5065 = vset.pattern.permute.xlu0 0
        %5066 = vperm.xlu0 %5065, %v410
        %v5067 = vpop.permute.xlu0 %5066
        %5070 = vset.pattern.permute.xlu0 0
        %5071 = vperm.xlu0 %5070, %v411
        %v5072 = vpop.permute.xlu0 %5071
        %5075 = vset.pattern.permute.xlu0 0
        %5076 = vperm.xlu0 %5075, %v412
        %v5077 = vpop.permute.xlu0 %5076
        %v5239 = vunpack.c.l.b16 %v4719
        %v5240 = vunpack.c.h.b16 %v4719
        %v5241 = vunpack.c.l.b16 %v4720
        %v5242 = vunpack.c.h.b16 %v4720
        %v5243 = vunpack.c.l.b16 %v4721
        %v5244 = vunpack.c.h.b16 %v4721
        %v5245 = vunpack.c.l.b16 %v4722
        %v5246 = vunpack.c.h.b16 %v4722
        %v5247 = vunpack.c.l.b16 %v4723
        %v5248 = vunpack.c.h.b16 %v4723
        %v5249 = vunpack.c.l.b16 %v4724
        %v5250 = vunpack.c.h.b16 %v4724
        %v5251 = vunpack.c.l.b16 %v4725
        %v5252 = vunpack.c.h.b16 %v4725
        %v5253 = vunpack.c.l.b16 %v4726
        %v5254 = vunpack.c.h.b16 %v4726
        %v5255 = vunpack.c.l.b16 %v4727
        %v5256 = vunpack.c.h.b16 %v4727
        %v5257 = vunpack.c.l.b16 %v4728
        %v5258 = vunpack.c.h.b16 %v4728
        %v5259 = vunpack.c.l.b16 %v4729
        %v5260 = vunpack.c.h.b16 %v4729
        %v5261 = vunpack.c.l.b16 %v4730
        %v5262 = vunpack.c.h.b16 %v4730
        %v5263 = vunpack.c.l.b16 %v4731
        %v5264 = vunpack.c.h.b16 %v4731
        %v5265 = vunpack.c.l.b16 %v4732
        %v5266 = vunpack.c.h.b16 %v4732
        %v5267 = vunpack.c.l.b16 %v4733
        %v5268 = vunpack.c.h.b16 %v4733
        %v5269 = vunpack.c.l.b16 %v4734
        %v5270 = vunpack.c.h.b16 %v4734
        %v5271 = vunpack.c.l.b16 %v4735
        %v5272 = vunpack.c.h.b16 %v4735
        %v5273 = vunpack.c.l.b16 %v4736
        %v5274 = vunpack.c.h.b16 %v4736
        %v5275 = vunpack.c.l.b16 %v4737
        %v5276 = vunpack.c.h.b16 %v4737
        %v5277 = vunpack.c.l.b16 %v4738
        %v5278 = vunpack.c.h.b16 %v4738
        %v5279 = vunpack.c.l.b16 %v4739
        %v5280 = vunpack.c.h.b16 %v4739
        %v5281 = vunpack.c.l.b16 %v4740
        %v5282 = vunpack.c.h.b16 %v4740
        %v5283 = vunpack.c.l.b16 %v4741
        %v5284 = vunpack.c.h.b16 %v4741
        %v5285 = vunpack.c.l.b16 %v4742
        %v5286 = vunpack.c.h.b16 %v4742
        %v5287 = vunpack.c.l.b16 %v4743
        %v5288 = vunpack.c.h.b16 %v4743
        %v5289 = vunpack.c.l.b16 %v4744
        %v5290 = vunpack.c.h.b16 %v4744
        %v5291 = vunpack.c.l.b16 %v4745
        %v5292 = vunpack.c.h.b16 %v4745
        %v5293 = vunpack.c.l.b16 %v4746
        %v5294 = vunpack.c.h.b16 %v4746
        %v5295 = vunpack.c.l.b16 %v4747
        %v5296 = vunpack.c.h.b16 %v4747
        %v5297 = vunpack.c.l.b16 %v4748
        %v5298 = vunpack.c.h.b16 %v4748
        %v5299 = vunpack.c.l.b16 %v4749
        %v5300 = vunpack.c.h.b16 %v4749
        %v5301 = vunpack.c.l.b16 %v4750
        %v5302 = vunpack.c.h.b16 %v4750
        %v5303 = vunpack.c.l.b16 %v4751
        %v5304 = vunpack.c.h.b16 %v4751
        %v5305 = vunpack.c.l.b16 %v4752
        %v5306 = vunpack.c.h.b16 %v4752
        %v5307 = vunpack.c.l.b16 %v4753
        %v5308 = vunpack.c.h.b16 %v4753
        %v5309 = vunpack.c.l.b16 %v4754
        %v5310 = vunpack.c.h.b16 %v4754
        %v5311 = vunpack.c.l.b16 %v4755
        %v5312 = vunpack.c.h.b16 %v4755
        %v5313 = vunpack.c.l.b16 %v4756
        %v5314 = vunpack.c.h.b16 %v4756
        %v5315 = vunpack.c.l.b16 %v4757
        %v5316 = vunpack.c.h.b16 %v4757
        %v5317 = vunpack.c.l.b16 %v4758
        %v5318 = vunpack.c.h.b16 %v4758
        %v5319 = vunpack.c.l.b16 %v4759
        %v5320 = vunpack.c.h.b16 %v4759
        %v5321 = vunpack.c.l.b16 %v4760
        %v5322 = vunpack.c.h.b16 %v4760
        %v5323 = vunpack.c.l.b16 %v4761
        %v5324 = vunpack.c.h.b16 %v4761
        %v5325 = vunpack.c.l.b16 %v4762
        %v5326 = vunpack.c.h.b16 %v4762
        %v5327 = vunpack.c.l.b16 %v4763
        %v5328 = vunpack.c.h.b16 %v4763
        %v5329 = vunpack.c.l.b16 %v4764
        %v5330 = vunpack.c.h.b16 %v4764
        %v5331 = vunpack.c.l.b16 %v4765
        %v5332 = vunpack.c.h.b16 %v4765
        %v5333 = vunpack.c.l.b16 %v4766
        %v5334 = vunpack.c.h.b16 %v4766
        %v5335 = vunpack.c.l.b16 %v4767
        %v5336 = vunpack.c.h.b16 %v4767
        %v5337 = vunpack.c.l.b16 %v4768
        %v5338 = vunpack.c.h.b16 %v4768
        %v5339 = vunpack.c.l.b16 %v4769
        %v5340 = vunpack.c.h.b16 %v4769
        %v5341 = vunpack.c.l.b16 %v4770
        %v5342 = vunpack.c.h.b16 %v4770
        %v5343 = vunpack.c.l.b16 %v4771
        %v5344 = vunpack.c.h.b16 %v4771
        %v5345 = vunpack.c.l.b16 %v4772
        %v5346 = vunpack.c.h.b16 %v4772
        %v5347 = vunpack.c.l.b16 %v4773
        %v5348 = vunpack.c.h.b16 %v4773
        %v5349 = vunpack.c.l.b16 %v4774
        %v5350 = vunpack.c.h.b16 %v4774
        %v5351 = vunpack.c.l.b16 %v4775
        %v5352 = vunpack.c.h.b16 %v4775
        %v5353 = vunpack.c.l.b16 %v4776
        %v5354 = vunpack.c.h.b16 %v4776
        %v5355 = vunpack.c.l.b16 %v4777
        %v5356 = vunpack.c.h.b16 %v4777
        %v5357 = vunpack.c.l.b16 %v4778
        %v5358 = vunpack.c.h.b16 %v4778
        %v5359 = vunpack.c.l.b16 %v4779
        %v5360 = vunpack.c.h.b16 %v4779
        %v5361 = vunpack.c.l.b16 %v4780
        %v5362 = vunpack.c.h.b16 %v4780
        %v5363 = vunpack.c.l.b16 %v4781
        %v5364 = vunpack.c.h.b16 %v4781
        %v5365 = vunpack.c.l.b16 %v4782
        %v5366 = vunpack.c.h.b16 %v4782
        %v5367 = vunpack.c.l.b16 %v4783
        %v5368 = vunpack.c.h.b16 %v4783
        %v5369 = vunpack.c.l.b16 %v4784
        %v5370 = vunpack.c.h.b16 %v4784
        %v5371 = vunpack.c.l.b16 %v4785
        %v5372 = vunpack.c.h.b16 %v4785
        %v5373 = vunpack.c.l.b16 %v4786
        %v5374 = vunpack.c.h.b16 %v4786
        %v5375 = vunpack.c.l.b16 %v4787
        %v5376 = vunpack.c.h.b16 %v4787
        %v5377 = vunpack.c.l.b16 %v4788
        %v5378 = vunpack.c.h.b16 %v4788
        %v5379 = vunpack.c.l.b16 %v4789
        %v5380 = vunpack.c.h.b16 %v4789
        %v5381 = vunpack.c.l.b16 %v4790
        %v5382 = vunpack.c.h.b16 %v4790
        %v5383 = vunpack.c.l.b16 %v4791
        %v5384 = vunpack.c.h.b16 %v4791
        %v5385 = vunpack.c.l.b16 %v4792
        %v5386 = vunpack.c.h.b16 %v4792
        %v5387 = vunpack.c.l.b16 %v4793
        %v5388 = vunpack.c.h.b16 %v4793
        %v5389 = vunpack.c.l.b16 %v4794
        %v5390 = vunpack.c.h.b16 %v4794
        %v5391 = vunpack.c.l.b16 %v4795
        %v5392 = vunpack.c.h.b16 %v4795
        %v5393 = vunpack.c.l.b16 %v4796
        %v5394 = vunpack.c.h.b16 %v4796
        %v5395 = vunpack.c.l.b16 %v4797
        %v5396 = vunpack.c.h.b16 %v4797
        %v5397 = vunpack.c.l.b16 %v4798
        %v5398 = vunpack.c.h.b16 %v4798
        %v5399 = vunpack.c.l.b16 %v4799
        %v5400 = vunpack.c.h.b16 %v4799
        %v5401 = vunpack.c.l.b16 %v4800
        %v5402 = vunpack.c.h.b16 %v4800
        %v5403 = vunpack.c.l.b16 %v4801
        %v5404 = vunpack.c.h.b16 %v4801
        %v5405 = vunpack.c.l.b16 %v4802
        %v5406 = vunpack.c.h.b16 %v4802
        %v5407 = vunpack.c.l.b16 %v4803
        %v5408 = vunpack.c.h.b16 %v4803
        %v5409 = vunpack.c.l.b16 %v4804
        %v5410 = vunpack.c.h.b16 %v4804
        %v5411 = vunpack.c.l.b16 %v4805
        %v5412 = vunpack.c.h.b16 %v4805
        %v5413 = vunpack.c.l.b16 %v4806
        %v5414 = vunpack.c.h.b16 %v4806
        %v5415 = vunpack.c.l.b16 %v4807
        %v5416 = vunpack.c.h.b16 %v4807
        %v5417 = vunpack.c.l.b16 %v4808
        %v5418 = vunpack.c.h.b16 %v4808
        %v5419 = vunpack.c.l.b16 %v4809
        %v5420 = vunpack.c.h.b16 %v4809
        %v5421 = vunpack.c.l.b16 %v4810
        %v5422 = vunpack.c.h.b16 %v4810
        %v5423 = vunpack.c.l.b16 %v4811
        %v5424 = vunpack.c.h.b16 %v4811
        %v5425 = vunpack.c.l.b16 %v4812
        %v5426 = vunpack.c.h.b16 %v4812
        %v5427 = vunpack.c.l.b16 %v4813
        %v5428 = vunpack.c.h.b16 %v4813
        %v5429 = vunpack.c.l.b16 %v4814
        %v5430 = vunpack.c.h.b16 %v4814
        %v5431 = vunpack.c.l.b16 %v4815
        %v5432 = vunpack.c.h.b16 %v4815
        %v5433 = vunpack.c.l.b16 %v4816
        %v5434 = vunpack.c.h.b16 %v4816
        %v5435 = vunpack.c.l.b16 %v4817
        %v5436 = vunpack.c.h.b16 %v4817
        %v5437 = vunpack.c.l.b16 %v4818
        %v5438 = vunpack.c.h.b16 %v4818
        %v5439 = vunpack.c.l.b16 %v4819
        %v5440 = vunpack.c.h.b16 %v4819
        %v5441 = vunpack.c.l.b16 %v4820
        %v5442 = vunpack.c.h.b16 %v4820
        %v5443 = vunpack.c.l.b16 %v4821
        %v5444 = vunpack.c.h.b16 %v4821
        %v5445 = vunpack.c.l.b16 %v4822
        %v5446 = vunpack.c.h.b16 %v4822
        %v5447 = vunpack.c.l.b16 %v4823
        %v5448 = vunpack.c.h.b16 %v4823
        %v5449 = vunpack.c.l.b16 %v4824
        %v5450 = vunpack.c.h.b16 %v4824
        %v5451 = vunpack.c.l.b16 %v4825
        %v5452 = vunpack.c.h.b16 %v4825
        %v5453 = vunpack.c.l.b16 %v4826
        %v5454 = vunpack.c.h.b16 %v4826
        %v5455 = vunpack.c.l.b16 %v4827
        %v5456 = vunpack.c.h.b16 %v4827
        %v5457 = vunpack.c.l.b16 %v4828
        %v5458 = vunpack.c.h.b16 %v4828
        %v5459 = vunpack.c.l.b16 %v4829
        %v5460 = vunpack.c.h.b16 %v4829
        %v5461 = vunpack.c.l.b16 %v4830
        %v5462 = vunpack.c.h.b16 %v4830
        %v5463 = vunpack.c.l.b16 %v4831
        %v5464 = vunpack.c.h.b16 %v4831
        %v5465 = vunpack.c.l.b16 %v4832
        %v5466 = vunpack.c.h.b16 %v4832
        %v5467 = vunpack.c.l.b16 %v4833
        %v5468 = vunpack.c.h.b16 %v4833
        %v5469 = vunpack.c.l.b16 %v4834
        %v5470 = vunpack.c.h.b16 %v4834
        %v5471 = vunpack.c.l.b16 %v4835
        %v5472 = vunpack.c.h.b16 %v4835
        %v5473 = vunpack.c.l.b16 %v4836
        %v5474 = vunpack.c.h.b16 %v4836
        %v5475 = vunpack.c.l.b16 %v4837
        %v5476 = vunpack.c.h.b16 %v4837
        %v5477 = vunpack.c.l.b16 %v4838
        %v5478 = vunpack.c.h.b16 %v4838
        %v5479 = vunpack.c.l.b16 %v4839
        %v5480 = vunpack.c.h.b16 %v4839
        %v5481 = vunpack.c.l.b16 %v4840
        %v5482 = vunpack.c.h.b16 %v4840
        %v5483 = vunpack.c.l.b16 %v4841
        %v5484 = vunpack.c.h.b16 %v4841
        %v5485 = vunpack.c.l.b16 %v4842
        %v5486 = vunpack.c.h.b16 %v4842
        %v5487 = vunpack.c.l.b16 %v4843
        %v5488 = vunpack.c.h.b16 %v4843
        %v5489 = vunpack.c.l.b16 %v4844
        %v5490 = vunpack.c.h.b16 %v4844
        %v5491 = vunpack.c.l.b16 %v4845
        %v5492 = vunpack.c.h.b16 %v4845
        %v5493 = vunpack.c.l.b16 %v4846
        %v5494 = vunpack.c.h.b16 %v4846
        %v5495 = vunpack.c.l.b16 %v4847
        %v5496 = vunpack.c.h.b16 %v4847
        %v5497 = vunpack.c.l.b16 %v4848
        %v5498 = vunpack.c.h.b16 %v4848
        %v5499 = vunpack.c.l.b16 %v4849
        %v5500 = vunpack.c.h.b16 %v4849
        %v5501 = vunpack.c.l.b16 %v4850
        %v5502 = vunpack.c.h.b16 %v4850
        %v5503 = vunpack.c.l.b16 %v4851
        %v5504 = vunpack.c.h.b16 %v4851
        %v5505 = vunpack.c.l.b16 %v4852
        %v5506 = vunpack.c.h.b16 %v4852
        %v5507 = vunpack.c.l.b16 %v4853
        %v5508 = vunpack.c.h.b16 %v4853
        %v5509 = vunpack.c.l.b16 %v4854
        %v5510 = vunpack.c.h.b16 %v4854
        %v5511 = vunpack.c.l.b16 %v4855
        %v5512 = vunpack.c.h.b16 %v4855
        %v5513 = vunpack.c.l.b16 %v4856
        %v5514 = vunpack.c.h.b16 %v4856
        %v5515 = vunpack.c.l.b16 %v4857
        %v5516 = vunpack.c.h.b16 %v4857
        %v5517 = vunpack.c.l.b16 %v4858
        %v5518 = vunpack.c.h.b16 %v4858
        %v5519 = vunpack.c.l.b16 %v4859
        %v5520 = vunpack.c.h.b16 %v4859
        %v5521 = vunpack.c.l.b16 %v4860
        %v5522 = vunpack.c.h.b16 %v4860
        %v5523 = vunpack.c.l.b16 %v4861
        %v5524 = vunpack.c.h.b16 %v4861
        %v5525 = vunpack.c.l.b16 %v4862
        %v5526 = vunpack.c.h.b16 %v4862
        %v5527 = vunpack.c.l.b16 %v4863
        %v5528 = vunpack.c.h.b16 %v4863
        %v5529 = vunpack.c.l.b16 %v4864
        %v5530 = vunpack.c.h.b16 %v4864
        %v5531 = vunpack.c.l.b16 %v4865
        %v5532 = vunpack.c.h.b16 %v4865
        %v5533 = vunpack.c.l.b16 %v4866
        %v5534 = vunpack.c.h.b16 %v4866
        %v5535 = vunpack.c.l.b16 %v4867
        %v5536 = vunpack.c.h.b16 %v4867
        %v5537 = vunpack.c.l.b16 %v4868
        %v5538 = vunpack.c.h.b16 %v4868
        %v5539 = vunpack.c.l.b16 %v4869
        %v5540 = vunpack.c.h.b16 %v4869
        %v5541 = vunpack.c.l.b16 %v4870
        %v5542 = vunpack.c.h.b16 %v4870
        %v5543 = vunpack.c.l.b16 %v4871
        %v5544 = vunpack.c.h.b16 %v4871
        %v5545 = vunpack.c.l.b16 %v4872
        %v5546 = vunpack.c.h.b16 %v4872
        %v5547 = vunpack.c.l.b16 %v4873
        %v5548 = vunpack.c.h.b16 %v4873
        %v5549 = vunpack.c.l.b16 %v4874
        %v5550 = vunpack.c.h.b16 %v4874
        %v5551 = vunpack.c.l.b16 %v4875
        %v5552 = vunpack.c.h.b16 %v4875
        %v5553 = vunpack.c.l.b16 %v4876
        %v5554 = vunpack.c.h.b16 %v4876
        %v5555 = vunpack.c.l.b16 %v4877
        %v5556 = vunpack.c.h.b16 %v4877
        %v5557 = vunpack.c.l.b16 %v4878
        %v5558 = vunpack.c.h.b16 %v4878
        %v5559 = vpack.c.b16 %v5247, %v5239
        %v5560 = vpack.c.b16 %v5248, %v5240
        %v5561 = vpack.c.b16 %v5249, %v5241
        %v5562 = vpack.c.b16 %v5250, %v5242
        %v5563 = vpack.c.b16 %v5251, %v5243
        %v5564 = vpack.c.b16 %v5252, %v5244
        %v5565 = vpack.c.b16 %v5253, %v5245
        %v5566 = vpack.c.b16 %v5254, %v5246
        %v5567 = vpack.c.b16 %v5263, %v5255
        %v5568 = vpack.c.b16 %v5264, %v5256
        %v5569 = vpack.c.b16 %v5265, %v5257
        %v5570 = vpack.c.b16 %v5266, %v5258
        %v5571 = vpack.c.b16 %v5267, %v5259
        %v5572 = vpack.c.b16 %v5268, %v5260
        %v5573 = vpack.c.b16 %v5269, %v5261
        %v5574 = vpack.c.b16 %v5270, %v5262
        %v5575 = vpack.c.b16 %v5279, %v5271
        %v5576 = vpack.c.b16 %v5280, %v5272
        %v5577 = vpack.c.b16 %v5281, %v5273
        %v5578 = vpack.c.b16 %v5282, %v5274
        %v5579 = vpack.c.b16 %v5283, %v5275
        %v5580 = vpack.c.b16 %v5284, %v5276
        %v5581 = vpack.c.b16 %v5285, %v5277
        %v5582 = vpack.c.b16 %v5286, %v5278
        %v5583 = vpack.c.b16 %v5295, %v5287
        %v5584 = vpack.c.b16 %v5296, %v5288
        %v5585 = vpack.c.b16 %v5297, %v5289
        %v5586 = vpack.c.b16 %v5298, %v5290
        %v5587 = vpack.c.b16 %v5299, %v5291
        %v5588 = vpack.c.b16 %v5300, %v5292
        %v5589 = vpack.c.b16 %v5301, %v5293
        %v5590 = vpack.c.b16 %v5302, %v5294
        %v5591 = vpack.c.b16 %v5311, %v5303
        %v5592 = vpack.c.b16 %v5312, %v5304
        %v5593 = vpack.c.b16 %v5313, %v5305
        %v5594 = vpack.c.b16 %v5314, %v5306
        %v5595 = vpack.c.b16 %v5315, %v5307
        %v5596 = vpack.c.b16 %v5316, %v5308
        %v5597 = vpack.c.b16 %v5317, %v5309
        %v5598 = vpack.c.b16 %v5318, %v5310
        %v5599 = vpack.c.b16 %v5327, %v5319
        %v5600 = vpack.c.b16 %v5328, %v5320
        %v5601 = vpack.c.b16 %v5329, %v5321
        %v5602 = vpack.c.b16 %v5330, %v5322
        %v5603 = vpack.c.b16 %v5331, %v5323
        %v5604 = vpack.c.b16 %v5332, %v5324
        %v5605 = vpack.c.b16 %v5333, %v5325
        %v5606 = vpack.c.b16 %v5334, %v5326
        %v5607 = vpack.c.b16 %v5343, %v5335
        %v5608 = vpack.c.b16 %v5344, %v5336
        %v5609 = vpack.c.b16 %v5345, %v5337
        %v5610 = vpack.c.b16 %v5346, %v5338
        %v5611 = vpack.c.b16 %v5347, %v5339
        %v5612 = vpack.c.b16 %v5348, %v5340
        %v5613 = vpack.c.b16 %v5349, %v5341
        %v5614 = vpack.c.b16 %v5350, %v5342
        %v5615 = vpack.c.b16 %v5359, %v5351
        %v5616 = vpack.c.b16 %v5360, %v5352
        %v5617 = vpack.c.b16 %v5361, %v5353
        %v5618 = vpack.c.b16 %v5362, %v5354
        %v5619 = vpack.c.b16 %v5363, %v5355
        %v5620 = vpack.c.b16 %v5364, %v5356
        %v5621 = vpack.c.b16 %v5365, %v5357
        %v5622 = vpack.c.b16 %v5366, %v5358
        %v5623 = vpack.c.b16 %v5375, %v5367
        %v5624 = vpack.c.b16 %v5376, %v5368
        %v5625 = vpack.c.b16 %v5377, %v5369
        %v5626 = vpack.c.b16 %v5378, %v5370
        %v5627 = vpack.c.b16 %v5379, %v5371
        %v5628 = vpack.c.b16 %v5380, %v5372
        %v5629 = vpack.c.b16 %v5381, %v5373
        %v5630 = vpack.c.b16 %v5382, %v5374
        %v5631 = vpack.c.b16 %v5391, %v5383
        %v5632 = vpack.c.b16 %v5392, %v5384
        %v5633 = vpack.c.b16 %v5393, %v5385
        %v5634 = vpack.c.b16 %v5394, %v5386
        %v5635 = vpack.c.b16 %v5395, %v5387
        %v5636 = vpack.c.b16 %v5396, %v5388
        %v5637 = vpack.c.b16 %v5397, %v5389
        %v5638 = vpack.c.b16 %v5398, %v5390
        %v5639 = vpack.c.b16 %v5407, %v5399
        %v5640 = vpack.c.b16 %v5408, %v5400
        %v5641 = vpack.c.b16 %v5409, %v5401
        %v5642 = vpack.c.b16 %v5410, %v5402
        %v5643 = vpack.c.b16 %v5411, %v5403
        %v5644 = vpack.c.b16 %v5412, %v5404
        %v5645 = vpack.c.b16 %v5413, %v5405
        %v5646 = vpack.c.b16 %v5414, %v5406
        %v5647 = vpack.c.b16 %v5423, %v5415
        %v5648 = vpack.c.b16 %v5424, %v5416
        %v5649 = vpack.c.b16 %v5425, %v5417
        %v5650 = vpack.c.b16 %v5426, %v5418
        %v5651 = vpack.c.b16 %v5427, %v5419
        %v5652 = vpack.c.b16 %v5428, %v5420
        %v5653 = vpack.c.b16 %v5429, %v5421
        %v5654 = vpack.c.b16 %v5430, %v5422
        %v5655 = vpack.c.b16 %v5439, %v5431
        %v5656 = vpack.c.b16 %v5440, %v5432
        %v5657 = vpack.c.b16 %v5441, %v5433
        %v5658 = vpack.c.b16 %v5442, %v5434
        %v5659 = vpack.c.b16 %v5443, %v5435
        %v5660 = vpack.c.b16 %v5444, %v5436
        %v5661 = vpack.c.b16 %v5445, %v5437
        %v5662 = vpack.c.b16 %v5446, %v5438
        %v5663 = vpack.c.b16 %v5455, %v5447
        %v5664 = vpack.c.b16 %v5456, %v5448
        %v5665 = vpack.c.b16 %v5457, %v5449
        %v5666 = vpack.c.b16 %v5458, %v5450
        %v5667 = vpack.c.b16 %v5459, %v5451
        %v5668 = vpack.c.b16 %v5460, %v5452
        %v5669 = vpack.c.b16 %v5461, %v5453
        %v5670 = vpack.c.b16 %v5462, %v5454
        %v5671 = vpack.c.b16 %v5471, %v5463
        %v5672 = vpack.c.b16 %v5472, %v5464
        %v5673 = vpack.c.b16 %v5473, %v5465
        %v5674 = vpack.c.b16 %v5474, %v5466
        %v5675 = vpack.c.b16 %v5475, %v5467
        %v5676 = vpack.c.b16 %v5476, %v5468
        %v5677 = vpack.c.b16 %v5477, %v5469
        %v5678 = vpack.c.b16 %v5478, %v5470
        %v5679 = vpack.c.b16 %v5487, %v5479
        %v5680 = vpack.c.b16 %v5488, %v5480
        %v5681 = vpack.c.b16 %v5489, %v5481
        %v5682 = vpack.c.b16 %v5490, %v5482
        %v5683 = vpack.c.b16 %v5491, %v5483
        %v5684 = vpack.c.b16 %v5492, %v5484
        %v5685 = vpack.c.b16 %v5493, %v5485
        %v5686 = vpack.c.b16 %v5494, %v5486
        %v5687 = vpack.c.b16 %v5503, %v5495
        %v5688 = vpack.c.b16 %v5504, %v5496
        %v5689 = vpack.c.b16 %v5505, %v5497
        %v5690 = vpack.c.b16 %v5506, %v5498
        %v5691 = vpack.c.b16 %v5507, %v5499
        %v5692 = vpack.c.b16 %v5508, %v5500
        %v5693 = vpack.c.b16 %v5509, %v5501
        %v5694 = vpack.c.b16 %v5510, %v5502
        %v5695 = vpack.c.b16 %v5519, %v5511
        %v5696 = vpack.c.b16 %v5520, %v5512
        %v5697 = vpack.c.b16 %v5521, %v5513
        %v5698 = vpack.c.b16 %v5522, %v5514
        %v5699 = vpack.c.b16 %v5523, %v5515
        %v5700 = vpack.c.b16 %v5524, %v5516
        %v5701 = vpack.c.b16 %v5525, %v5517
        %v5702 = vpack.c.b16 %v5526, %v5518
        %v5703 = vpack.c.b16 %v5535, %v5527
        %v5704 = vpack.c.b16 %v5536, %v5528
        %v5705 = vpack.c.b16 %v5537, %v5529
        %v5706 = vpack.c.b16 %v5538, %v5530
        %v5707 = vpack.c.b16 %v5539, %v5531
        %v5708 = vpack.c.b16 %v5540, %v5532
        %v5709 = vpack.c.b16 %v5541, %v5533
        %v5710 = vpack.c.b16 %v5542, %v5534
        %v5711 = vpack.c.b16 %v5551, %v5543
        %v5712 = vpack.c.b16 %v5552, %v5544
        %v5713 = vpack.c.b16 %v5553, %v5545
        %v5714 = vpack.c.b16 %v5554, %v5546
        %v5715 = vpack.c.b16 %v5555, %v5547
        %v5716 = vpack.c.b16 %v5556, %v5548
        %v5717 = vpack.c.b16 %v5557, %v5549
        %v5718 = vpack.c.b16 %v5558, %v5550
        %5879 = vmatprep.subr.bf16.mxu0 0
        %5880 = vmatpush1.bf16.msra.mxu0 %v4662
        %5881 = vmatprep.subr.bf16.mxu0 0
        %5882 = vmatpush1.bf16.msra.mxu0 %v4661
        %5883 = vmatprep.subr.bf16.mxu0 0
        %5884 = vmatpush1.bf16.msra.mxu0 %v4660
        %5885 = vmatprep.subr.bf16.mxu0 0
        %5886 = vmatpush1.bf16.msra.mxu0 %v4659
        %5887 = vmatprep.subr.bf16.mxu0 0
        %5888 = vmatpush1.bf16.msra.mxu0 %v4658
        %5889 = vmatprep.subr.bf16.mxu0 0
        %5890 = vmatpush1.bf16.msra.mxu0 %v4657
        %5891 = vmatprep.subr.bf16.mxu0 0
        %5892 = vmatpush1.bf16.msra.mxu0 %v4656
        %5893 = vmatprep.subr.bf16.mxu0 0
        %5894 = vmatpush1.bf16.msra.mxu0 %v4655
        %5895 = vmatprep.subr.bf16.mxu0 0
        %5896 = vmatpush2.bf16.msra.mxu0 %v4670
        %5897 = vmatprep.subr.bf16.mxu0 0
        %5898 = vmatpush2.bf16.msra.mxu0 %v4669
        %5899 = vmatprep.subr.bf16.mxu0 0
        %5900 = vmatpush2.bf16.msra.mxu0 %v4668
        %5901 = vmatprep.subr.bf16.mxu0 0
        %5902 = vmatpush2.bf16.msra.mxu0 %v4667
        %5903 = vmatprep.subr.bf16.mxu0 0
        %5904 = vmatpush2.bf16.msra.mxu0 %v4666
        %5905 = vmatprep.subr.bf16.mxu0 0
        %5906 = vmatpush2.bf16.msra.mxu0 %v4665
        %5907 = vmatprep.subr.bf16.mxu0 0
        %5908 = vmatpush2.bf16.msra.mxu0 %v4664
        %5909 = vmatprep.subr.bf16.mxu0 0
        %5910 = vmatpush2.bf16.msra.mxu0 %v4663
        %5911 = vmatprep.mubr.bf16.mxu0 %v5560
        %5912 = vmatmul.mubr.bf16.gmra.mxu0 %v5559
        %v5913 = vpop.f32.mrf.mxu0
        %v5914 = vadd.f32 %v4882, %v5913
        %v5915 = vpop.f32.mrf.mxu0
        %v5916 = vpop.f32.mrf.mxu0
        %v5917 = vadd.f32 %v4887, %v5916
        %v5918 = vpop.f32.mrf.mxu0
        %5919 = vmatprep.mubr.bf16.mxu0 %v5568
        %5920 = vmatmul.mubr.bf16.gmra.mxu0 %v5567
        %v5921 = vpop.f32.mrf.mxu0
        %v5922 = vadd.f32 %v4892, %v5921
        %v5923 = vpop.f32.mrf.mxu0
        %v5924 = vpop.f32.mrf.mxu0
        %v5925 = vadd.f32 %v4897, %v5924
        %v5926 = vpop.f32.mrf.mxu0
        %5927 = vmatprep.mubr.bf16.mxu0 %v5576
        %5928 = vmatmul.mubr.bf16.gmra.mxu0 %v5575
        %v5929 = vpop.f32.mrf.mxu0
        %v5930 = vadd.f32 %v4902, %v5929
        %v5931 = vpop.f32.mrf.mxu0
        %v5932 = vpop.f32.mrf.mxu0
        %v5933 = vadd.f32 %v4907, %v5932
        %v5934 = vpop.f32.mrf.mxu0
        %5935 = vmatprep.mubr.bf16.mxu0 %v5584
        %5936 = vmatmul.mubr.bf16.gmra.mxu0 %v5583
        %v5937 = vpop.f32.mrf.mxu0
        %v5938 = vadd.f32 %v4912, %v5937
        %v5939 = vpop.f32.mrf.mxu0
        %v5940 = vpop.f32.mrf.mxu0
        %v5941 = vadd.f32 %v4917, %v5940
        %v5942 = vpop.f32.mrf.mxu0
        %5943 = vmatprep.mubr.bf16.mxu0 %v5592
        %5944 = vmatmul.mubr.bf16.gmra.mxu0 %v5591
        %v5945 = vpop.f32.mrf.mxu0
        %v5946 = vadd.f32 %v4922, %v5945
        %v5947 = vpop.f32.mrf.mxu0
        %v5948 = vpop.f32.mrf.mxu0
        %v5949 = vadd.f32 %v4927, %v5948
        %v5950 = vpop.f32.mrf.mxu0
        %5951 = vmatprep.mubr.bf16.mxu0 %v5600
        %5952 = vmatmul.mubr.bf16.gmra.mxu0 %v5599
        %v5953 = vpop.f32.mrf.mxu0
        %v5954 = vadd.f32 %v4932, %v5953
        %v5955 = vpop.f32.mrf.mxu0
        %v5956 = vpop.f32.mrf.mxu0
        %v5957 = vadd.f32 %v4937, %v5956
        %v5958 = vpop.f32.mrf.mxu0
        %5959 = vmatprep.mubr.bf16.mxu0 %v5608
        %5960 = vmatmul.mubr.bf16.gmra.mxu0 %v5607
        %v5961 = vpop.f32.mrf.mxu0
        %v5962 = vadd.f32 %v4942, %v5961
        %v5963 = vpop.f32.mrf.mxu0
        %v5964 = vpop.f32.mrf.mxu0
        %v5965 = vadd.f32 %v4947, %v5964
        %v5966 = vpop.f32.mrf.mxu0
        %5967 = vmatprep.mubr.bf16.mxu0 %v5616
        %5968 = vmatmul.mubr.bf16.gmra.mxu0 %v5615
        %v5969 = vpop.f32.mrf.mxu0
        %v5970 = vadd.f32 %v4952, %v5969
        %v5971 = vpop.f32.mrf.mxu0
        %v5972 = vpop.f32.mrf.mxu0
        %v5973 = vadd.f32 %v4957, %v5972
        %v5974 = vpop.f32.mrf.mxu0
        %5975 = vmatprep.mubr.bf16.mxu0 %v5624
        %5976 = vmatmul.mubr.bf16.gmra.mxu0 %v5623
        %v5977 = vpop.f32.mrf.mxu0
        %v5978 = vadd.f32 %v4962, %v5977
        %v5979 = vpop.f32.mrf.mxu0
        %v5980 = vpop.f32.mrf.mxu0
        %v5981 = vadd.f32 %v4967, %v5980
        %v5982 = vpop.f32.mrf.mxu0
        %5983 = vmatprep.mubr.bf16.mxu0 %v5632
        %5984 = vmatmul.mubr.bf16.gmra.mxu0 %v5631
        %v5985 = vpop.f32.mrf.mxu0
        %v5986 = vadd.f32 %v4972, %v5985
        %v5987 = vpop.f32.mrf.mxu0
        %v5988 = vpop.f32.mrf.mxu0
        %v5989 = vadd.f32 %v4977, %v5988
        %v5990 = vpop.f32.mrf.mxu0
        %5991 = vmatprep.mubr.bf16.mxu0 %v5640
        %5992 = vmatmul.mubr.bf16.gmra.mxu0 %v5639
        %v5993 = vpop.f32.mrf.mxu0
        %v5994 = vadd.f32 %v4982, %v5993
        %v5995 = vpop.f32.mrf.mxu0
        %v5996 = vpop.f32.mrf.mxu0
        %v5997 = vadd.f32 %v4987, %v5996
        %v5998 = vpop.f32.mrf.mxu0
        %5999 = vmatprep.mubr.bf16.mxu0 %v5648
        %6000 = vmatmul.mubr.bf16.gmra.mxu0 %v5647
        %v6001 = vpop.f32.mrf.mxu0
        %v6002 = vadd.f32 %v4992, %v6001
        %v6003 = vpop.f32.mrf.mxu0
        %v6004 = vpop.f32.mrf.mxu0
        %v6005 = vadd.f32 %v4997, %v6004
        %v6006 = vpop.f32.mrf.mxu0
        %6007 = vmatprep.mubr.bf16.mxu0 %v5656
        %6008 = vmatmul.mubr.bf16.gmra.mxu0 %v5655
        %v6009 = vpop.f32.mrf.mxu0
        %v6010 = vadd.f32 %v5002, %v6009
        %v6011 = vpop.f32.mrf.mxu0
        %v6012 = vpop.f32.mrf.mxu0
        %v6013 = vadd.f32 %v5007, %v6012
        %v6014 = vpop.f32.mrf.mxu0
        %6015 = vmatprep.mubr.bf16.mxu0 %v5664
        %6016 = vmatmul.mubr.bf16.gmra.mxu0 %v5663
        %v6017 = vpop.f32.mrf.mxu0
        %v6018 = vadd.f32 %v5012, %v6017
        %v6019 = vpop.f32.mrf.mxu0
        %v6020 = vpop.f32.mrf.mxu0
        %v6021 = vadd.f32 %v5017, %v6020
        %v6022 = vpop.f32.mrf.mxu0
        %6023 = vmatprep.mubr.bf16.mxu0 %v5672
        %6024 = vmatmul.mubr.bf16.gmra.mxu0 %v5671
        %v6025 = vpop.f32.mrf.mxu0
        %v6026 = vadd.f32 %v5022, %v6025
        %v6027 = vpop.f32.mrf.mxu0
        %v6028 = vpop.f32.mrf.mxu0
        %v6029 = vadd.f32 %v5027, %v6028
        %v6030 = vpop.f32.mrf.mxu0
        %6031 = vmatprep.mubr.bf16.mxu0 %v5680
        %6032 = vmatmul.mubr.bf16.gmra.mxu0 %v5679
        %v6033 = vpop.f32.mrf.mxu0
        %v6034 = vadd.f32 %v5032, %v6033
        %v6035 = vpop.f32.mrf.mxu0
        %v6036 = vpop.f32.mrf.mxu0
        %v6037 = vadd.f32 %v5037, %v6036
        %v6038 = vpop.f32.mrf.mxu0
        %6039 = vmatprep.mubr.bf16.mxu0 %v5688
        %6040 = vmatmul.mubr.bf16.gmra.mxu0 %v5687
        %v6041 = vpop.f32.mrf.mxu0
        %v6042 = vadd.f32 %v5042, %v6041
        %v6043 = vpop.f32.mrf.mxu0
        %v6044 = vpop.f32.mrf.mxu0
        %v6045 = vadd.f32 %v5047, %v6044
        %v6046 = vpop.f32.mrf.mxu0
        %6047 = vmatprep.mubr.bf16.mxu0 %v5696
        %6048 = vmatmul.mubr.bf16.gmra.mxu0 %v5695
        %v6049 = vpop.f32.mrf.mxu0
        %v6050 = vadd.f32 %v5052, %v6049
        %v6051 = vpop.f32.mrf.mxu0
        %v6052 = vpop.f32.mrf.mxu0
        %v6053 = vadd.f32 %v5057, %v6052
        %v6054 = vpop.f32.mrf.mxu0
        %6055 = vmatprep.mubr.bf16.mxu0 %v5704
        %6056 = vmatmul.mubr.bf16.gmra.mxu0 %v5703
        %v6057 = vpop.f32.mrf.mxu0
        %v6058 = vadd.f32 %v5062, %v6057
        %v6059 = vpop.f32.mrf.mxu0
        %v6060 = vpop.f32.mrf.mxu0
        %v6061 = vadd.f32 %v5067, %v6060
        %v6062 = vpop.f32.mrf.mxu0
        %6063 = vmatprep.mubr.bf16.mxu0 %v5712
        %6064 = vmatmul.mubr.bf16.gmra.mxu0 %v5711
        %v6065 = vpop.f32.mrf.mxu0
        %v6066 = vadd.f32 %v5072, %v6065
        %v6067 = vpop.f32.mrf.mxu0
        %v6068 = vpop.f32.mrf.mxu0
        %v6069 = vadd.f32 %v5077, %v6068
        %v6070 = vpop.f32.mrf.mxu0
        %6071 = vdwg.mxu0
        %6072 = vmatprep.subr.bf16.mxu0 0
        %6073 = vmatpush1.bf16.msra.mxu0 %v4678
        %6074 = vmatprep.subr.bf16.mxu0 0
        %6075 = vmatpush1.bf16.msra.mxu0 %v4677
        %6076 = vmatprep.subr.bf16.mxu0 0
        %6077 = vmatpush1.bf16.msra.mxu0 %v4676
        %6078 = vmatprep.subr.bf16.mxu0 0
        %6079 = vmatpush1.bf16.msra.mxu0 %v4675
        %6080 = vmatprep.subr.bf16.mxu0 0
        %6081 = vmatpush1.bf16.msra.mxu0 %v4674
        %6082 = vmatprep.subr.bf16.mxu0 0
        %6083 = vmatpush1.bf16.msra.mxu0 %v4673
        %6084 = vmatprep.subr.bf16.mxu0 0
        %6085 = vmatpush1.bf16.msra.mxu0 %v4672
        %6086 = vmatprep.subr.bf16.mxu0 0
        %6087 = vmatpush1.bf16.msra.mxu0 %v4671
        %6088 = vmatprep.subr.bf16.mxu0 0
        %6089 = vmatpush2.bf16.msra.mxu0 %v4686
        %6090 = vmatprep.subr.bf16.mxu0 0
        %6091 = vmatpush2.bf16.msra.mxu0 %v4685
        %6092 = vmatprep.subr.bf16.mxu0 0
        %6093 = vmatpush2.bf16.msra.mxu0 %v4684
        %6094 = vmatprep.subr.bf16.mxu0 0
        %6095 = vmatpush2.bf16.msra.mxu0 %v4683
        %6096 = vmatprep.subr.bf16.mxu0 0
        %6097 = vmatpush2.bf16.msra.mxu0 %v4682
        %6098 = vmatprep.subr.bf16.mxu0 0
        %6099 = vmatpush2.bf16.msra.mxu0 %v4681
        %6100 = vmatprep.subr.bf16.mxu0 0
        %6101 = vmatpush2.bf16.msra.mxu0 %v4680
        %6102 = vmatprep.subr.bf16.mxu0 0
        %6103 = vmatpush2.bf16.msra.mxu0 %v4679
        %6104 = vmatprep.mubr.bf16.mxu0 %v5562
        %6105 = vmatmul.mubr.bf16.gmra.mxu0 %v5561
        %v6106 = vpop.f32.mrf.mxu0
        %v6107 = vadd.f32 %v5914, %v6106
        %v6108 = vpop.f32.mrf.mxu0
        %v6109 = vpop.f32.mrf.mxu0
        %v6110 = vadd.f32 %v5917, %v6109
        %v6111 = vpop.f32.mrf.mxu0
        %6112 = vmatprep.mubr.bf16.mxu0 %v5570
        %6113 = vmatmul.mubr.bf16.gmra.mxu0 %v5569
        %v6114 = vpop.f32.mrf.mxu0
        %v6115 = vadd.f32 %v5922, %v6114
        %v6116 = vpop.f32.mrf.mxu0
        %v6117 = vpop.f32.mrf.mxu0
        %v6118 = vadd.f32 %v5925, %v6117
        %v6119 = vpop.f32.mrf.mxu0
        %6120 = vmatprep.mubr.bf16.mxu0 %v5578
        %6121 = vmatmul.mubr.bf16.gmra.mxu0 %v5577
        %v6122 = vpop.f32.mrf.mxu0
        %v6123 = vadd.f32 %v5930, %v6122
        %v6124 = vpop.f32.mrf.mxu0
        %v6125 = vpop.f32.mrf.mxu0
        %v6126 = vadd.f32 %v5933, %v6125
        %v6127 = vpop.f32.mrf.mxu0
        %6128 = vmatprep.mubr.bf16.mxu0 %v5586
        %6129 = vmatmul.mubr.bf16.gmra.mxu0 %v5585
        %v6130 = vpop.f32.mrf.mxu0
        %v6131 = vadd.f32 %v5938, %v6130
        %v6132 = vpop.f32.mrf.mxu0
        %v6133 = vpop.f32.mrf.mxu0
        %v6134 = vadd.f32 %v5941, %v6133
        %v6135 = vpop.f32.mrf.mxu0
        %6136 = vmatprep.mubr.bf16.mxu0 %v5594
        %6137 = vmatmul.mubr.bf16.gmra.mxu0 %v5593
        %v6138 = vpop.f32.mrf.mxu0
        %v6139 = vadd.f32 %v5946, %v6138
        %v6140 = vpop.f32.mrf.mxu0
        %v6141 = vpop.f32.mrf.mxu0
        %v6142 = vadd.f32 %v5949, %v6141
        %v6143 = vpop.f32.mrf.mxu0
        %6144 = vmatprep.mubr.bf16.mxu0 %v5602
        %6145 = vmatmul.mubr.bf16.gmra.mxu0 %v5601
        %v6146 = vpop.f32.mrf.mxu0
        %v6147 = vadd.f32 %v5954, %v6146
        %v6148 = vpop.f32.mrf.mxu0
        %v6149 = vpop.f32.mrf.mxu0
        %v6150 = vadd.f32 %v5957, %v6149
        %v6151 = vpop.f32.mrf.mxu0
        %6152 = vmatprep.mubr.bf16.mxu0 %v5610
        %6153 = vmatmul.mubr.bf16.gmra.mxu0 %v5609
        %v6154 = vpop.f32.mrf.mxu0
        %v6155 = vadd.f32 %v5962, %v6154
        %v6156 = vpop.f32.mrf.mxu0
        %v6157 = vpop.f32.mrf.mxu0
        %v6158 = vadd.f32 %v5965, %v6157
        %v6159 = vpop.f32.mrf.mxu0
        %6160 = vmatprep.mubr.bf16.mxu0 %v5618
        %6161 = vmatmul.mubr.bf16.gmra.mxu0 %v5617
        %v6162 = vpop.f32.mrf.mxu0
        %v6163 = vadd.f32 %v5970, %v6162
        %v6164 = vpop.f32.mrf.mxu0
        %v6165 = vpop.f32.mrf.mxu0
        %v6166 = vadd.f32 %v5973, %v6165
        %v6167 = vpop.f32.mrf.mxu0
        %6168 = vmatprep.mubr.bf16.mxu0 %v5626
        %6169 = vmatmul.mubr.bf16.gmra.mxu0 %v5625
        %v6170 = vpop.f32.mrf.mxu0
        %v6171 = vadd.f32 %v5978, %v6170
        %v6172 = vpop.f32.mrf.mxu0
        %v6173 = vpop.f32.mrf.mxu0
        %v6174 = vadd.f32 %v5981, %v6173
        %v6175 = vpop.f32.mrf.mxu0
        %6176 = vmatprep.mubr.bf16.mxu0 %v5634
        %6177 = vmatmul.mubr.bf16.gmra.mxu0 %v5633
        %v6178 = vpop.f32.mrf.mxu0
        %v6179 = vadd.f32 %v5986, %v6178
        %v6180 = vpop.f32.mrf.mxu0
        %v6181 = vpop.f32.mrf.mxu0
        %v6182 = vadd.f32 %v5989, %v6181
        %v6183 = vpop.f32.mrf.mxu0
        %6184 = vmatprep.mubr.bf16.mxu0 %v5642
        %6185 = vmatmul.mubr.bf16.gmra.mxu0 %v5641
        %v6186 = vpop.f32.mrf.mxu0
        %v6187 = vadd.f32 %v5994, %v6186
        %v6188 = vpop.f32.mrf.mxu0
        %v6189 = vpop.f32.mrf.mxu0
        %v6190 = vadd.f32 %v5997, %v6189
        %v6191 = vpop.f32.mrf.mxu0
        %6192 = vmatprep.mubr.bf16.mxu0 %v5650
        %6193 = vmatmul.mubr.bf16.gmra.mxu0 %v5649
        %v6194 = vpop.f32.mrf.mxu0
        %v6195 = vadd.f32 %v6002, %v6194
        %v6196 = vpop.f32.mrf.mxu0
        %v6197 = vpop.f32.mrf.mxu0
        %v6198 = vadd.f32 %v6005, %v6197
        %v6199 = vpop.f32.mrf.mxu0
        %6200 = vmatprep.mubr.bf16.mxu0 %v5658
        %6201 = vmatmul.mubr.bf16.gmra.mxu0 %v5657
        %v6202 = vpop.f32.mrf.mxu0
        %v6203 = vadd.f32 %v6010, %v6202
        %v6204 = vpop.f32.mrf.mxu0
        %v6205 = vpop.f32.mrf.mxu0
        %v6206 = vadd.f32 %v6013, %v6205
        %v6207 = vpop.f32.mrf.mxu0
        %6208 = vmatprep.mubr.bf16.mxu0 %v5666
        %6209 = vmatmul.mubr.bf16.gmra.mxu0 %v5665
        %v6210 = vpop.f32.mrf.mxu0
        %v6211 = vadd.f32 %v6018, %v6210
        %v6212 = vpop.f32.mrf.mxu0
        %v6213 = vpop.f32.mrf.mxu0
        %v6214 = vadd.f32 %v6021, %v6213
        %v6215 = vpop.f32.mrf.mxu0
        %6216 = vmatprep.mubr.bf16.mxu0 %v5674
        %6217 = vmatmul.mubr.bf16.gmra.mxu0 %v5673
        %v6218 = vpop.f32.mrf.mxu0
        %v6219 = vadd.f32 %v6026, %v6218
        %v6220 = vpop.f32.mrf.mxu0
        %v6221 = vpop.f32.mrf.mxu0
        %v6222 = vadd.f32 %v6029, %v6221
        %v6223 = vpop.f32.mrf.mxu0
        %6224 = vmatprep.mubr.bf16.mxu0 %v5682
        %6225 = vmatmul.mubr.bf16.gmra.mxu0 %v5681
        %v6226 = vpop.f32.mrf.mxu0
        %v6227 = vadd.f32 %v6034, %v6226
        %v6228 = vpop.f32.mrf.mxu0
        %v6229 = vpop.f32.mrf.mxu0
        %v6230 = vadd.f32 %v6037, %v6229
        %v6231 = vpop.f32.mrf.mxu0
        %6232 = vmatprep.mubr.bf16.mxu0 %v5690
        %6233 = vmatmul.mubr.bf16.gmra.mxu0 %v5689
        %v6234 = vpop.f32.mrf.mxu0
        %v6235 = vadd.f32 %v6042, %v6234
        %v6236 = vpop.f32.mrf.mxu0
        %v6237 = vpop.f32.mrf.mxu0
        %v6238 = vadd.f32 %v6045, %v6237
        %v6239 = vpop.f32.mrf.mxu0
        %6240 = vmatprep.mubr.bf16.mxu0 %v5698
        %6241 = vmatmul.mubr.bf16.gmra.mxu0 %v5697
        %v6242 = vpop.f32.mrf.mxu0
        %v6243 = vadd.f32 %v6050, %v6242
        %v6244 = vpop.f32.mrf.mxu0
        %v6245 = vpop.f32.mrf.mxu0
        %v6246 = vadd.f32 %v6053, %v6245
        %v6247 = vpop.f32.mrf.mxu0
        %6248 = vmatprep.mubr.bf16.mxu0 %v5706
        %6249 = vmatmul.mubr.bf16.gmra.mxu0 %v5705
        %v6250 = vpop.f32.mrf.mxu0
        %v6251 = vadd.f32 %v6058, %v6250
        %v6252 = vpop.f32.mrf.mxu0
        %v6253 = vpop.f32.mrf.mxu0
        %v6254 = vadd.f32 %v6061, %v6253
        %v6255 = vpop.f32.mrf.mxu0
        %6256 = vmatprep.mubr.bf16.mxu0 %v5714
        %6257 = vmatmul.mubr.bf16.gmra.mxu0 %v5713
        %v6258 = vpop.f32.mrf.mxu0
        %v6259 = vadd.f32 %v6066, %v6258
        %v6260 = vpop.f32.mrf.mxu0
        %v6261 = vpop.f32.mrf.mxu0
        %v6262 = vadd.f32 %v6069, %v6261
        %v6263 = vpop.f32.mrf.mxu0
        %6264 = vdwg.mxu0
        %6265 = vmatprep.subr.bf16.mxu0 0
        %6266 = vmatpush1.bf16.msra.mxu0 %v4694
        %6267 = vmatprep.subr.bf16.mxu0 0
        %6268 = vmatpush1.bf16.msra.mxu0 %v4693
        %6269 = vmatprep.subr.bf16.mxu0 0
        %6270 = vmatpush1.bf16.msra.mxu0 %v4692
        %6271 = vmatprep.subr.bf16.mxu0 0
        %6272 = vmatpush1.bf16.msra.mxu0 %v4691
        %6273 = vmatprep.subr.bf16.mxu0 0
        %6274 = vmatpush1.bf16.msra.mxu0 %v4690
        %6275 = vmatprep.subr.bf16.mxu0 0
        %6276 = vmatpush1.bf16.msra.mxu0 %v4689
        %6277 = vmatprep.subr.bf16.mxu0 0
        %6278 = vmatpush1.bf16.msra.mxu0 %v4688
        %6279 = vmatprep.subr.bf16.mxu0 0
        %6280 = vmatpush1.bf16.msra.mxu0 %v4687
        %6281 = vmatprep.subr.bf16.mxu0 0
        %6282 = vmatpush2.bf16.msra.mxu0 %v4702
        %6283 = vmatprep.subr.bf16.mxu0 0
        %6284 = vmatpush2.bf16.msra.mxu0 %v4701
        %6285 = vmatprep.subr.bf16.mxu0 0
        %6286 = vmatpush2.bf16.msra.mxu0 %v4700
        %6287 = vmatprep.subr.bf16.mxu0 0
        %6288 = vmatpush2.bf16.msra.mxu0 %v4699
        %6289 = vmatprep.subr.bf16.mxu0 0
        %6290 = vmatpush2.bf16.msra.mxu0 %v4698
        %6291 = vmatprep.subr.bf16.mxu0 0
        %6292 = vmatpush2.bf16.msra.mxu0 %v4697
        %6293 = vmatprep.subr.bf16.mxu0 0
        %6294 = vmatpush2.bf16.msra.mxu0 %v4696
        %6295 = vmatprep.subr.bf16.mxu0 0
        %6296 = vmatpush2.bf16.msra.mxu0 %v4695
        %6297 = vmatprep.mubr.bf16.mxu0 %v5564
        %6298 = vmatmul.mubr.bf16.gmra.mxu0 %v5563
        %v6299 = vpop.f32.mrf.mxu0
        %v6300 = vadd.f32 %v6107, %v6299
        %v6301 = vpop.f32.mrf.mxu0
        %v6302 = vpop.f32.mrf.mxu0
        %v6303 = vadd.f32 %v6110, %v6302
        %v6304 = vpop.f32.mrf.mxu0
        %6305 = vmatprep.mubr.bf16.mxu0 %v5572
        %6306 = vmatmul.mubr.bf16.gmra.mxu0 %v5571
        %v6307 = vpop.f32.mrf.mxu0
        %v6308 = vadd.f32 %v6115, %v6307
        %v6309 = vpop.f32.mrf.mxu0
        %v6310 = vpop.f32.mrf.mxu0
        %v6311 = vadd.f32 %v6118, %v6310
        %v6312 = vpop.f32.mrf.mxu0
        %6313 = vmatprep.mubr.bf16.mxu0 %v5580
        %6314 = vmatmul.mubr.bf16.gmra.mxu0 %v5579
        %v6315 = vpop.f32.mrf.mxu0
        %v6316 = vadd.f32 %v6123, %v6315
        %v6317 = vpop.f32.mrf.mxu0
        %v6318 = vpop.f32.mrf.mxu0
        %v6319 = vadd.f32 %v6126, %v6318
        %v6320 = vpop.f32.mrf.mxu0
        %6321 = vmatprep.mubr.bf16.mxu0 %v5588
        %6322 = vmatmul.mubr.bf16.gmra.mxu0 %v5587
        %v6323 = vpop.f32.mrf.mxu0
        %v6324 = vadd.f32 %v6131, %v6323
        %v6325 = vpop.f32.mrf.mxu0
        %v6326 = vpop.f32.mrf.mxu0
        %v6327 = vadd.f32 %v6134, %v6326
        %v6328 = vpop.f32.mrf.mxu0
        %6329 = vmatprep.mubr.bf16.mxu0 %v5596
        %6330 = vmatmul.mubr.bf16.gmra.mxu0 %v5595
        %v6331 = vpop.f32.mrf.mxu0
        %v6332 = vadd.f32 %v6139, %v6331
        %v6333 = vpop.f32.mrf.mxu0
        %v6334 = vpop.f32.mrf.mxu0
        %v6335 = vadd.f32 %v6142, %v6334
        %v6336 = vpop.f32.mrf.mxu0
        %6337 = vmatprep.mubr.bf16.mxu0 %v5604
        %6338 = vmatmul.mubr.bf16.gmra.mxu0 %v5603
        %v6339 = vpop.f32.mrf.mxu0
        %v6340 = vadd.f32 %v6147, %v6339
        %v6341 = vpop.f32.mrf.mxu0
        %v6342 = vpop.f32.mrf.mxu0
        %v6343 = vadd.f32 %v6150, %v6342
        %v6344 = vpop.f32.mrf.mxu0
        %6345 = vmatprep.mubr.bf16.mxu0 %v5612
        %6346 = vmatmul.mubr.bf16.gmra.mxu0 %v5611
        %v6347 = vpop.f32.mrf.mxu0
        %v6348 = vadd.f32 %v6155, %v6347
        %v6349 = vpop.f32.mrf.mxu0
        %v6350 = vpop.f32.mrf.mxu0
        %v6351 = vadd.f32 %v6158, %v6350
        %v6352 = vpop.f32.mrf.mxu0
        %6353 = vmatprep.mubr.bf16.mxu0 %v5620
        %6354 = vmatmul.mubr.bf16.gmra.mxu0 %v5619
        %v6355 = vpop.f32.mrf.mxu0
        %v6356 = vadd.f32 %v6163, %v6355
        %v6357 = vpop.f32.mrf.mxu0
        %v6358 = vpop.f32.mrf.mxu0
        %v6359 = vadd.f32 %v6166, %v6358
        %v6360 = vpop.f32.mrf.mxu0
        %6361 = vmatprep.mubr.bf16.mxu0 %v5628
        %6362 = vmatmul.mubr.bf16.gmra.mxu0 %v5627
        %v6363 = vpop.f32.mrf.mxu0
        %v6364 = vadd.f32 %v6171, %v6363
        %v6365 = vpop.f32.mrf.mxu0
        %v6366 = vpop.f32.mrf.mxu0
        %v6367 = vadd.f32 %v6174, %v6366
        %v6368 = vpop.f32.mrf.mxu0
        %6369 = vmatprep.mubr.bf16.mxu0 %v5636
        %6370 = vmatmul.mubr.bf16.gmra.mxu0 %v5635
        %v6371 = vpop.f32.mrf.mxu0
        %v6372 = vadd.f32 %v6179, %v6371
        %v6373 = vpop.f32.mrf.mxu0
        %v6374 = vpop.f32.mrf.mxu0
        %v6375 = vadd.f32 %v6182, %v6374
        %v6376 = vpop.f32.mrf.mxu0
        %6377 = vmatprep.mubr.bf16.mxu0 %v5644
        %6378 = vmatmul.mubr.bf16.gmra.mxu0 %v5643
        %v6379 = vpop.f32.mrf.mxu0
        %v6380 = vadd.f32 %v6187, %v6379
        %v6381 = vpop.f32.mrf.mxu0
        %v6382 = vpop.f32.mrf.mxu0
        %v6383 = vadd.f32 %v6190, %v6382
        %v6384 = vpop.f32.mrf.mxu0
        %6385 = vmatprep.mubr.bf16.mxu0 %v5652
        %6386 = vmatmul.mubr.bf16.gmra.mxu0 %v5651
        %v6387 = vpop.f32.mrf.mxu0
        %v6388 = vadd.f32 %v6195, %v6387
        %v6389 = vpop.f32.mrf.mxu0
        %v6390 = vpop.f32.mrf.mxu0
        %v6391 = vadd.f32 %v6198, %v6390
        %v6392 = vpop.f32.mrf.mxu0
        %6393 = vmatprep.mubr.bf16.mxu0 %v5660
        %6394 = vmatmul.mubr.bf16.gmra.mxu0 %v5659
        %v6395 = vpop.f32.mrf.mxu0
        %v6396 = vadd.f32 %v6203, %v6395
        %v6397 = vpop.f32.mrf.mxu0
        %v6398 = vpop.f32.mrf.mxu0
        %v6399 = vadd.f32 %v6206, %v6398
        %v6400 = vpop.f32.mrf.mxu0
        %6401 = vmatprep.mubr.bf16.mxu0 %v5668
        %6402 = vmatmul.mubr.bf16.gmra.mxu0 %v5667
        %v6403 = vpop.f32.mrf.mxu0
        %v6404 = vadd.f32 %v6211, %v6403
        %v6405 = vpop.f32.mrf.mxu0
        %v6406 = vpop.f32.mrf.mxu0
        %v6407 = vadd.f32 %v6214, %v6406
        %v6408 = vpop.f32.mrf.mxu0
        %6409 = vmatprep.mubr.bf16.mxu0 %v5676
        %6410 = vmatmul.mubr.bf16.gmra.mxu0 %v5675
        %v6411 = vpop.f32.mrf.mxu0
        %v6412 = vadd.f32 %v6219, %v6411
        %v6413 = vpop.f32.mrf.mxu0
        %v6414 = vpop.f32.mrf.mxu0
        %v6415 = vadd.f32 %v6222, %v6414
        %v6416 = vpop.f32.mrf.mxu0
        %6417 = vmatprep.mubr.bf16.mxu0 %v5684
        %6418 = vmatmul.mubr.bf16.gmra.mxu0 %v5683
        %v6419 = vpop.f32.mrf.mxu0
        %v6420 = vadd.f32 %v6227, %v6419
        %v6421 = vpop.f32.mrf.mxu0
        %v6422 = vpop.f32.mrf.mxu0
        %v6423 = vadd.f32 %v6230, %v6422
        %v6424 = vpop.f32.mrf.mxu0
        %6425 = vmatprep.mubr.bf16.mxu0 %v5692
        %6426 = vmatmul.mubr.bf16.gmra.mxu0 %v5691
        %v6427 = vpop.f32.mrf.mxu0
        %v6428 = vadd.f32 %v6235, %v6427
        %v6429 = vpop.f32.mrf.mxu0
        %v6430 = vpop.f32.mrf.mxu0
        %v6431 = vadd.f32 %v6238, %v6430
        %v6432 = vpop.f32.mrf.mxu0
        %6433 = vmatprep.mubr.bf16.mxu0 %v5700
        %6434 = vmatmul.mubr.bf16.gmra.mxu0 %v5699
        %v6435 = vpop.f32.mrf.mxu0
        %v6436 = vadd.f32 %v6243, %v6435
        %v6437 = vpop.f32.mrf.mxu0
        %v6438 = vpop.f32.mrf.mxu0
        %v6439 = vadd.f32 %v6246, %v6438
        %v6440 = vpop.f32.mrf.mxu0
        %6441 = vmatprep.mubr.bf16.mxu0 %v5708
        %6442 = vmatmul.mubr.bf16.gmra.mxu0 %v5707
        %v6443 = vpop.f32.mrf.mxu0
        %v6444 = vadd.f32 %v6251, %v6443
        %v6445 = vpop.f32.mrf.mxu0
        %v6446 = vpop.f32.mrf.mxu0
        %v6447 = vadd.f32 %v6254, %v6446
        %v6448 = vpop.f32.mrf.mxu0
        %6449 = vmatprep.mubr.bf16.mxu0 %v5716
        %6450 = vmatmul.mubr.bf16.gmra.mxu0 %v5715
        %v6451 = vpop.f32.mrf.mxu0
        %v6452 = vadd.f32 %v6259, %v6451
        %v6453 = vpop.f32.mrf.mxu0
        %v6454 = vpop.f32.mrf.mxu0
        %v6455 = vadd.f32 %v6262, %v6454
        %v6456 = vpop.f32.mrf.mxu0
        %6457 = vdwg.mxu0
        %6458 = vmatprep.subr.bf16.mxu0 0
        %6459 = vmatpush1.bf16.msra.mxu0 %v4710
        %6460 = vmatprep.subr.bf16.mxu0 0
        %6461 = vmatpush1.bf16.msra.mxu0 %v4709
        %6462 = vmatprep.subr.bf16.mxu0 0
        %6463 = vmatpush1.bf16.msra.mxu0 %v4708
        %6464 = vmatprep.subr.bf16.mxu0 0
        %6465 = vmatpush1.bf16.msra.mxu0 %v4707
        %6466 = vmatprep.subr.bf16.mxu0 0
        %6467 = vmatpush1.bf16.msra.mxu0 %v4706
        %6468 = vmatprep.subr.bf16.mxu0 0
        %6469 = vmatpush1.bf16.msra.mxu0 %v4705
        %6470 = vmatprep.subr.bf16.mxu0 0
        %6471 = vmatpush1.bf16.msra.mxu0 %v4704
        %6472 = vmatprep.subr.bf16.mxu0 0
        %6473 = vmatpush1.bf16.msra.mxu0 %v4703
        %6474 = vmatprep.subr.bf16.mxu0 0
        %6475 = vmatpush2.bf16.msra.mxu0 %v4718
        %6476 = vmatprep.subr.bf16.mxu0 0
        %6477 = vmatpush2.bf16.msra.mxu0 %v4717
        %6478 = vmatprep.subr.bf16.mxu0 0
        %6479 = vmatpush2.bf16.msra.mxu0 %v4716
        %6480 = vmatprep.subr.bf16.mxu0 0
        %6481 = vmatpush2.bf16.msra.mxu0 %v4715
        %6482 = vmatprep.subr.bf16.mxu0 0
        %6483 = vmatpush2.bf16.msra.mxu0 %v4714
        %6484 = vmatprep.subr.bf16.mxu0 0
        %6485 = vmatpush2.bf16.msra.mxu0 %v4713
        %6486 = vmatprep.subr.bf16.mxu0 0
        %6487 = vmatpush2.bf16.msra.mxu0 %v4712
        %6488 = vmatprep.subr.bf16.mxu0 0
        %6489 = vmatpush2.bf16.msra.mxu0 %v4711
        %6490 = vmatprep.mubr.bf16.mxu0 %v5566
        %6491 = vmatmul.mubr.bf16.gmra.mxu0 %v5565
        %v6492 = vpop.f32.mrf.mxu0
        %v6493 = vadd.f32 %v6300, %v6492
        %v6494 = vpop.f32.mrf.mxu0
        %v6495 = vpop.f32.mrf.mxu0
        %v6496 = vadd.f32 %v6303, %v6495
        %v6497 = vpop.f32.mrf.mxu0
        %6498 = vmatprep.mubr.bf16.mxu0 %v5574
        %6499 = vmatmul.mubr.bf16.gmra.mxu0 %v5573
        %v6500 = vpop.f32.mrf.mxu0
        %v6501 = vadd.f32 %v6308, %v6500
        %v6502 = vpop.f32.mrf.mxu0
        %v6503 = vpop.f32.mrf.mxu0
        %v6504 = vadd.f32 %v6311, %v6503
        %v6505 = vpop.f32.mrf.mxu0
        %6506 = vmatprep.mubr.bf16.mxu0 %v5582
        %6507 = vmatmul.mubr.bf16.gmra.mxu0 %v5581
        %v6508 = vpop.f32.mrf.mxu0
        %v6509 = vadd.f32 %v6316, %v6508
        %v6510 = vpop.f32.mrf.mxu0
        %v6511 = vpop.f32.mrf.mxu0
        %v6512 = vadd.f32 %v6319, %v6511
        %v6513 = vpop.f32.mrf.mxu0
        %6514 = vmatprep.mubr.bf16.mxu0 %v5590
        %6515 = vmatmul.mubr.bf16.gmra.mxu0 %v5589
        %v6516 = vpop.f32.mrf.mxu0
        %v6517 = vadd.f32 %v6324, %v6516
        %v6518 = vpop.f32.mrf.mxu0
        %v6519 = vpop.f32.mrf.mxu0
        %v6520 = vadd.f32 %v6327, %v6519
        %v6521 = vpop.f32.mrf.mxu0
        %6522 = vmatprep.mubr.bf16.mxu0 %v5598
        %6523 = vmatmul.mubr.bf16.gmra.mxu0 %v5597
        %v6524 = vpop.f32.mrf.mxu0
        %v6525 = vadd.f32 %v6332, %v6524
        %v6526 = vpop.f32.mrf.mxu0
        %v6527 = vpop.f32.mrf.mxu0
        %v6528 = vadd.f32 %v6335, %v6527
        %v6529 = vpop.f32.mrf.mxu0
        %6530 = vmatprep.mubr.bf16.mxu0 %v5606
        %6531 = vmatmul.mubr.bf16.gmra.mxu0 %v5605
        %v6532 = vpop.f32.mrf.mxu0
        %v6533 = vadd.f32 %v6340, %v6532
        %v6534 = vpop.f32.mrf.mxu0
        %v6535 = vpop.f32.mrf.mxu0
        %v6536 = vadd.f32 %v6343, %v6535
        %v6537 = vpop.f32.mrf.mxu0
        %6538 = vmatprep.mubr.bf16.mxu0 %v5614
        %6539 = vmatmul.mubr.bf16.gmra.mxu0 %v5613
        %v6540 = vpop.f32.mrf.mxu0
        %v6541 = vadd.f32 %v6348, %v6540
        %v6542 = vpop.f32.mrf.mxu0
        %v6543 = vpop.f32.mrf.mxu0
        %v6544 = vadd.f32 %v6351, %v6543
        %v6545 = vpop.f32.mrf.mxu0
        %6546 = vmatprep.mubr.bf16.mxu0 %v5622
        %6547 = vmatmul.mubr.bf16.gmra.mxu0 %v5621
        %v6548 = vpop.f32.mrf.mxu0
        %v6549 = vadd.f32 %v6356, %v6548
        %v6550 = vpop.f32.mrf.mxu0
        %v6551 = vpop.f32.mrf.mxu0
        %v6552 = vadd.f32 %v6359, %v6551
        %v6553 = vpop.f32.mrf.mxu0
        %6554 = vmatprep.mubr.bf16.mxu0 %v5630
        %6555 = vmatmul.mubr.bf16.gmra.mxu0 %v5629
        %v6556 = vpop.f32.mrf.mxu0
        %v6557 = vadd.f32 %v6364, %v6556
        %v6558 = vpop.f32.mrf.mxu0
        %v6559 = vpop.f32.mrf.mxu0
        %v6560 = vadd.f32 %v6367, %v6559
        %v6561 = vpop.f32.mrf.mxu0
        %6562 = vmatprep.mubr.bf16.mxu0 %v5638
        %6563 = vmatmul.mubr.bf16.gmra.mxu0 %v5637
        %v6564 = vpop.f32.mrf.mxu0
        %v6565 = vadd.f32 %v6372, %v6564
        %v6566 = vpop.f32.mrf.mxu0
        %v6567 = vpop.f32.mrf.mxu0
        %v6568 = vadd.f32 %v6375, %v6567
        %v6569 = vpop.f32.mrf.mxu0
        %6570 = vmatprep.mubr.bf16.mxu0 %v5646
        %6571 = vmatmul.mubr.bf16.gmra.mxu0 %v5645
        %v6572 = vpop.f32.mrf.mxu0
        %v6573 = vadd.f32 %v6380, %v6572
        %v6574 = vpop.f32.mrf.mxu0
        %v6575 = vpop.f32.mrf.mxu0
        %v6576 = vadd.f32 %v6383, %v6575
        %v6577 = vpop.f32.mrf.mxu0
        %6578 = vmatprep.mubr.bf16.mxu0 %v5654
        %6579 = vmatmul.mubr.bf16.gmra.mxu0 %v5653
        %v6580 = vpop.f32.mrf.mxu0
        %v6581 = vadd.f32 %v6388, %v6580
        %v6582 = vpop.f32.mrf.mxu0
        %v6583 = vpop.f32.mrf.mxu0
        %v6584 = vadd.f32 %v6391, %v6583
        %v6585 = vpop.f32.mrf.mxu0
        %6586 = vmatprep.mubr.bf16.mxu0 %v5662
        %6587 = vmatmul.mubr.bf16.gmra.mxu0 %v5661
        %v6588 = vpop.f32.mrf.mxu0
        %v6589 = vadd.f32 %v6396, %v6588
        %v6590 = vpop.f32.mrf.mxu0
        %v6591 = vpop.f32.mrf.mxu0
        %v6592 = vadd.f32 %v6399, %v6591
        %v6593 = vpop.f32.mrf.mxu0
        %6594 = vmatprep.mubr.bf16.mxu0 %v5670
        %6595 = vmatmul.mubr.bf16.gmra.mxu0 %v5669
        %v6596 = vpop.f32.mrf.mxu0
        %v6597 = vadd.f32 %v6404, %v6596
        %v6598 = vpop.f32.mrf.mxu0
        %v6599 = vpop.f32.mrf.mxu0
        %v6600 = vadd.f32 %v6407, %v6599
        %v6601 = vpop.f32.mrf.mxu0
        %6602 = vmatprep.mubr.bf16.mxu0 %v5678
        %6603 = vmatmul.mubr.bf16.gmra.mxu0 %v5677
        %v6604 = vpop.f32.mrf.mxu0
        %v6605 = vadd.f32 %v6412, %v6604
        %v6606 = vpop.f32.mrf.mxu0
        %v6607 = vpop.f32.mrf.mxu0
        %v6608 = vadd.f32 %v6415, %v6607
        %v6609 = vpop.f32.mrf.mxu0
        %6610 = vmatprep.mubr.bf16.mxu0 %v5686
        %6611 = vmatmul.mubr.bf16.gmra.mxu0 %v5685
        %v6612 = vpop.f32.mrf.mxu0
        %v6613 = vadd.f32 %v6420, %v6612
        %v6614 = vpop.f32.mrf.mxu0
        %v6615 = vpop.f32.mrf.mxu0
        %v6616 = vadd.f32 %v6423, %v6615
        %v6617 = vpop.f32.mrf.mxu0
        %6618 = vmatprep.mubr.bf16.mxu0 %v5694
        %6619 = vmatmul.mubr.bf16.gmra.mxu0 %v5693
        %v6620 = vpop.f32.mrf.mxu0
        %v6621 = vadd.f32 %v6428, %v6620
        %v6622 = vpop.f32.mrf.mxu0
        %v6623 = vpop.f32.mrf.mxu0
        %v6624 = vadd.f32 %v6431, %v6623
        %v6625 = vpop.f32.mrf.mxu0
        %6626 = vmatprep.mubr.bf16.mxu0 %v5702
        %6627 = vmatmul.mubr.bf16.gmra.mxu0 %v5701
        %v6628 = vpop.f32.mrf.mxu0
        %v6629 = vadd.f32 %v6436, %v6628
        %v6630 = vpop.f32.mrf.mxu0
        %v6631 = vpop.f32.mrf.mxu0
        %v6632 = vadd.f32 %v6439, %v6631
        %v6633 = vpop.f32.mrf.mxu0
        %6634 = vmatprep.mubr.bf16.mxu0 %v5710
        %6635 = vmatmul.mubr.bf16.gmra.mxu0 %v5709
        %v6636 = vpop.f32.mrf.mxu0
        %v6637 = vadd.f32 %v6444, %v6636
        %v6638 = vpop.f32.mrf.mxu0
        %v6639 = vpop.f32.mrf.mxu0
        %v6640 = vadd.f32 %v6447, %v6639
        %v6641 = vpop.f32.mrf.mxu0
        %6642 = vmatprep.mubr.bf16.mxu0 %v5718
        %6643 = vmatmul.mubr.bf16.gmra.mxu0 %v5717
        %v6644 = vpop.f32.mrf.mxu0
        %v6645 = vadd.f32 %v6452, %v6644
        %v6646 = vpop.f32.mrf.mxu0
        %v6647 = vpop.f32.mrf.mxu0
        %v6648 = vadd.f32 %v6455, %v6647
        %v6649 = vpop.f32.mrf.mxu0
        %6650 = vdwg.mxu0
        %v6651 = vpack.c.bf16 %v6496, %v6493
        %v6652 = vpack.c.bf16 %v6504, %v6501
        %v6653 = vpack.c.bf16 %v6512, %v6509
        %v6654 = vpack.c.bf16 %v6520, %v6517
        %v6655 = vpack.c.bf16 %v6528, %v6525
        %v6656 = vpack.c.bf16 %v6536, %v6533
        %v6657 = vpack.c.bf16 %v6544, %v6541
        %v6658 = vpack.c.bf16 %v6552, %v6549
        %v6659 = vpack.c.bf16 %v6560, %v6557
        %v6660 = vpack.c.bf16 %v6568, %v6565
        %v6661 = vpack.c.bf16 %v6576, %v6573
        %v6662 = vpack.c.bf16 %v6584, %v6581
        %v6663 = vpack.c.bf16 %v6592, %v6589
        %v6664 = vpack.c.bf16 %v6600, %v6597
        %v6665 = vpack.c.bf16 %v6608, %v6605
        %v6666 = vpack.c.bf16 %v6616, %v6613
        %v6667 = vpack.c.bf16 %v6624, %v6621
        %v6668 = vpack.c.bf16 %v6632, %v6629
        %v6669 = vpack.c.bf16 %v6640, %v6637
        %v6670 = vpack.c.bf16 %v6648, %v6645
        %v6691 = vunpack.c.l.b16 %v6651
        %v6692 = vunpack.c.h.b16 %v6651
        %v6693 = vunpack.c.l.b16 %v6652
        %v6694 = vunpack.c.h.b16 %v6652
        %v6695 = vunpack.c.l.b16 %v6653
        %v6696 = vunpack.c.h.b16 %v6653
        %v6697 = vunpack.c.l.b16 %v6654
        %v6698 = vunpack.c.h.b16 %v6654
        %v6699 = vunpack.c.l.b16 %v6655
        %v6700 = vunpack.c.h.b16 %v6655
        %v6701 = vunpack.c.l.b16 %v6656
        %v6702 = vunpack.c.h.b16 %v6656
        %v6703 = vunpack.c.l.b16 %v6657
        %v6704 = vunpack.c.h.b16 %v6657
        %v6705 = vunpack.c.l.b16 %v6658
        %v6706 = vunpack.c.h.b16 %v6658
        %v6707 = vunpack.c.l.b16 %v6659
        %v6708 = vunpack.c.h.b16 %v6659
        %v6709 = vunpack.c.l.b16 %v6660
        %v6710 = vunpack.c.h.b16 %v6660
        %v6711 = vunpack.c.l.b16 %v6661
        %v6712 = vunpack.c.h.b16 %v6661
        %v6713 = vunpack.c.l.b16 %v6662
        %v6714 = vunpack.c.h.b16 %v6662
        %v6715 = vunpack.c.l.b16 %v6663
        %v6716 = vunpack.c.h.b16 %v6663
        %v6717 = vunpack.c.l.b16 %v6664
        %v6718 = vunpack.c.h.b16 %v6664
        %v6719 = vunpack.c.l.b16 %v6665
        %v6720 = vunpack.c.h.b16 %v6665
        %v6721 = vunpack.c.l.b16 %v6666
        %v6722 = vunpack.c.h.b16 %v6666
        %v6723 = vunpack.c.l.b16 %v6667
        %v6724 = vunpack.c.h.b16 %v6667
        %v6725 = vunpack.c.l.b16 %v6668
        %v6726 = vunpack.c.h.b16 %v6668
        %v6727 = vunpack.c.l.b16 %v6669
        %v6728 = vunpack.c.h.b16 %v6669
        %v6729 = vunpack.c.l.b16 %v6670
        %v6730 = vunpack.c.h.b16 %v6670
        %v6731 = vpack.c.b16 %v6691, %v6691
        %v6732 = vpack.c.b16 %v6692, %v6692
        %v6733 = vpack.c.b16 %v6693, %v6693
        %v6734 = vpack.c.b16 %v6694, %v6694
        %v6735 = vpack.c.b16 %v6695, %v6695
        %v6736 = vpack.c.b16 %v6696, %v6696
        %v6737 = vpack.c.b16 %v6697, %v6697
        %v6738 = vpack.c.b16 %v6698, %v6698
        %v6739 = vpack.c.b16 %v6699, %v6699
        %v6740 = vpack.c.b16 %v6700, %v6700
        %v6741 = vpack.c.b16 %v6701, %v6701
        %v6742 = vpack.c.b16 %v6702, %v6702
        %v6743 = vpack.c.b16 %v6703, %v6703
        %v6744 = vpack.c.b16 %v6704, %v6704
        %v6745 = vpack.c.b16 %v6705, %v6705
        %v6746 = vpack.c.b16 %v6706, %v6706
        %v6747 = vpack.c.b16 %v6707, %v6707
        %v6748 = vpack.c.b16 %v6708, %v6708
        %v6749 = vpack.c.b16 %v6709, %v6709
        %v6750 = vpack.c.b16 %v6710, %v6710
        %v6751 = vpack.c.b16 %v6711, %v6711
        %v6752 = vpack.c.b16 %v6712, %v6712
        %v6753 = vpack.c.b16 %v6713, %v6713
        %v6754 = vpack.c.b16 %v6714, %v6714
        %v6755 = vpack.c.b16 %v6715, %v6715
        %v6756 = vpack.c.b16 %v6716, %v6716
        %v6757 = vpack.c.b16 %v6717, %v6717
        %v6758 = vpack.c.b16 %v6718, %v6718
        %v6759 = vpack.c.b16 %v6719, %v6719
        %v6760 = vpack.c.b16 %v6720, %v6720
        %v6761 = vpack.c.b16 %v6721, %v6721
        %v6762 = vpack.c.b16 %v6722, %v6722
        %v6763 = vpack.c.b16 %v6723, %v6723
        %v6764 = vpack.c.b16 %v6724, %v6724
        %v6765 = vpack.c.b16 %v6725, %v6725
        %v6766 = vpack.c.b16 %v6726, %v6726
        %v6767 = vpack.c.b16 %v6727, %v6727
        %v6768 = vpack.c.b16 %v6728, %v6728
        %v6769 = vpack.c.b16 %v6729, %v6729
        %v6770 = vpack.c.b16 %v6730, %v6730
        %6811 = vst [vmem:[%s235] sm:$0xf] %v6731
        %6812 = vst [vmem:[%s235 + $0x4] sm:$0xf] %v6732
        %6813 = vst [vmem:[%s235 + $0x8] sm:$0xf] %v6733
        %6814 = vst [vmem:[%s235 + $0xc] sm:$0xf] %v6734
        %6815 = vst [vmem:[%s235 + $0x10] sm:$0xf] %v6735
        %6816 = vst [vmem:[%s235 + $0x14] sm:$0xf] %v6736
        %6817 = vst [vmem:[%s235 + $0x18] sm:$0xf] %v6737
        %6818 = vst [vmem:[%s235 + $0x1c] sm:$0xf] %v6738
        %6819 = vst [vmem:[%s235 + $0x20] sm:$0xf] %v6739
        %6820 = vst [vmem:[%s235 + $0x24] sm:$0xf] %v6740
        %6821 = vst [vmem:[%s235 + $0x28] sm:$0xf] %v6741
        %6822 = vst [vmem:[%s235 + $0x2c] sm:$0xf] %v6742
        %6823 = vst [vmem:[%s235 + $0x30] sm:$0xf] %v6743
        %6824 = vst [vmem:[%s235 + $0x34] sm:$0xf] %v6744
        %6825 = vst [vmem:[%s235 + $0x38] sm:$0xf] %v6745
        %6826 = vst [vmem:[%s235 + $0x3c] sm:$0xf] %v6746
        %6827 = vst [vmem:[%s235 + $0x40] sm:$0xf] %v6747
        %6828 = vst [vmem:[%s235 + $0x44] sm:$0xf] %v6748
        %6829 = vst [vmem:[%s235 + $0x48] sm:$0xf] %v6749
        %6830 = vst [vmem:[%s235 + $0x4c] sm:$0xf] %v6750
        %6831 = vst [vmem:[%s235 + $0x50] sm:$0xf] %v6751
        %6832 = vst [vmem:[%s235 + $0x54] sm:$0xf] %v6752
        %6833 = vst [vmem:[%s235 + $0x58] sm:$0xf] %v6753
        %6834 = vst [vmem:[%s235 + $0x5c] sm:$0xf] %v6754
        %6835 = vst [vmem:[%s235 + $0x60] sm:$0xf] %v6755
        %6836 = vst [vmem:[%s235 + $0x64] sm:$0xf] %v6756
        %6837 = vst [vmem:[%s235 + $0x68] sm:$0xf] %v6757
        %6838 = vst [vmem:[%s235 + $0x6c] sm:$0xf] %v6758
        %6839 = vst [vmem:[%s235 + $0x70] sm:$0xf] %v6759
        %6840 = vst [vmem:[%s235 + $0x74] sm:$0xf] %v6760
        %6841 = vst [vmem:[%s235 + $0x78] sm:$0xf] %v6761
        %6842 = vst [vmem:[%s235 + $0x7c] sm:$0xf] %v6762
        %6843 = vst [vmem:[%s235 + $0x80] sm:$0xf] %v6763
        %6844 = vst [vmem:[%s235 + $0x84] sm:$0xf] %v6764
        %6845 = vst [vmem:[%s235 + $0x88] sm:$0xf] %v6765
        %6846 = vst [vmem:[%s235 + $0x8c] sm:$0xf] %v6766
        %6847 = vst [vmem:[%s235 + $0x90] sm:$0xf] %v6767
        %6848 = vst [vmem:[%s235 + $0x94] sm:$0xf] %v6768
        %6849 = vst [vmem:[%s235 + $0x98] sm:$0xf] %v6769
        %6850 = vst [vmem:[%s235 + $0x9c] sm:$0xf] %v6770
        %s6851 = sand.u32 %s150, 1
        %s6852 = sand.u32 %s150, 1
        %s6853 = smul.addr %s6852, 160
        %s6854 = scalar_lea.vmem [#allocation2], %s6853
        // Predicated region
        $region41: #{hpo_hand_net_forward.1} parent=39 // pred_check
          %p6855 = pneg %p160
        $region42: #{hpo_hand_net_forward.1} parent=39 // pred_check_branch
          %6857 = sbr.rel (%p6855) target = $region44
        $region43: #{hpo_hand_net_forward.1} parent=39 // pred_region
          %s6858 = smul.addr %s20, 80
          %s6859 = sadd.s32 %s21, %s6858
          %s6860 = smul.addr %s6859, 4
          %s6861 = scalar_lea.vmem %s5, %s6860
          // Predicated region
          $region45: #{hpo_hand_net_forward.1} parent=43 // pred_check
            _
          $region46: #{hpo_hand_net_forward.1} parent=43 // pred_check_branch
            %6863 = sbr.rel (0) target = $region48
          $region47: #{hpo_hand_net_forward.1} parent=43 // pred_region
            // Predicated region
            $region49: #{hpo_hand_net_forward.1} parent=47 // pred_check
              _
            $region50: #{hpo_hand_net_forward.1} parent=47 // pred_check_branch
              %6865 = sbr.rel target = $region52
            $region51: #{hpo_hand_net_forward.1} parent=47 // pred_region
              // Predicated region
              $region64: #{hpo_hand_net_forward.1} parent=51 // pred_check
                _
              $region65: #{hpo_hand_net_forward.1} parent=51 // pred_check_branch
                %6959 = sbr.rel (0) target = $region67
              $region66: #{hpo_hand_net_forward.1} parent=51 // pred_region
                loop: start=0, step=1, limit=1
                $region68: #{hpo_hand_net_forward.1} parent=66 // loop_pre_header
                  _
                $region69: #{hpo_hand_net_forward.1} parent=66 // loop_header
                  %s6961 = sphi 0, %s6965
                  %p6962 = scmp.ge.s32.totalorder %s6961, 1
                  %s6966 = sphi %s6854, %s6854
                  %s6967 = sphi %s6861, %s6861
                $region70: #{hpo_hand_net_forward.1} parent=66 // loop_header_branch
                  %6964 = sbr.rel (%p6962) target = $region74
                $region71: #{hpo_hand_net_forward.1} parent=66 // loop_body
                  _
                $region72: #{hpo_hand_net_forward.1} parent=66 // loop_footer
                  %s6965 = sadd.s32 1, %s6961
                $region73: #{hpo_hand_net_forward.1} parent=66 // loop_footer_branch
                  %6960 = sbr.rel target = $region69
                $region74: #{hpo_hand_net_forward.1} parent=66 // loop_exit
                  _
                %s6969 = ssub.s32 16, 1
                loop: start=0, step=1, limit=1
                $region75: #{hpo_hand_net_forward.1} parent=66 // loop_pre_header
                  _
                $region76: #{hpo_hand_net_forward.1} parent=66 // loop_header
                  %s6971 = sphi 0, %s6975
                  %p6972 = scmp.ge.s32.totalorder %s6971, 1
                  %s6976 = sphi %s6854, %s6854
                  %s6977 = sphi %s6861, %s6861
                $region77: #{hpo_hand_net_forward.1} parent=66 // loop_header_branch
                  %6974 = sbr.rel (%p6972) target = $region81
                $region78: #{hpo_hand_net_forward.1} parent=66 // loop_body
                  %v6978 = vld [vmem:[%s6976] sm:%s6969]
                  %6979 = vst [vmem:[%s6977] sm:%s6969] %v6978
                  %v6980 = vld [vmem:[%s6976 + $0x4] sm:%s6969]
                  %6981 = vst [vmem:[%s6977 + $0x8] sm:%s6969] %v6980
                  %v6982 = vld [vmem:[%s6976 + $0x8] sm:%s6969]
                  %6983 = vst [vmem:[%s6977 + $0x10] sm:%s6969] %v6982
                  %v6984 = vld [vmem:[%s6976 + $0xc] sm:%s6969]
                  %6985 = vst [vmem:[%s6977 + $0x18] sm:%s6969] %v6984
                  %v6986 = vld [vmem:[%s6976 + $0x10] sm:%s6969]
                  %6987 = vst [vmem:[%s6977 + $0x20] sm:%s6969] %v6986
                  %v6988 = vld [vmem:[%s6976 + $0x14] sm:%s6969]
                  %6989 = vst [vmem:[%s6977 + $0x28] sm:%s6969] %v6988
                  %v6990 = vld [vmem:[%s6976 + $0x18] sm:%s6969]
                  %6991 = vst [vmem:[%s6977 + $0x30] sm:%s6969] %v6990
                  %v6992 = vld [vmem:[%s6976 + $0x1c] sm:%s6969]
                  %6993 = vst [vmem:[%s6977 + $0x38] sm:%s6969] %v6992
                  %v6994 = vld [vmem:[%s6976 + $0x20] sm:%s6969]
                  %6995 = vst [vmem:[%s6977 + $0x40] sm:%s6969] %v6994
                  %v6996 = vld [vmem:[%s6976 + $0x24] sm:%s6969]
                  %6997 = vst [vmem:[%s6977 + $0x48] sm:%s6969] %v6996
                  %v6998 = vld [vmem:[%s6976 + $0x28] sm:%s6969]
                  %6999 = vst [vmem:[%s6977 + $0x50] sm:%s6969] %v6998
                  %v7000 = vld [vmem:[%s6976 + $0x2c] sm:%s6969]
                  %7001 = vst [vmem:[%s6977 + $0x58] sm:%s6969] %v7000
                  %v7002 = vld [vmem:[%s6976 + $0x30] sm:%s6969]
                  %7003 = vst [vmem:[%s6977 + $0x60] sm:%s6969] %v7002
                  %v7004 = vld [vmem:[%s6976 + $0x34] sm:%s6969]
                  %7005 = vst [vmem:[%s6977 + $0x68] sm:%s6969] %v7004
                  %v7006 = vld [vmem:[%s6976 + $0x38] sm:%s6969]
                  %7007 = vst [vmem:[%s6977 + $0x70] sm:%s6969] %v7006
                  %v7008 = vld [vmem:[%s6976 + $0x3c] sm:%s6969]
                  %7009 = vst [vmem:[%s6977 + $0x78] sm:%s6969] %v7008
                  %v7010 = vld [vmem:[%s6976 + $0x40] sm:%s6969]
                  %7011 = vst [vmem:[%s6977 + $0x80] sm:%s6969] %v7010
                  %v7012 = vld [vmem:[%s6976 + $0x44] sm:%s6969]
                  %7013 = vst [vmem:[%s6977 + $0x88] sm:%s6969] %v7012
                  %v7014 = vld [vmem:[%s6976 + $0x48] sm:%s6969]
                  %7015 = vst [vmem:[%s6977 + $0x90] sm:%s6969] %v7014
                  %v7016 = vld [vmem:[%s6976 + $0x4c] sm:%s6969]
                  %7017 = vst [vmem:[%s6977 + $0x98] sm:%s6969] %v7016
                  %v7018 = vld [vmem:[%s6976 + $0x50] sm:%s6969]
                  %7019 = vst [vmem:[%s6977 + $0xa0] sm:%s6969] %v7018
                  %v7020 = vld [vmem:[%s6976 + $0x54] sm:%s6969]
                  %7021 = vst [vmem:[%s6977 + $0xa8] sm:%s6969] %v7020
                  %v7022 = vld [vmem:[%s6976 + $0x58] sm:%s6969]
                  %7023 = vst [vmem:[%s6977 + $0xb0] sm:%s6969] %v7022
                  %v7024 = vld [vmem:[%s6976 + $0x5c] sm:%s6969]
                  %7025 = vst [vmem:[%s6977 + $0xb8] sm:%s6969] %v7024
                  %v7026 = vld [vmem:[%s6976 + $0x60] sm:%s6969]
                  %7027 = vst [vmem:[%s6977 + $0xc0] sm:%s6969] %v7026
                  %v7028 = vld [vmem:[%s6976 + $0x64] sm:%s6969]
                  %7029 = vst [vmem:[%s6977 + $0xc8] sm:%s6969] %v7028
                  %v7030 = vld [vmem:[%s6976 + $0x68] sm:%s6969]
                  %7031 = vst [vmem:[%s6977 + $0xd0] sm:%s6969] %v7030
                  %v7032 = vld [vmem:[%s6976 + $0x6c] sm:%s6969]
                  %7033 = vst [vmem:[%s6977 + $0xd8] sm:%s6969] %v7032
                  %v7034 = vld [vmem:[%s6976 + $0x70] sm:%s6969]
                  %7035 = vst [vmem:[%s6977 + $0xe0] sm:%s6969] %v7034
                  %v7036 = vld [vmem:[%s6976 + $0x74] sm:%s6969]
                  %7037 = vst [vmem:[%s6977 + $0xe8] sm:%s6969] %v7036
                  %v7038 = vld [vmem:[%s6976 + $0x78] sm:%s6969]
                  %7039 = vst [vmem:[%s6977 + $0xf0] sm:%s6969] %v7038
                  %v7040 = vld [vmem:[%s6976 + $0x7c] sm:%s6969]
                  %7041 = vst [vmem:[%s6977 + $0xf8] sm:%s6969] %v7040
                  %v7042 = vld [vmem:[%s6976 + $0x80] sm:%s6969]
                  %7043 = vst [vmem:[%s6977 + $0x100] sm:%s6969] %v7042
                  %v7044 = vld [vmem:[%s6976 + $0x84] sm:%s6969]
                  %7045 = vst [vmem:[%s6977 + $0x108] sm:%s6969] %v7044
                  %v7046 = vld [vmem:[%s6976 + $0x88] sm:%s6969]
                  %7047 = vst [vmem:[%s6977 + $0x110] sm:%s6969] %v7046
                  %v7048 = vld [vmem:[%s6976 + $0x8c] sm:%s6969]
                  %7049 = vst [vmem:[%s6977 + $0x118] sm:%s6969] %v7048
                  %v7050 = vld [vmem:[%s6976 + $0x90] sm:%s6969]
                  %7051 = vst [vmem:[%s6977 + $0x120] sm:%s6969] %v7050
                  %v7052 = vld [vmem:[%s6976 + $0x94] sm:%s6969]
                  %7053 = vst [vmem:[%s6977 + $0x128] sm:%s6969] %v7052
                  %v7054 = vld [vmem:[%s6976 + $0x98] sm:%s6969]
                  %7055 = vst [vmem:[%s6977 + $0x130] sm:%s6969] %v7054
                  %v7056 = vld [vmem:[%s6976 + $0x9c] sm:%s6969]
                  %7057 = vst [vmem:[%s6977 + $0x138] sm:%s6969] %v7056
                $region79: #{hpo_hand_net_forward.1} parent=66 // loop_footer
                  %s6975 = sadd.s32 1, %s6971
                $region80: #{hpo_hand_net_forward.1} parent=66 // loop_footer_branch
                  %6970 = sbr.rel target = $region76
                $region81: #{hpo_hand_net_forward.1} parent=66 // loop_exit
                  _
              $region67: #{hpo_hand_net_forward.1} parent=51 // pred_fallthru
                _
            $region52: #{hpo_hand_net_forward.1} parent=47 // pred_fallthru
              _
            // Predicated region
            $region53: #{hpo_hand_net_forward.1} parent=47 // pred_check
              _
            $region54: #{hpo_hand_net_forward.1} parent=47 // pred_check_branch
              %6867 = sbr.rel (0) target = $region56
            $region55: #{hpo_hand_net_forward.1} parent=47 // pred_region
              %s6869 = ssub.s32 16, 1
              loop: start=0, step=1, limit=1
              $region57: #{hpo_hand_net_forward.1} parent=55 // loop_pre_header
                _
              $region58: #{hpo_hand_net_forward.1} parent=55 // loop_header
                %s6871 = sphi 0, %s6875
                %p6872 = scmp.ge.s32.totalorder %s6871, 1
                %s6876 = sphi %s6854, %s6854
                %s6877 = sphi %s6861, %s6861
              $region59: #{hpo_hand_net_forward.1} parent=55 // loop_header_branch
                %6874 = sbr.rel (%p6872) target = $region63
              $region60: #{hpo_hand_net_forward.1} parent=55 // loop_body
                %v6878 = vld [vmem:[%s6876] sm:%s6869]
                %6879 = vst [vmem:[%s6877] sm:%s6869] %v6878
                %v6880 = vld [vmem:[%s6876 + $0x4] sm:%s6869]
                %6881 = vst [vmem:[%s6877 + $0x8] sm:%s6869] %v6880
                %v6882 = vld [vmem:[%s6876 + $0x8] sm:%s6869]
                %6883 = vst [vmem:[%s6877 + $0x10] sm:%s6869] %v6882
                %v6884 = vld [vmem:[%s6876 + $0xc] sm:%s6869]
                %6885 = vst [vmem:[%s6877 + $0x18] sm:%s6869] %v6884
                %v6886 = vld [vmem:[%s6876 + $0x10] sm:%s6869]
                %6887 = vst [vmem:[%s6877 + $0x20] sm:%s6869] %v6886
                %v6888 = vld [vmem:[%s6876 + $0x14] sm:%s6869]
                %6889 = vst [vmem:[%s6877 + $0x28] sm:%s6869] %v6888
                %v6890 = vld [vmem:[%s6876 + $0x18] sm:%s6869]
                %6891 = vst [vmem:[%s6877 + $0x30] sm:%s6869] %v6890
                %v6892 = vld [vmem:[%s6876 + $0x1c] sm:%s6869]
                %6893 = vst [vmem:[%s6877 + $0x38] sm:%s6869] %v6892
                %v6894 = vld [vmem:[%s6876 + $0x20] sm:%s6869]
                %6895 = vst [vmem:[%s6877 + $0x40] sm:%s6869] %v6894
                %v6896 = vld [vmem:[%s6876 + $0x24] sm:%s6869]
                %6897 = vst [vmem:[%s6877 + $0x48] sm:%s6869] %v6896
                %v6898 = vld [vmem:[%s6876 + $0x28] sm:%s6869]
                %6899 = vst [vmem:[%s6877 + $0x50] sm:%s6869] %v6898
                %v6900 = vld [vmem:[%s6876 + $0x2c] sm:%s6869]
                %6901 = vst [vmem:[%s6877 + $0x58] sm:%s6869] %v6900
                %v6902 = vld [vmem:[%s6876 + $0x30] sm:%s6869]
                %6903 = vst [vmem:[%s6877 + $0x60] sm:%s6869] %v6902
                %v6904 = vld [vmem:[%s6876 + $0x34] sm:%s6869]
                %6905 = vst [vmem:[%s6877 + $0x68] sm:%s6869] %v6904
                %v6906 = vld [vmem:[%s6876 + $0x38] sm:%s6869]
                %6907 = vst [vmem:[%s6877 + $0x70] sm:%s6869] %v6906
                %v6908 = vld [vmem:[%s6876 + $0x3c] sm:%s6869]
                %6909 = vst [vmem:[%s6877 + $0x78] sm:%s6869] %v6908
                %v6910 = vld [vmem:[%s6876 + $0x40] sm:%s6869]
                %6911 = vst [vmem:[%s6877 + $0x80] sm:%s6869] %v6910
                %v6912 = vld [vmem:[%s6876 + $0x44] sm:%s6869]
                %6913 = vst [vmem:[%s6877 + $0x88] sm:%s6869] %v6912
                %v6914 = vld [vmem:[%s6876 + $0x48] sm:%s6869]
                %6915 = vst [vmem:[%s6877 + $0x90] sm:%s6869] %v6914
                %v6916 = vld [vmem:[%s6876 + $0x4c] sm:%s6869]
                %6917 = vst [vmem:[%s6877 + $0x98] sm:%s6869] %v6916
                %v6918 = vld [vmem:[%s6876 + $0x50] sm:%s6869]
                %6919 = vst [vmem:[%s6877 + $0xa0] sm:%s6869] %v6918
                %v6920 = vld [vmem:[%s6876 + $0x54] sm:%s6869]
                %6921 = vst [vmem:[%s6877 + $0xa8] sm:%s6869] %v6920
                %v6922 = vld [vmem:[%s6876 + $0x58] sm:%s6869]
                %6923 = vst [vmem:[%s6877 + $0xb0] sm:%s6869] %v6922
                %v6924 = vld [vmem:[%s6876 + $0x5c] sm:%s6869]
                %6925 = vst [vmem:[%s6877 + $0xb8] sm:%s6869] %v6924
                %v6926 = vld [vmem:[%s6876 + $0x60] sm:%s6869]
                %6927 = vst [vmem:[%s6877 + $0xc0] sm:%s6869] %v6926
                %v6928 = vld [vmem:[%s6876 + $0x64] sm:%s6869]
                %6929 = vst [vmem:[%s6877 + $0xc8] sm:%s6869] %v6928
                %v6930 = vld [vmem:[%s6876 + $0x68] sm:%s6869]
                %6931 = vst [vmem:[%s6877 + $0xd0] sm:%s6869] %v6930
                %v6932 = vld [vmem:[%s6876 + $0x6c] sm:%s6869]
                %6933 = vst [vmem:[%s6877 + $0xd8] sm:%s6869] %v6932
                %v6934 = vld [vmem:[%s6876 + $0x70] sm:%s6869]
                %6935 = vst [vmem:[%s6877 + $0xe0] sm:%s6869] %v6934
                %v6936 = vld [vmem:[%s6876 + $0x74] sm:%s6869]
                %6937 = vst [vmem:[%s6877 + $0xe8] sm:%s6869] %v6936
                %v6938 = vld [vmem:[%s6876 + $0x78] sm:%s6869]
                %6939 = vst [vmem:[%s6877 + $0xf0] sm:%s6869] %v6938
                %v6940 = vld [vmem:[%s6876 + $0x7c] sm:%s6869]
                %6941 = vst [vmem:[%s6877 + $0xf8] sm:%s6869] %v6940
                %v6942 = vld [vmem:[%s6876 + $0x80] sm:%s6869]
                %6943 = vst [vmem:[%s6877 + $0x100] sm:%s6869] %v6942
                %v6944 = vld [vmem:[%s6876 + $0x84] sm:%s6869]
                %6945 = vst [vmem:[%s6877 + $0x108] sm:%s6869] %v6944
                %v6946 = vld [vmem:[%s6876 + $0x88] sm:%s6869]
                %6947 = vst [vmem:[%s6877 + $0x110] sm:%s6869] %v6946
                %v6948 = vld [vmem:[%s6876 + $0x8c] sm:%s6869]
                %6949 = vst [vmem:[%s6877 + $0x118] sm:%s6869] %v6948
                %v6950 = vld [vmem:[%s6876 + $0x90] sm:%s6869]
                %6951 = vst [vmem:[%s6877 + $0x120] sm:%s6869] %v6950
                %v6952 = vld [vmem:[%s6876 + $0x94] sm:%s6869]
                %6953 = vst [vmem:[%s6877 + $0x128] sm:%s6869] %v6952
                %v6954 = vld [vmem:[%s6876 + $0x98] sm:%s6869]
                %6955 = vst [vmem:[%s6877 + $0x130] sm:%s6869] %v6954
                %v6956 = vld [vmem:[%s6876 + $0x9c] sm:%s6869]
                %6957 = vst [vmem:[%s6877 + $0x138] sm:%s6869] %v6956
              $region61: #{hpo_hand_net_forward.1} parent=55 // loop_footer
                %s6875 = sadd.s32 1, %s6871
              $region62: #{hpo_hand_net_forward.1} parent=55 // loop_footer_branch
                %6870 = sbr.rel target = $region58
              $region63: #{hpo_hand_net_forward.1} parent=55 // loop_exit
                _
            $region56: #{hpo_hand_net_forward.1} parent=47 // pred_fallthru
              _
          $region48: #{hpo_hand_net_forward.1} parent=43 // pred_fallthru
            _
          %7058 = vnop
        $region44: #{hpo_hand_net_forward.1} parent=39 // pred_fallthru
          _
      $region40: #{hpo_hand_net_forward.1} parent=5 // pred_fallthru
        _
      %p7059 = scmp.le.s32.totalorder 2, %s11
      // Predicated region
      $region82: #{hpo_hand_net_forward.1} parent=5 // pred_check
        %p7060 = pneg %p7059
      $region83: #{hpo_hand_net_forward.1} parent=5 // pred_check_branch
        %7062 = sbr.rel (%p7060) target = $region85
      $region84: #{hpo_hand_net_forward.1} parent=5 // pred_region
        %s7063 = ssub.s32 %s11, 2
        // Predicated region
        $region86: #{hpo_hand_net_forward.1} parent=84 // pred_check
          %p7064 = pneg %p166
        $region87: #{hpo_hand_net_forward.1} parent=84 // pred_check_branch
          %7066 = sbr.rel (%p7064) target = $region89
        $region88: #{hpo_hand_net_forward.1} parent=84 // pred_region
          %s7067 = sand.u32 %s151, 1
          %s7068 = sand.u32 %s151, 1
          %s7069 = smul.addr %s7068, 160
          %s7070 = scalar_lea.vmem [#allocation2], %s7069
        $region89: #{hpo_hand_net_forward.1} parent=84 // pred_fallthru
          _
      $region85: #{hpo_hand_net_forward.1} parent=5 // pred_fallthru
        _
    $region6: #{hpo_hand_net_forward.1} parent=1 // loop_footer
      %s15 = sadd.s32 1, %s11
    $region7: #{hpo_hand_net_forward.1} parent=1 // loop_footer_branch
      %10 = sbr.rel target = $region3
    $region8: #{hpo_hand_net_forward.1} parent=1 // loop_exit
      _

</llo_original>
